<compile_context>
chip_gen: v7x
topology: tpu7x:2x2x1
jax: 0.10.0
libtpu: 0.0.40
codegen_flags: <defaults>
</compile_context>

<pallas_src>
import jax
import jax.numpy as jnp
from jax.experimental import pallas as pl
from jax.experimental.pallas import tpu as pltpu


def _round_up(n, m):
    return ((n + m - 1) // m) * m


def convnet_kernel(xv_ref, wc_ref, bc_ref, wf_ref, bf_ref, out_ref):
    # xv_ref: VMEM (25, TB, 64)  pool-window views, spatial flattened to lanes
    # wc_ref: SMEM (27,)         conv weight, flat [c*9 + ki*3 + kj]
    # bc_ref: SMEM (3,)          conv bias
    # wf_ref: VMEM (192, 10)     fc weight^T, rows in PyTorch (c, i, j) order
    # bf_ref: VMEM (1, 10)       fc bias
    # out_ref: VMEM (TB, 10)     log-softmax output for this batch tile

    # Hoist all 27 conv-weight scalar reads out of the unrolled pool loops.
    ws = [wc_ref[t] for t in range(27)]

    pooled_channels = []
    for c in range(3):                       # conv output channels
        pooled_c = None
        for pi in range(3):                  # 3x3 max-pool window
            for pj in range(3):
                acc = ws[c * 9] * xv_ref[pi * 5 + pj]              # (TB, 64)
                for ki in range(3):          # 3x3 conv taps
                    for kj in range(3):
                        if ki == 0 and kj == 0:
                            continue
                        acc = acc + ws[c * 9 + ki * 3 + kj] * \
                            xv_ref[(pi + ki) * 5 + (pj + kj)]
                pooled_c = acc if pooled_c is None else jnp.maximum(pooled_c, acc)
        # conv bias is constant over the pool window -> add after max; then ReLU
        pooled_c = jnp.maximum(pooled_c + bc_ref[c], 0.0)          # (TB, 64)
        pooled_channels.append(pooled_c)

    # Single FC matmul on the MXU: (TB, 192) @ (192, 10)
    fc_in = jnp.concatenate(pooled_channels, axis=1)               # (TB, 192)
    logits = jnp.dot(fc_in, wf_ref[...],
                     preferred_element_type=jnp.float32) + bf_ref[...]

    # log_softmax over dim=1
    m = jnp.max(logits, axis=1, keepdims=True)
    z = logits - m
    lse = jnp.log(jnp.sum(jnp.exp(z), axis=1, keepdims=True))
    out_ref[...] = z - lse


@jax.jit
def convnet_forward(x, conv_w, conv_b, fc_w, fc_b):
    """x: (B, 1, 28, 28) NCHW float32, matching the PyTorch module."""
    B = x.shape[0]
    x2 = x[:, 0].astype(jnp.float32)                               # (B, 28, 28)

    # Strided pool-window views, spatial flattened to the lane dim (glue only).
    views = [x2[:, di:di + 24:3, dj:dj + 24:3].reshape(B, 64)
             for di in range(5) for dj in range(5)]                # each (B, 64)
    xv = jnp.stack(views, axis=0)                                  # (25, B, 64)

    # Batch tile: safe on v5e's 16 MiB default scoped VMEM
    # (25*512*64*4 B = 3.2 MiB per buffer, double-buffered = 6.4 MiB).
    TB = min(512, _round_up(B, 8))
    Bp = _round_up(B, TB)
    if Bp != B:
        xv = jnp.pad(xv, ((0, 0), (0, Bp - B), (0, 0)))

    wc = conv_w.reshape(27).astype(jnp.float32)                    # (3,1,3,3) -> flat
    bc = conv_b.astype(jnp.float32)                                # (3,)
    # fc weight (10, 192) -> (192, 10); PyTorch flatten order (c, i, j) matches
    # the (channel-major, spatial row-major) column order built in the kernel.
    wf = fc_w.T.astype(jnp.float32)                                # (192, 10)
    bf = fc_b.reshape(1, 10).astype(jnp.float32)

    out = pl.pallas_call(
        convnet_kernel,
        out_shape=jax.ShapeDtypeStruct((Bp, 10), jnp.float32),
        grid=(Bp // TB,),
        in_specs=[
            pl.BlockSpec((25, TB, 64), lambda i: (0, i, 0)),                   # xv
            pl.BlockSpec(memory_space=pltpu.MemorySpace.SMEM),                 # conv w
            pl.BlockSpec(memory_space=pltpu.MemorySpace.SMEM),                 # conv b
            pl.BlockSpec((192, 10), lambda i: (0, 0)),                         # fc w^T
            pl.BlockSpec((1, 10), lambda i: (0, 0)),                           # fc b
        ],
        out_specs=pl.BlockSpec((TB, 10), lambda i: (i, 0)),
        compiler_params=pltpu.CompilerParams(
            dimension_semantics=("parallel",)),
    )(xv, wc, bc, wf, bf)
    return out[:B]


def reference_forward(x, conv_w, conv_b, fc_w, fc_b):
    """Pure-JAX reference with PyTorch semantics."""
    y = jax.lax.conv_general_dilated(x, conv_w, (1, 1), 'VALID',
                                     dimension_numbers=('NCHW', 'OIHW', 'NCHW'))
    y = y + conv_b.reshape(1, 3, 1, 1)
    y = jax.lax.reduce_window(y, -jnp.inf, jax.lax.max,
                              (1, 1, 3, 3), (1, 1, 3, 3), 'VALID')
    y = jnp.maximum(y, 0.0)
    y = y.reshape(y.shape[0], -1)                                  # (B, 192) (c,i,j) order
    y = y @ fc_w.T + fc_b
    return jax.nn.log_softmax(y, axis=1)


if __name__ == "__main__":
    key = jax.random.PRNGKey(0)
    k1, k2, k3, k4, kx = jax.random.split(key, 5)

    # Deterministic synthetic parameters (PyTorch-default-like uniform init).
    conv_w = jax.random.uniform(k1, (3, 1, 3, 3), jnp.float32, -1.0 / 3, 1.0 / 3)
    conv_b = jax.random.uniform(k2, (3,), jnp.float32, -1.0 / 3, 1.0 / 3)
    lim = 1.0 / (192.0 ** 0.5)
    fc_w = jax.random.uniform(k3, (10, 192), jnp.float32, -lim, lim)
    fc_b = jax.random.uniform(k4, (10,), jnp.float32, -lim, lim)

    # Input implied by the module: 192 = 3 * 8 * 8  ->  28x28 single-channel images.
    x = jax.random.normal(kx, (2, 1, 28, 28), jnp.float32)

    out = convnet_forward(x, conv_w, conv_b, fc_w, fc_b)
    out = jax.block_until_ready(out)

    ref = reference_forward(x, conv_w, conv_b, fc_w, fc_b)
    assert out.shape == (2, 10)
    assert jnp.allclose(out, ref, atol=1e-2, rtol=1e-2), (out, ref)

    print("KERNEL_OK")
</pallas_src>

<mosaic_0001>
module attributes {stable_mosaic.version = 11 : i64} {
  func.func @convnet_kernel(%arg0: i32, %arg1: memref<25x8x64xf32, #tpu.memory_space<vmem>>, %arg2: memref<27xf32, #tpu.memory_space<smem>>, %arg3: memref<3xf32, #tpu.memory_space<smem>>, %arg4: memref<192x10xf32, #tpu.memory_space<vmem>>, %arg5: memref<1x10xf32, #tpu.memory_space<vmem>>, %arg6: memref<8x10xf32, #tpu.memory_space<vmem>>) attributes {dimension_semantics = [#tpu.dimension_semantics<parallel>], iteration_bounds = array<i64: 1>, scalar_prefetch = 0 : i64, scratch_operands = 0 : i64, tpu.core_type = #tpu.core_type<tc>, window_params = [{transform_indices = @transform_0, window_bounds = array<i64: 25, 8, 64>}, {transform_indices = @transform_1, window_bounds = array<i64: 27>}, {transform_indices = @transform_2, window_bounds = array<i64: 3>}, {pipeline_mode = #tpu.pipeline_mode<synchronous>, transform_indices = @transform_3, window_bounds = array<i64: 192, 10>}, {pipeline_mode = #tpu.pipeline_mode<synchronous>, transform_indices = @transform_4, window_bounds = array<i64: 1, 10>}, {transform_indices = @transform_5, window_bounds = array<i64: 8, 10>}]} {
    %c0 = arith.constant 0 : index
    %0 = memref.load %arg2[%c0] : memref<27xf32, #tpu.memory_space<smem>>
    %c1 = arith.constant 1 : index
    %1 = memref.load %arg2[%c1] : memref<27xf32, #tpu.memory_space<smem>>
    %c2 = arith.constant 2 : index
    %2 = memref.load %arg2[%c2] : memref<27xf32, #tpu.memory_space<smem>>
    %c3 = arith.constant 3 : index
    %3 = memref.load %arg2[%c3] : memref<27xf32, #tpu.memory_space<smem>>
    %c4 = arith.constant 4 : index
    %4 = memref.load %arg2[%c4] : memref<27xf32, #tpu.memory_space<smem>>
    %c5 = arith.constant 5 : index
    %5 = memref.load %arg2[%c5] : memref<27xf32, #tpu.memory_space<smem>>
    %c6 = arith.constant 6 : index
    %6 = memref.load %arg2[%c6] : memref<27xf32, #tpu.memory_space<smem>>
    %c7 = arith.constant 7 : index
    %7 = memref.load %arg2[%c7] : memref<27xf32, #tpu.memory_space<smem>>
    %c8 = arith.constant 8 : index
    %8 = memref.load %arg2[%c8] : memref<27xf32, #tpu.memory_space<smem>>
    %c9 = arith.constant 9 : index
    %9 = memref.load %arg2[%c9] : memref<27xf32, #tpu.memory_space<smem>>
    %c10 = arith.constant 10 : index
    %10 = memref.load %arg2[%c10] : memref<27xf32, #tpu.memory_space<smem>>
    %c11 = arith.constant 11 : index
    %11 = memref.load %arg2[%c11] : memref<27xf32, #tpu.memory_space<smem>>
    %c12 = arith.constant 12 : index
    %12 = memref.load %arg2[%c12] : memref<27xf32, #tpu.memory_space<smem>>
    %c13 = arith.constant 13 : index
    %13 = memref.load %arg2[%c13] : memref<27xf32, #tpu.memory_space<smem>>
    %c14 = arith.constant 14 : index
    %14 = memref.load %arg2[%c14] : memref<27xf32, #tpu.memory_space<smem>>
    %c15 = arith.constant 15 : index
    %15 = memref.load %arg2[%c15] : memref<27xf32, #tpu.memory_space<smem>>
    %c16 = arith.constant 16 : index
    %16 = memref.load %arg2[%c16] : memref<27xf32, #tpu.memory_space<smem>>
    %c17 = arith.constant 17 : index
    %17 = memref.load %arg2[%c17] : memref<27xf32, #tpu.memory_space<smem>>
    %c18 = arith.constant 18 : index
    %18 = memref.load %arg2[%c18] : memref<27xf32, #tpu.memory_space<smem>>
    %c19 = arith.constant 19 : index
    %19 = memref.load %arg2[%c19] : memref<27xf32, #tpu.memory_space<smem>>
    %c20 = arith.constant 20 : index
    %20 = memref.load %arg2[%c20] : memref<27xf32, #tpu.memory_space<smem>>
    %c21 = arith.constant 21 : index
    %21 = memref.load %arg2[%c21] : memref<27xf32, #tpu.memory_space<smem>>
    %c22 = arith.constant 22 : index
    %22 = memref.load %arg2[%c22] : memref<27xf32, #tpu.memory_space<smem>>
    %c23 = arith.constant 23 : index
    %23 = memref.load %arg2[%c23] : memref<27xf32, #tpu.memory_space<smem>>
    %c24 = arith.constant 24 : index
    %24 = memref.load %arg2[%c24] : memref<27xf32, #tpu.memory_space<smem>>
    %c25 = arith.constant 25 : index
    %25 = memref.load %arg2[%c25] : memref<27xf32, #tpu.memory_space<smem>>
    %c26 = arith.constant 26 : index
    %26 = memref.load %arg2[%c26] : memref<27xf32, #tpu.memory_space<smem>>
    %c0_0 = arith.constant 0 : index
    %c0_1 = arith.constant 0 : index
    %c0_2 = arith.constant 0 : index
    %27 = vector.load %arg1[%c0_0, %c0_1, %c0_2] : memref<25x8x64xf32, #tpu.memory_space<vmem>>, vector<1x8x64xf32>
    %28 = vector.shape_cast %27 : vector<1x8x64xf32> to vector<8x64xf32>
    %29 = vector.broadcast %0 : f32 to vector<8x64xf32>
    %30 = arith.mulf %29, %28 : vector<8x64xf32>
    %c1_3 = arith.constant 1 : index
    %c0_4 = arith.constant 0 : index
    %c0_5 = arith.constant 0 : index
    %31 = vector.load %arg1[%c1_3, %c0_4, %c0_5] : memref<25x8x64xf32, #tpu.memory_space<vmem>>, vector<1x8x64xf32>
    %32 = vector.shape_cast %31 : vector<1x8x64xf32> to vector<8x64xf32>
    %33 = vector.broadcast %1 : f32 to vector<8x64xf32>
    %34 = arith.mulf %33, %32 : vector<8x64xf32>
    %35 = arith.addf %30, %34 : vector<8x64xf32>
    %c2_6 = arith.constant 2 : index
    %c0_7 = arith.constant 0 : index
    %c0_8 = arith.constant 0 : index
    %36 = vector.load %arg1[%c2_6, %c0_7, %c0_8] : memref<25x8x64xf32, #tpu.memory_space<vmem>>, vector<1x8x64xf32>
    %37 = vector.shape_cast %36 : vector<1x8x64xf32> to vector<8x64xf32>
    %38 = vector.broadcast %2 : f32 to vector<8x64xf32>
    %39 = arith.mulf %38, %37 : vector<8x64xf32>
    %40 = arith.addf %35, %39 : vector<8x64xf32>
    %c5_9 = arith.constant 5 : index
    %c0_10 = arith.constant 0 : index
    %c0_11 = arith.constant 0 : index
    %41 = vector.load %arg1[%c5_9, %c0_10, %c0_11] : memref<25x8x64xf32, #tpu.memory_space<vmem>>, vector<1x8x64xf32>
    %42 = vector.shape_cast %41 : vector<1x8x64xf32> to vector<8x64xf32>
    %43 = vector.broadcast %3 : f32 to vector<8x64xf32>
    %44 = arith.mulf %43, %42 : vector<8x64xf32>
    %45 = arith.addf %40, %44 : vector<8x64xf32>
    %c6_12 = arith.constant 6 : index
    %c0_13 = arith.constant 0 : index
    %c0_14 = arith.constant 0 : index
    %46 = vector.load %arg1[%c6_12, %c0_13, %c0_14] : memref<25x8x64xf32, #tpu.memory_space<vmem>>, vector<1x8x64xf32>
    %47 = vector.shape_cast %46 : vector<1x8x64xf32> to vector<8x64xf32>
    %48 = vector.broadcast %4 : f32 to vector<8x64xf32>
    %49 = arith.mulf %48, %47 : vector<8x64xf32>
    %50 = arith.addf %45, %49 : vector<8x64xf32>
    %c7_15 = arith.constant 7 : index
    %c0_16 = arith.constant 0 : index
    %c0_17 = arith.constant 0 : index
    %51 = vector.load %arg1[%c7_15, %c0_16, %c0_17] : memref<25x8x64xf32, #tpu.memory_space<vmem>>, vector<1x8x64xf32>
    %52 = vector.shape_cast %51 : vector<1x8x64xf32> to vector<8x64xf32>
    %53 = vector.broadcast %5 : f32 to vector<8x64xf32>
    %54 = arith.mulf %53, %52 : vector<8x64xf32>
    %55 = arith.addf %50, %54 : vector<8x64xf32>
    %c10_18 = arith.constant 10 : index
    %c0_19 = arith.constant 0 : index
    %c0_20 = arith.constant 0 : index
    %56 = vector.load %arg1[%c10_18, %c0_19, %c0_20] : memref<25x8x64xf32, #tpu.memory_space<vmem>>, vector<1x8x64xf32>
    %57 = vector.shape_cast %56 : vector<1x8x64xf32> to vector<8x64xf32>
    %58 = vector.broadcast %6 : f32 to vector<8x64xf32>
    %59 = arith.mulf %58, %57 : vector<8x64xf32>
    %60 = arith.addf %55, %59 : vector<8x64xf32>
    %c11_21 = arith.constant 11 : index
    %c0_22 = arith.constant 0 : index
    %c0_23 = arith.constant 0 : index
    %61 = vector.load %arg1[%c11_21, %c0_22, %c0_23] : memref<25x8x64xf32, #tpu.memory_space<vmem>>, vector<1x8x64xf32>
    %62 = vector.shape_cast %61 : vector<1x8x64xf32> to vector<8x64xf32>
    %63 = vector.broadcast %7 : f32 to vector<8x64xf32>
    %64 = arith.mulf %63, %62 : vector<8x64xf32>
    %65 = arith.addf %60, %64 : vector<8x64xf32>
    %c12_24 = arith.constant 12 : index
    %c0_25 = arith.constant 0 : index
    %c0_26 = arith.constant 0 : index
    %66 = vector.load %arg1[%c12_24, %c0_25, %c0_26] : memref<25x8x64xf32, #tpu.memory_space<vmem>>, vector<1x8x64xf32>
    %67 = vector.shape_cast %66 : vector<1x8x64xf32> to vector<8x64xf32>
    %68 = vector.broadcast %8 : f32 to vector<8x64xf32>
    %69 = arith.mulf %68, %67 : vector<8x64xf32>
    %70 = arith.addf %65, %69 : vector<8x64xf32>
    %c1_27 = arith.constant 1 : index
    %c0_28 = arith.constant 0 : index
    %c0_29 = arith.constant 0 : index
    %71 = vector.load %arg1[%c1_27, %c0_28, %c0_29] : memref<25x8x64xf32, #tpu.memory_space<vmem>>, vector<1x8x64xf32>
    %72 = vector.shape_cast %71 : vector<1x8x64xf32> to vector<8x64xf32>
    %73 = vector.broadcast %0 : f32 to vector<8x64xf32>
    %74 = arith.mulf %73, %72 : vector<8x64xf32>
    %c2_30 = arith.constant 2 : index
    %c0_31 = arith.constant 0 : index
    %c0_32 = arith.constant 0 : index
    %75 = vector.load %arg1[%c2_30, %c0_31, %c0_32] : memref<25x8x64xf32, #tpu.memory_space<vmem>>, vector<1x8x64xf32>
    %76 = vector.shape_cast %75 : vector<1x8x64xf32> to vector<8x64xf32>
    %77 = vector.broadcast %1 : f32 to vector<8x64xf32>
    %78 = arith.mulf %77, %76 : vector<8x64xf32>
    %79 = arith.addf %74, %78 : vector<8x64xf32>
    %c3_33 = arith.constant 3 : index
    %c0_34 = arith.constant 0 : index
    %c0_35 = arith.constant 0 : index
    %80 = vector.load %arg1[%c3_33, %c0_34, %c0_35] : memref<25x8x64xf32, #tpu.memory_space<vmem>>, vector<1x8x64xf32>
    %81 = vector.shape_cast %80 : vector<1x8x64xf32> to vector<8x64xf32>
    %82 = vector.broadcast %2 : f32 to vector<8x64xf32>
    %83 = arith.mulf %82, %81 : vector<8x64xf32>
    %84 = arith.addf %79, %83 : vector<8x64xf32>
    %c6_36 = arith.constant 6 : index
    %c0_37 = arith.constant 0 : index
    %c0_38 = arith.constant 0 : index
    %85 = vector.load %arg1[%c6_36, %c0_37, %c0_38] : memref<25x8x64xf32, #tpu.memory_space<vmem>>, vector<1x8x64xf32>
    %86 = vector.shape_cast %85 : vector<1x8x64xf32> to vector<8x64xf32>
    %87 = vector.broadcast %3 : f32 to vector<8x64xf32>
    %88 = arith.mulf %87, %86 : vector<8x64xf32>
    %89 = arith.addf %84, %88 : vector<8x64xf32>
    %c7_39 = arith.constant 7 : index
    %c0_40 = arith.constant 0 : index
    %c0_41 = arith.constant 0 : index
    %90 = vector.load %arg1[%c7_39, %c0_40, %c0_41] : memref<25x8x64xf32, #tpu.memory_space<vmem>>, vector<1x8x64xf32>
    %91 = vector.shape_cast %90 : vector<1x8x64xf32> to vector<8x64xf32>
    %92 = vector.broadcast %4 : f32 to vector<8x64xf32>
    %93 = arith.mulf %92, %91 : vector<8x64xf32>
    %94 = arith.addf %89, %93 : vector<8x64xf32>
    %c8_42 = arith.constant 8 : index
    %c0_43 = arith.constant 0 : index
    %c0_44 = arith.constant 0 : index
    %95 = vector.load %arg1[%c8_42, %c0_43, %c0_44] : memref<25x8x64xf32, #tpu.memory_space<vmem>>, vector<1x8x64xf32>
    %96 = vector.shape_cast %95 : vector<1x8x64xf32> to vector<8x64xf32>
    %97 = vector.broadcast %5 : f32 to vector<8x64xf32>
    %98 = arith.mulf %97, %96 : vector<8x64xf32>
    %99 = arith.addf %94, %98 : vector<8x64xf32>
    %c11_45 = arith.constant 11 : index
    %c0_46 = arith.constant 0 : index
    %c0_47 = arith.constant 0 : index
    %100 = vector.load %arg1[%c11_45, %c0_46, %c0_47] : memref<25x8x64xf32, #tpu.memory_space<vmem>>, vector<1x8x64xf32>
    %101 = vector.shape_cast %100 : vector<1x8x64xf32> to vector<8x64xf32>
    %102 = vector.broadcast %6 : f32 to vector<8x64xf32>
    %103 = arith.mulf %102, %101 : vector<8x64xf32>
    %104 = arith.addf %99, %103 : vector<8x64xf32>
    %c12_48 = arith.constant 12 : index
    %c0_49 = arith.constant 0 : index
    %c0_50 = arith.constant 0 : index
    %105 = vector.load %arg1[%c12_48, %c0_49, %c0_50] : memref<25x8x64xf32, #tpu.memory_space<vmem>>, vector<1x8x64xf32>
    %106 = vector.shape_cast %105 : vector<1x8x64xf32> to vector<8x64xf32>
    %107 = vector.broadcast %7 : f32 to vector<8x64xf32>
    %108 = arith.mulf %107, %106 : vector<8x64xf32>
    %109 = arith.addf %104, %108 : vector<8x64xf32>
    %c13_51 = arith.constant 13 : index
    %c0_52 = arith.constant 0 : index
    %c0_53 = arith.constant 0 : index
    %110 = vector.load %arg1[%c13_51, %c0_52, %c0_53] : memref<25x8x64xf32, #tpu.memory_space<vmem>>, vector<1x8x64xf32>
    %111 = vector.shape_cast %110 : vector<1x8x64xf32> to vector<8x64xf32>
    %112 = vector.broadcast %8 : f32 to vector<8x64xf32>
    %113 = arith.mulf %112, %111 : vector<8x64xf32>
    %114 = arith.addf %109, %113 : vector<8x64xf32>
    %115 = arith.maximumf %70, %114 : vector<8x64xf32>
    %c2_54 = arith.constant 2 : index
    %c0_55 = arith.constant 0 : index
    %c0_56 = arith.constant 0 : index
    %116 = vector.load %arg1[%c2_54, %c0_55, %c0_56] : memref<25x8x64xf32, #tpu.memory_space<vmem>>, vector<1x8x64xf32>
    %117 = vector.shape_cast %116 : vector<1x8x64xf32> to vector<8x64xf32>
    %118 = vector.broadcast %0 : f32 to vector<8x64xf32>
    %119 = arith.mulf %118, %117 : vector<8x64xf32>
    %c3_57 = arith.constant 3 : index
    %c0_58 = arith.constant 0 : index
    %c0_59 = arith.constant 0 : index
    %120 = vector.load %arg1[%c3_57, %c0_58, %c0_59] : memref<25x8x64xf32, #tpu.memory_space<vmem>>, vector<1x8x64xf32>
    %121 = vector.shape_cast %120 : vector<1x8x64xf32> to vector<8x64xf32>
    %122 = vector.broadcast %1 : f32 to vector<8x64xf32>
    %123 = arith.mulf %122, %121 : vector<8x64xf32>
    %124 = arith.addf %119, %123 : vector<8x64xf32>
    %c4_60 = arith.constant 4 : index
    %c0_61 = arith.constant 0 : index
    %c0_62 = arith.constant 0 : index
    %125 = vector.load %arg1[%c4_60, %c0_61, %c0_62] : memref<25x8x64xf32, #tpu.memory_space<vmem>>, vector<1x8x64xf32>
    %126 = vector.shape_cast %125 : vector<1x8x64xf32> to vector<8x64xf32>
    %127 = vector.broadcast %2 : f32 to vector<8x64xf32>
    %128 = arith.mulf %127, %126 : vector<8x64xf32>
    %129 = arith.addf %124, %128 : vector<8x64xf32>
    %c7_63 = arith.constant 7 : index
    %c0_64 = arith.constant 0 : index
    %c0_65 = arith.constant 0 : index
    %130 = vector.load %arg1[%c7_63, %c0_64, %c0_65] : memref<25x8x64xf32, #tpu.memory_space<vmem>>, vector<1x8x64xf32>
    %131 = vector.shape_cast %130 : vector<1x8x64xf32> to vector<8x64xf32>
    %132 = vector.broadcast %3 : f32 to vector<8x64xf32>
    %133 = arith.mulf %132, %131 : vector<8x64xf32>
    %134 = arith.addf %129, %133 : vector<8x64xf32>
    %c8_66 = arith.constant 8 : index
    %c0_67 = arith.constant 0 : index
    %c0_68 = arith.constant 0 : index
    %135 = vector.load %arg1[%c8_66, %c0_67, %c0_68] : memref<25x8x64xf32, #tpu.memory_space<vmem>>, vector<1x8x64xf32>
    %136 = vector.shape_cast %135 : vector<1x8x64xf32> to vector<8x64xf32>
    %137 = vector.broadcast %4 : f32 to vector<8x64xf32>
    %138 = arith.mulf %137, %136 : vector<8x64xf32>
    %139 = arith.addf %134, %138 : vector<8x64xf32>
    %c9_69 = arith.constant 9 : index
    %c0_70 = arith.constant 0 : index
    %c0_71 = arith.constant 0 : index
    %140 = vector.load %arg1[%c9_69, %c0_70, %c0_71] : memref<25x8x64xf32, #tpu.memory_space<vmem>>, vector<1x8x64xf32>
    %141 = vector.shape_cast %140 : vector<1x8x64xf32> to vector<8x64xf32>
    %142 = vector.broadcast %5 : f32 to vector<8x64xf32>
    %143 = arith.mulf %142, %141 : vector<8x64xf32>
    %144 = arith.addf %139, %143 : vector<8x64xf32>
    %c12_72 = arith.constant 12 : index
    %c0_73 = arith.constant 0 : index
    %c0_74 = arith.constant 0 : index
    %145 = vector.load %arg1[%c12_72, %c0_73, %c0_74] : memref<25x8x64xf32, #tpu.memory_space<vmem>>, vector<1x8x64xf32>
    %146 = vector.shape_cast %145 : vector<1x8x64xf32> to vector<8x64xf32>
    %147 = vector.broadcast %6 : f32 to vector<8x64xf32>
    %148 = arith.mulf %147, %146 : vector<8x64xf32>
    %149 = arith.addf %144, %148 : vector<8x64xf32>
    %c13_75 = arith.constant 13 : index
    %c0_76 = arith.constant 0 : index
    %c0_77 = arith.constant 0 : index
    %150 = vector.load %arg1[%c13_75, %c0_76, %c0_77] : memref<25x8x64xf32, #tpu.memory_space<vmem>>, vector<1x8x64xf32>
    %151 = vector.shape_cast %150 : vector<1x8x64xf32> to vector<8x64xf32>
    %152 = vector.broadcast %7 : f32 to vector<8x64xf32>
    %153 = arith.mulf %152, %151 : vector<8x64xf32>
    %154 = arith.addf %149, %153 : vector<8x64xf32>
    %c14_78 = arith.constant 14 : index
    %c0_79 = arith.constant 0 : index
    %c0_80 = arith.constant 0 : index
    %155 = vector.load %arg1[%c14_78, %c0_79, %c0_80] : memref<25x8x64xf32, #tpu.memory_space<vmem>>, vector<1x8x64xf32>
    %156 = vector.shape_cast %155 : vector<1x8x64xf32> to vector<8x64xf32>
    %157 = vector.broadcast %8 : f32 to vector<8x64xf32>
    %158 = arith.mulf %157, %156 : vector<8x64xf32>
    %159 = arith.addf %154, %158 : vector<8x64xf32>
    %160 = arith.maximumf %115, %159 : vector<8x64xf32>
    %c5_81 = arith.constant 5 : index
    %c0_82 = arith.constant 0 : index
    %c0_83 = arith.constant 0 : index
    %161 = vector.load %arg1[%c5_81, %c0_82, %c0_83] : memref<25x8x64xf32, #tpu.memory_space<vmem>>, vector<1x8x64xf32>
    %162 = vector.shape_cast %161 : vector<1x8x64xf32> to vector<8x64xf32>
    %163 = vector.broadcast %0 : f32 to vector<8x64xf32>
    %164 = arith.mulf %163, %162 : vector<8x64xf32>
    %c6_84 = arith.constant 6 : index
    %c0_85 = arith.constant 0 : index
    %c0_86 = arith.constant 0 : index
    %165 = vector.load %arg1[%c6_84, %c0_85, %c0_86] : memref<25x8x64xf32, #tpu.memory_space<vmem>>, vector<1x8x64xf32>
    %166 = vector.shape_cast %165 : vector<1x8x64xf32> to vector<8x64xf32>
    %167 = vector.broadcast %1 : f32 to vector<8x64xf32>
    %168 = arith.mulf %167, %166 : vector<8x64xf32>
    %169 = arith.addf %164, %168 : vector<8x64xf32>
    %c7_87 = arith.constant 7 : index
    %c0_88 = arith.constant 0 : index
    %c0_89 = arith.constant 0 : index
    %170 = vector.load %arg1[%c7_87, %c0_88, %c0_89] : memref<25x8x64xf32, #tpu.memory_space<vmem>>, vector<1x8x64xf32>
    %171 = vector.shape_cast %170 : vector<1x8x64xf32> to vector<8x64xf32>
    %172 = vector.broadcast %2 : f32 to vector<8x64xf32>
    %173 = arith.mulf %172, %171 : vector<8x64xf32>
    %174 = arith.addf %169, %173 : vector<8x64xf32>
    %c10_90 = arith.constant 10 : index
    %c0_91 = arith.constant 0 : index
    %c0_92 = arith.constant 0 : index
    %175 = vector.load %arg1[%c10_90, %c0_91, %c0_92] : memref<25x8x64xf32, #tpu.memory_space<vmem>>, vector<1x8x64xf32>
    %176 = vector.shape_cast %175 : vector<1x8x64xf32> to vector<8x64xf32>
    %177 = vector.broadcast %3 : f32 to vector<8x64xf32>
    %178 = arith.mulf %177, %176 : vector<8x64xf32>
    %179 = arith.addf %174, %178 : vector<8x64xf32>
    %c11_93 = arith.constant 11 : index
    %c0_94 = arith.constant 0 : index
    %c0_95 = arith.constant 0 : index
    %180 = vector.load %arg1[%c11_93, %c0_94, %c0_95] : memref<25x8x64xf32, #tpu.memory_space<vmem>>, vector<1x8x64xf32>
    %181 = vector.shape_cast %180 : vector<1x8x64xf32> to vector<8x64xf32>
    %182 = vector.broadcast %4 : f32 to vector<8x64xf32>
    %183 = arith.mulf %182, %181 : vector<8x64xf32>
    %184 = arith.addf %179, %183 : vector<8x64xf32>
    %c12_96 = arith.constant 12 : index
    %c0_97 = arith.constant 0 : index
    %c0_98 = arith.constant 0 : index
    %185 = vector.load %arg1[%c12_96, %c0_97, %c0_98] : memref<25x8x64xf32, #tpu.memory_space<vmem>>, vector<1x8x64xf32>
    %186 = vector.shape_cast %185 : vector<1x8x64xf32> to vector<8x64xf32>
    %187 = vector.broadcast %5 : f32 to vector<8x64xf32>
    %188 = arith.mulf %187, %186 : vector<8x64xf32>
    %189 = arith.addf %184, %188 : vector<8x64xf32>
    %c15_99 = arith.constant 15 : index
    %c0_100 = arith.constant 0 : index
    %c0_101 = arith.constant 0 : index
    %190 = vector.load %arg1[%c15_99, %c0_100, %c0_101] : memref<25x8x64xf32, #tpu.memory_space<vmem>>, vector<1x8x64xf32>
    %191 = vector.shape_cast %190 : vector<1x8x64xf32> to vector<8x64xf32>
    %192 = vector.broadcast %6 : f32 to vector<8x64xf32>
    %193 = arith.mulf %192, %191 : vector<8x64xf32>
    %194 = arith.addf %189, %193 : vector<8x64xf32>
    %c16_102 = arith.constant 16 : index
    %c0_103 = arith.constant 0 : index
    %c0_104 = arith.constant 0 : index
    %195 = vector.load %arg1[%c16_102, %c0_103, %c0_104] : memref<25x8x64xf32, #tpu.memory_space<vmem>>, vector<1x8x64xf32>
    %196 = vector.shape_cast %195 : vector<1x8x64xf32> to vector<8x64xf32>
    %197 = vector.broadcast %7 : f32 to vector<8x64xf32>
    %198 = arith.mulf %197, %196 : vector<8x64xf32>
    %199 = arith.addf %194, %198 : vector<8x64xf32>
    %c17_105 = arith.constant 17 : index
    %c0_106 = arith.constant 0 : index
    %c0_107 = arith.constant 0 : index
    %200 = vector.load %arg1[%c17_105, %c0_106, %c0_107] : memref<25x8x64xf32, #tpu.memory_space<vmem>>, vector<1x8x64xf32>
    %201 = vector.shape_cast %200 : vector<1x8x64xf32> to vector<8x64xf32>
    %202 = vector.broadcast %8 : f32 to vector<8x64xf32>
    %203 = arith.mulf %202, %201 : vector<8x64xf32>
    %204 = arith.addf %199, %203 : vector<8x64xf32>
    %205 = arith.maximumf %160, %204 : vector<8x64xf32>
    %c6_108 = arith.constant 6 : index
    %c0_109 = arith.constant 0 : index
    %c0_110 = arith.constant 0 : index
    %206 = vector.load %arg1[%c6_108, %c0_109, %c0_110] : memref<25x8x64xf32, #tpu.memory_space<vmem>>, vector<1x8x64xf32>
    %207 = vector.shape_cast %206 : vector<1x8x64xf32> to vector<8x64xf32>
    %208 = vector.broadcast %0 : f32 to vector<8x64xf32>
    %209 = arith.mulf %208, %207 : vector<8x64xf32>
    %c7_111 = arith.constant 7 : index
    %c0_112 = arith.constant 0 : index
    %c0_113 = arith.constant 0 : index
    %210 = vector.load %arg1[%c7_111, %c0_112, %c0_113] : memref<25x8x64xf32, #tpu.memory_space<vmem>>, vector<1x8x64xf32>
    %211 = vector.shape_cast %210 : vector<1x8x64xf32> to vector<8x64xf32>
    %212 = vector.broadcast %1 : f32 to vector<8x64xf32>
    %213 = arith.mulf %212, %211 : vector<8x64xf32>
    %214 = arith.addf %209, %213 : vector<8x64xf32>
    %c8_114 = arith.constant 8 : index
    %c0_115 = arith.constant 0 : index
    %c0_116 = arith.constant 0 : index
    %215 = vector.load %arg1[%c8_114, %c0_115, %c0_116] : memref<25x8x64xf32, #tpu.memory_space<vmem>>, vector<1x8x64xf32>
    %216 = vector.shape_cast %215 : vector<1x8x64xf32> to vector<8x64xf32>
    %217 = vector.broadcast %2 : f32 to vector<8x64xf32>
    %218 = arith.mulf %217, %216 : vector<8x64xf32>
    %219 = arith.addf %214, %218 : vector<8x64xf32>
    %c11_117 = arith.constant 11 : index
    %c0_118 = arith.constant 0 : index
    %c0_119 = arith.constant 0 : index
    %220 = vector.load %arg1[%c11_117, %c0_118, %c0_119] : memref<25x8x64xf32, #tpu.memory_space<vmem>>, vector<1x8x64xf32>
    %221 = vector.shape_cast %220 : vector<1x8x64xf32> to vector<8x64xf32>
    %222 = vector.broadcast %3 : f32 to vector<8x64xf32>
    %223 = arith.mulf %222, %221 : vector<8x64xf32>
    %224 = arith.addf %219, %223 : vector<8x64xf32>
    %c12_120 = arith.constant 12 : index
    %c0_121 = arith.constant 0 : index
    %c0_122 = arith.constant 0 : index
    %225 = vector.load %arg1[%c12_120, %c0_121, %c0_122] : memref<25x8x64xf32, #tpu.memory_space<vmem>>, vector<1x8x64xf32>
    %226 = vector.shape_cast %225 : vector<1x8x64xf32> to vector<8x64xf32>
    %227 = vector.broadcast %4 : f32 to vector<8x64xf32>
    %228 = arith.mulf %227, %226 : vector<8x64xf32>
    %229 = arith.addf %224, %228 : vector<8x64xf32>
    %c13_123 = arith.constant 13 : index
    %c0_124 = arith.constant 0 : index
    %c0_125 = arith.constant 0 : index
    %230 = vector.load %arg1[%c13_123, %c0_124, %c0_125] : memref<25x8x64xf32, #tpu.memory_space<vmem>>, vector<1x8x64xf32>
    %231 = vector.shape_cast %230 : vector<1x8x64xf32> to vector<8x64xf32>
    %232 = vector.broadcast %5 : f32 to vector<8x64xf32>
    %233 = arith.mulf %232, %231 : vector<8x64xf32>
    %234 = arith.addf %229, %233 : vector<8x64xf32>
    %c16_126 = arith.constant 16 : index
    %c0_127 = arith.constant 0 : index
    %c0_128 = arith.constant 0 : index
    %235 = vector.load %arg1[%c16_126, %c0_127, %c0_128] : memref<25x8x64xf32, #tpu.memory_space<vmem>>, vector<1x8x64xf32>
    %236 = vector.shape_cast %235 : vector<1x8x64xf32> to vector<8x64xf32>
    %237 = vector.broadcast %6 : f32 to vector<8x64xf32>
    %238 = arith.mulf %237, %236 : vector<8x64xf32>
    %239 = arith.addf %234, %238 : vector<8x64xf32>
    %c17_129 = arith.constant 17 : index
    %c0_130 = arith.constant 0 : index
    %c0_131 = arith.constant 0 : index
    %240 = vector.load %arg1[%c17_129, %c0_130, %c0_131] : memref<25x8x64xf32, #tpu.memory_space<vmem>>, vector<1x8x64xf32>
    %241 = vector.shape_cast %240 : vector<1x8x64xf32> to vector<8x64xf32>
    %242 = vector.broadcast %7 : f32 to vector<8x64xf32>
    %243 = arith.mulf %242, %241 : vector<8x64xf32>
    %244 = arith.addf %239, %243 : vector<8x64xf32>
    %c18_132 = arith.constant 18 : index
    %c0_133 = arith.constant 0 : index
    %c0_134 = arith.constant 0 : index
    %245 = vector.load %arg1[%c18_132, %c0_133, %c0_134] : memref<25x8x64xf32, #tpu.memory_space<vmem>>, vector<1x8x64xf32>
    %246 = vector.shape_cast %245 : vector<1x8x64xf32> to vector<8x64xf32>
    %247 = vector.broadcast %8 : f32 to vector<8x64xf32>
    %248 = arith.mulf %247, %246 : vector<8x64xf32>
    %249 = arith.addf %244, %248 : vector<8x64xf32>
    %250 = arith.maximumf %205, %249 : vector<8x64xf32>
    %c7_135 = arith.constant 7 : index
    %c0_136 = arith.constant 0 : index
    %c0_137 = arith.constant 0 : index
    %251 = vector.load %arg1[%c7_135, %c0_136, %c0_137] : memref<25x8x64xf32, #tpu.memory_space<vmem>>, vector<1x8x64xf32>
    %252 = vector.shape_cast %251 : vector<1x8x64xf32> to vector<8x64xf32>
    %253 = vector.broadcast %0 : f32 to vector<8x64xf32>
    %254 = arith.mulf %253, %252 : vector<8x64xf32>
    %c8_138 = arith.constant 8 : index
    %c0_139 = arith.constant 0 : index
    %c0_140 = arith.constant 0 : index
    %255 = vector.load %arg1[%c8_138, %c0_139, %c0_140] : memref<25x8x64xf32, #tpu.memory_space<vmem>>, vector<1x8x64xf32>
    %256 = vector.shape_cast %255 : vector<1x8x64xf32> to vector<8x64xf32>
    %257 = vector.broadcast %1 : f32 to vector<8x64xf32>
    %258 = arith.mulf %257, %256 : vector<8x64xf32>
    %259 = arith.addf %254, %258 : vector<8x64xf32>
    %c9_141 = arith.constant 9 : index
    %c0_142 = arith.constant 0 : index
    %c0_143 = arith.constant 0 : index
    %260 = vector.load %arg1[%c9_141, %c0_142, %c0_143] : memref<25x8x64xf32, #tpu.memory_space<vmem>>, vector<1x8x64xf32>
    %261 = vector.shape_cast %260 : vector<1x8x64xf32> to vector<8x64xf32>
    %262 = vector.broadcast %2 : f32 to vector<8x64xf32>
    %263 = arith.mulf %262, %261 : vector<8x64xf32>
    %264 = arith.addf %259, %263 : vector<8x64xf32>
    %c12_144 = arith.constant 12 : index
    %c0_145 = arith.constant 0 : index
    %c0_146 = arith.constant 0 : index
    %265 = vector.load %arg1[%c12_144, %c0_145, %c0_146] : memref<25x8x64xf32, #tpu.memory_space<vmem>>, vector<1x8x64xf32>
    %266 = vector.shape_cast %265 : vector<1x8x64xf32> to vector<8x64xf32>
    %267 = vector.broadcast %3 : f32 to vector<8x64xf32>
    %268 = arith.mulf %267, %266 : vector<8x64xf32>
    %269 = arith.addf %264, %268 : vector<8x64xf32>
    %c13_147 = arith.constant 13 : index
    %c0_148 = arith.constant 0 : index
    %c0_149 = arith.constant 0 : index
    %270 = vector.load %arg1[%c13_147, %c0_148, %c0_149] : memref<25x8x64xf32, #tpu.memory_space<vmem>>, vector<1x8x64xf32>
    %271 = vector.shape_cast %270 : vector<1x8x64xf32> to vector<8x64xf32>
    %272 = vector.broadcast %4 : f32 to vector<8x64xf32>
    %273 = arith.mulf %272, %271 : vector<8x64xf32>
    %274 = arith.addf %269, %273 : vector<8x64xf32>
    %c14_150 = arith.constant 14 : index
    %c0_151 = arith.constant 0 : index
    %c0_152 = arith.constant 0 : index
    %275 = vector.load %arg1[%c14_150, %c0_151, %c0_152] : memref<25x8x64xf32, #tpu.memory_space<vmem>>, vector<1x8x64xf32>
    %276 = vector.shape_cast %275 : vector<1x8x64xf32> to vector<8x64xf32>
    %277 = vector.broadcast %5 : f32 to vector<8x64xf32>
    %278 = arith.mulf %277, %276 : vector<8x64xf32>
    %279 = arith.addf %274, %278 : vector<8x64xf32>
    %c17_153 = arith.constant 17 : index
    %c0_154 = arith.constant 0 : index
    %c0_155 = arith.constant 0 : index
    %280 = vector.load %arg1[%c17_153, %c0_154, %c0_155] : memref<25x8x64xf32, #tpu.memory_space<vmem>>, vector<1x8x64xf32>
    %281 = vector.shape_cast %280 : vector<1x8x64xf32> to vector<8x64xf32>
    %282 = vector.broadcast %6 : f32 to vector<8x64xf32>
    %283 = arith.mulf %282, %281 : vector<8x64xf32>
    %284 = arith.addf %279, %283 : vector<8x64xf32>
    %c18_156 = arith.constant 18 : index
    %c0_157 = arith.constant 0 : index
    %c0_158 = arith.constant 0 : index
    %285 = vector.load %arg1[%c18_156, %c0_157, %c0_158] : memref<25x8x64xf32, #tpu.memory_space<vmem>>, vector<1x8x64xf32>
    %286 = vector.shape_cast %285 : vector<1x8x64xf32> to vector<8x64xf32>
    %287 = vector.broadcast %7 : f32 to vector<8x64xf32>
    %288 = arith.mulf %287, %286 : vector<8x64xf32>
    %289 = arith.addf %284, %288 : vector<8x64xf32>
    %c19_159 = arith.constant 19 : index
    %c0_160 = arith.constant 0 : index
    %c0_161 = arith.constant 0 : index
    %290 = vector.load %arg1[%c19_159, %c0_160, %c0_161] : memref<25x8x64xf32, #tpu.memory_space<vmem>>, vector<1x8x64xf32>
    %291 = vector.shape_cast %290 : vector<1x8x64xf32> to vector<8x64xf32>
    %292 = vector.broadcast %8 : f32 to vector<8x64xf32>
    %293 = arith.mulf %292, %291 : vector<8x64xf32>
    %294 = arith.addf %289, %293 : vector<8x64xf32>
    %295 = arith.maximumf %250, %294 : vector<8x64xf32>
    %c10_162 = arith.constant 10 : index
    %c0_163 = arith.constant 0 : index
    %c0_164 = arith.constant 0 : index
    %296 = vector.load %arg1[%c10_162, %c0_163, %c0_164] : memref<25x8x64xf32, #tpu.memory_space<vmem>>, vector<1x8x64xf32>
    %297 = vector.shape_cast %296 : vector<1x8x64xf32> to vector<8x64xf32>
    %298 = vector.broadcast %0 : f32 to vector<8x64xf32>
    %299 = arith.mulf %298, %297 : vector<8x64xf32>
    %c11_165 = arith.constant 11 : index
    %c0_166 = arith.constant 0 : index
    %c0_167 = arith.constant 0 : index
    %300 = vector.load %arg1[%c11_165, %c0_166, %c0_167] : memref<25x8x64xf32, #tpu.memory_space<vmem>>, vector<1x8x64xf32>
    %301 = vector.shape_cast %300 : vector<1x8x64xf32> to vector<8x64xf32>
    %302 = vector.broadcast %1 : f32 to vector<8x64xf32>
    %303 = arith.mulf %302, %301 : vector<8x64xf32>
    %304 = arith.addf %299, %303 : vector<8x64xf32>
    %c12_168 = arith.constant 12 : index
    %c0_169 = arith.constant 0 : index
    %c0_170 = arith.constant 0 : index
    %305 = vector.load %arg1[%c12_168, %c0_169, %c0_170] : memref<25x8x64xf32, #tpu.memory_space<vmem>>, vector<1x8x64xf32>
    %306 = vector.shape_cast %305 : vector<1x8x64xf32> to vector<8x64xf32>
    %307 = vector.broadcast %2 : f32 to vector<8x64xf32>
    %308 = arith.mulf %307, %306 : vector<8x64xf32>
    %309 = arith.addf %304, %308 : vector<8x64xf32>
    %c15_171 = arith.constant 15 : index
    %c0_172 = arith.constant 0 : index
    %c0_173 = arith.constant 0 : index
    %310 = vector.load %arg1[%c15_171, %c0_172, %c0_173] : memref<25x8x64xf32, #tpu.memory_space<vmem>>, vector<1x8x64xf32>
    %311 = vector.shape_cast %310 : vector<1x8x64xf32> to vector<8x64xf32>
    %312 = vector.broadcast %3 : f32 to vector<8x64xf32>
    %313 = arith.mulf %312, %311 : vector<8x64xf32>
    %314 = arith.addf %309, %313 : vector<8x64xf32>
    %c16_174 = arith.constant 16 : index
    %c0_175 = arith.constant 0 : index
    %c0_176 = arith.constant 0 : index
    %315 = vector.load %arg1[%c16_174, %c0_175, %c0_176] : memref<25x8x64xf32, #tpu.memory_space<vmem>>, vector<1x8x64xf32>
    %316 = vector.shape_cast %315 : vector<1x8x64xf32> to vector<8x64xf32>
    %317 = vector.broadcast %4 : f32 to vector<8x64xf32>
    %318 = arith.mulf %317, %316 : vector<8x64xf32>
    %319 = arith.addf %314, %318 : vector<8x64xf32>
    %c17_177 = arith.constant 17 : index
    %c0_178 = arith.constant 0 : index
    %c0_179 = arith.constant 0 : index
    %320 = vector.load %arg1[%c17_177, %c0_178, %c0_179] : memref<25x8x64xf32, #tpu.memory_space<vmem>>, vector<1x8x64xf32>
    %321 = vector.shape_cast %320 : vector<1x8x64xf32> to vector<8x64xf32>
    %322 = vector.broadcast %5 : f32 to vector<8x64xf32>
    %323 = arith.mulf %322, %321 : vector<8x64xf32>
    %324 = arith.addf %319, %323 : vector<8x64xf32>
    %c20_180 = arith.constant 20 : index
    %c0_181 = arith.constant 0 : index
    %c0_182 = arith.constant 0 : index
    %325 = vector.load %arg1[%c20_180, %c0_181, %c0_182] : memref<25x8x64xf32, #tpu.memory_space<vmem>>, vector<1x8x64xf32>
    %326 = vector.shape_cast %325 : vector<1x8x64xf32> to vector<8x64xf32>
    %327 = vector.broadcast %6 : f32 to vector<8x64xf32>
    %328 = arith.mulf %327, %326 : vector<8x64xf32>
    %329 = arith.addf %324, %328 : vector<8x64xf32>
    %c21_183 = arith.constant 21 : index
    %c0_184 = arith.constant 0 : index
    %c0_185 = arith.constant 0 : index
    %330 = vector.load %arg1[%c21_183, %c0_184, %c0_185] : memref<25x8x64xf32, #tpu.memory_space<vmem>>, vector<1x8x64xf32>
    %331 = vector.shape_cast %330 : vector<1x8x64xf32> to vector<8x64xf32>
    %332 = vector.broadcast %7 : f32 to vector<8x64xf32>
    %333 = arith.mulf %332, %331 : vector<8x64xf32>
    %334 = arith.addf %329, %333 : vector<8x64xf32>
    %c22_186 = arith.constant 22 : index
    %c0_187 = arith.constant 0 : index
    %c0_188 = arith.constant 0 : index
    %335 = vector.load %arg1[%c22_186, %c0_187, %c0_188] : memref<25x8x64xf32, #tpu.memory_space<vmem>>, vector<1x8x64xf32>
    %336 = vector.shape_cast %335 : vector<1x8x64xf32> to vector<8x64xf32>
    %337 = vector.broadcast %8 : f32 to vector<8x64xf32>
    %338 = arith.mulf %337, %336 : vector<8x64xf32>
    %339 = arith.addf %334, %338 : vector<8x64xf32>
    %340 = arith.maximumf %295, %339 : vector<8x64xf32>
    %c11_189 = arith.constant 11 : index
    %c0_190 = arith.constant 0 : index
    %c0_191 = arith.constant 0 : index
    %341 = vector.load %arg1[%c11_189, %c0_190, %c0_191] : memref<25x8x64xf32, #tpu.memory_space<vmem>>, vector<1x8x64xf32>
    %342 = vector.shape_cast %341 : vector<1x8x64xf32> to vector<8x64xf32>
    %343 = vector.broadcast %0 : f32 to vector<8x64xf32>
    %344 = arith.mulf %343, %342 : vector<8x64xf32>
    %c12_192 = arith.constant 12 : index
    %c0_193 = arith.constant 0 : index
    %c0_194 = arith.constant 0 : index
    %345 = vector.load %arg1[%c12_192, %c0_193, %c0_194] : memref<25x8x64xf32, #tpu.memory_space<vmem>>, vector<1x8x64xf32>
    %346 = vector.shape_cast %345 : vector<1x8x64xf32> to vector<8x64xf32>
    %347 = vector.broadcast %1 : f32 to vector<8x64xf32>
    %348 = arith.mulf %347, %346 : vector<8x64xf32>
    %349 = arith.addf %344, %348 : vector<8x64xf32>
    %c13_195 = arith.constant 13 : index
    %c0_196 = arith.constant 0 : index
    %c0_197 = arith.constant 0 : index
    %350 = vector.load %arg1[%c13_195, %c0_196, %c0_197] : memref<25x8x64xf32, #tpu.memory_space<vmem>>, vector<1x8x64xf32>
    %351 = vector.shape_cast %350 : vector<1x8x64xf32> to vector<8x64xf32>
    %352 = vector.broadcast %2 : f32 to vector<8x64xf32>
    %353 = arith.mulf %352, %351 : vector<8x64xf32>
    %354 = arith.addf %349, %353 : vector<8x64xf32>
    %c16_198 = arith.constant 16 : index
    %c0_199 = arith.constant 0 : index
    %c0_200 = arith.constant 0 : index
    %355 = vector.load %arg1[%c16_198, %c0_199, %c0_200] : memref<25x8x64xf32, #tpu.memory_space<vmem>>, vector<1x8x64xf32>
    %356 = vector.shape_cast %355 : vector<1x8x64xf32> to vector<8x64xf32>
    %357 = vector.broadcast %3 : f32 to vector<8x64xf32>
    %358 = arith.mulf %357, %356 : vector<8x64xf32>
    %359 = arith.addf %354, %358 : vector<8x64xf32>
    %c17_201 = arith.constant 17 : index
    %c0_202 = arith.constant 0 : index
    %c0_203 = arith.constant 0 : index
    %360 = vector.load %arg1[%c17_201, %c0_202, %c0_203] : memref<25x8x64xf32, #tpu.memory_space<vmem>>, vector<1x8x64xf32>
    %361 = vector.shape_cast %360 : vector<1x8x64xf32> to vector<8x64xf32>
    %362 = vector.broadcast %4 : f32 to vector<8x64xf32>
    %363 = arith.mulf %362, %361 : vector<8x64xf32>
    %364 = arith.addf %359, %363 : vector<8x64xf32>
    %c18_204 = arith.constant 18 : index
    %c0_205 = arith.constant 0 : index
    %c0_206 = arith.constant 0 : index
    %365 = vector.load %arg1[%c18_204, %c0_205, %c0_206] : memref<25x8x64xf32, #tpu.memory_space<vmem>>, vector<1x8x64xf32>
    %366 = vector.shape_cast %365 : vector<1x8x64xf32> to vector<8x64xf32>
    %367 = vector.broadcast %5 : f32 to vector<8x64xf32>
    %368 = arith.mulf %367, %366 : vector<8x64xf32>
    %369 = arith.addf %364, %368 : vector<8x64xf32>
    %c21_207 = arith.constant 21 : index
    %c0_208 = arith.constant 0 : index
    %c0_209 = arith.constant 0 : index
    %370 = vector.load %arg1[%c21_207, %c0_208, %c0_209] : memref<25x8x64xf32, #tpu.memory_space<vmem>>, vector<1x8x64xf32>
    %371 = vector.shape_cast %370 : vector<1x8x64xf32> to vector<8x64xf32>
    %372 = vector.broadcast %6 : f32 to vector<8x64xf32>
    %373 = arith.mulf %372, %371 : vector<8x64xf32>
    %374 = arith.addf %369, %373 : vector<8x64xf32>
    %c22_210 = arith.constant 22 : index
    %c0_211 = arith.constant 0 : index
    %c0_212 = arith.constant 0 : index
    %375 = vector.load %arg1[%c22_210, %c0_211, %c0_212] : memref<25x8x64xf32, #tpu.memory_space<vmem>>, vector<1x8x64xf32>
    %376 = vector.shape_cast %375 : vector<1x8x64xf32> to vector<8x64xf32>
    %377 = vector.broadcast %7 : f32 to vector<8x64xf32>
    %378 = arith.mulf %377, %376 : vector<8x64xf32>
    %379 = arith.addf %374, %378 : vector<8x64xf32>
    %c23_213 = arith.constant 23 : index
    %c0_214 = arith.constant 0 : index
    %c0_215 = arith.constant 0 : index
    %380 = vector.load %arg1[%c23_213, %c0_214, %c0_215] : memref<25x8x64xf32, #tpu.memory_space<vmem>>, vector<1x8x64xf32>
    %381 = vector.shape_cast %380 : vector<1x8x64xf32> to vector<8x64xf32>
    %382 = vector.broadcast %8 : f32 to vector<8x64xf32>
    %383 = arith.mulf %382, %381 : vector<8x64xf32>
    %384 = arith.addf %379, %383 : vector<8x64xf32>
    %385 = arith.maximumf %340, %384 : vector<8x64xf32>
    %c12_216 = arith.constant 12 : index
    %c0_217 = arith.constant 0 : index
    %c0_218 = arith.constant 0 : index
    %386 = vector.load %arg1[%c12_216, %c0_217, %c0_218] : memref<25x8x64xf32, #tpu.memory_space<vmem>>, vector<1x8x64xf32>
    %387 = vector.shape_cast %386 : vector<1x8x64xf32> to vector<8x64xf32>
    %388 = vector.broadcast %0 : f32 to vector<8x64xf32>
    %389 = arith.mulf %388, %387 : vector<8x64xf32>
    %c13_219 = arith.constant 13 : index
    %c0_220 = arith.constant 0 : index
    %c0_221 = arith.constant 0 : index
    %390 = vector.load %arg1[%c13_219, %c0_220, %c0_221] : memref<25x8x64xf32, #tpu.memory_space<vmem>>, vector<1x8x64xf32>
    %391 = vector.shape_cast %390 : vector<1x8x64xf32> to vector<8x64xf32>
    %392 = vector.broadcast %1 : f32 to vector<8x64xf32>
    %393 = arith.mulf %392, %391 : vector<8x64xf32>
    %394 = arith.addf %389, %393 : vector<8x64xf32>
    %c14_222 = arith.constant 14 : index
    %c0_223 = arith.constant 0 : index
    %c0_224 = arith.constant 0 : index
    %395 = vector.load %arg1[%c14_222, %c0_223, %c0_224] : memref<25x8x64xf32, #tpu.memory_space<vmem>>, vector<1x8x64xf32>
    %396 = vector.shape_cast %395 : vector<1x8x64xf32> to vector<8x64xf32>
    %397 = vector.broadcast %2 : f32 to vector<8x64xf32>
    %398 = arith.mulf %397, %396 : vector<8x64xf32>
    %399 = arith.addf %394, %398 : vector<8x64xf32>
    %c17_225 = arith.constant 17 : index
    %c0_226 = arith.constant 0 : index
    %c0_227 = arith.constant 0 : index
    %400 = vector.load %arg1[%c17_225, %c0_226, %c0_227] : memref<25x8x64xf32, #tpu.memory_space<vmem>>, vector<1x8x64xf32>
    %401 = vector.shape_cast %400 : vector<1x8x64xf32> to vector<8x64xf32>
    %402 = vector.broadcast %3 : f32 to vector<8x64xf32>
    %403 = arith.mulf %402, %401 : vector<8x64xf32>
    %404 = arith.addf %399, %403 : vector<8x64xf32>
    %c18_228 = arith.constant 18 : index
    %c0_229 = arith.constant 0 : index
    %c0_230 = arith.constant 0 : index
    %405 = vector.load %arg1[%c18_228, %c0_229, %c0_230] : memref<25x8x64xf32, #tpu.memory_space<vmem>>, vector<1x8x64xf32>
    %406 = vector.shape_cast %405 : vector<1x8x64xf32> to vector<8x64xf32>
    %407 = vector.broadcast %4 : f32 to vector<8x64xf32>
    %408 = arith.mulf %407, %406 : vector<8x64xf32>
    %409 = arith.addf %404, %408 : vector<8x64xf32>
    %c19_231 = arith.constant 19 : index
    %c0_232 = arith.constant 0 : index
    %c0_233 = arith.constant 0 : index
    %410 = vector.load %arg1[%c19_231, %c0_232, %c0_233] : memref<25x8x64xf32, #tpu.memory_space<vmem>>, vector<1x8x64xf32>
    %411 = vector.shape_cast %410 : vector<1x8x64xf32> to vector<8x64xf32>
    %412 = vector.broadcast %5 : f32 to vector<8x64xf32>
    %413 = arith.mulf %412, %411 : vector<8x64xf32>
    %414 = arith.addf %409, %413 : vector<8x64xf32>
    %c22_234 = arith.constant 22 : index
    %c0_235 = arith.constant 0 : index
    %c0_236 = arith.constant 0 : index
    %415 = vector.load %arg1[%c22_234, %c0_235, %c0_236] : memref<25x8x64xf32, #tpu.memory_space<vmem>>, vector<1x8x64xf32>
    %416 = vector.shape_cast %415 : vector<1x8x64xf32> to vector<8x64xf32>
    %417 = vector.broadcast %6 : f32 to vector<8x64xf32>
    %418 = arith.mulf %417, %416 : vector<8x64xf32>
    %419 = arith.addf %414, %418 : vector<8x64xf32>
    %c23_237 = arith.constant 23 : index
    %c0_238 = arith.constant 0 : index
    %c0_239 = arith.constant 0 : index
    %420 = vector.load %arg1[%c23_237, %c0_238, %c0_239] : memref<25x8x64xf32, #tpu.memory_space<vmem>>, vector<1x8x64xf32>
    %421 = vector.shape_cast %420 : vector<1x8x64xf32> to vector<8x64xf32>
    %422 = vector.broadcast %7 : f32 to vector<8x64xf32>
    %423 = arith.mulf %422, %421 : vector<8x64xf32>
    %424 = arith.addf %419, %423 : vector<8x64xf32>
    %c24_240 = arith.constant 24 : index
    %c0_241 = arith.constant 0 : index
    %c0_242 = arith.constant 0 : index
    %425 = vector.load %arg1[%c24_240, %c0_241, %c0_242] : memref<25x8x64xf32, #tpu.memory_space<vmem>>, vector<1x8x64xf32>
    %426 = vector.shape_cast %425 : vector<1x8x64xf32> to vector<8x64xf32>
    %427 = vector.broadcast %8 : f32 to vector<8x64xf32>
    %428 = arith.mulf %427, %426 : vector<8x64xf32>
    %429 = arith.addf %424, %428 : vector<8x64xf32>
    %430 = arith.maximumf %385, %429 : vector<8x64xf32>
    %c0_243 = arith.constant 0 : index
    %431 = memref.load %arg3[%c0_243] : memref<3xf32, #tpu.memory_space<smem>>
    %432 = vector.broadcast %431 : f32 to vector<8x64xf32>
    %433 = arith.addf %430, %432 : vector<8x64xf32>
    %cst = arith.constant 0.000000e+00 : f32
    %434 = vector.broadcast %cst : f32 to vector<8x64xf32>
    %435 = arith.maximumf %433, %434 : vector<8x64xf32>
    %c0_244 = arith.constant 0 : index
    %c0_245 = arith.constant 0 : index
    %c0_246 = arith.constant 0 : index
    %436 = vector.load %arg1[%c0_244, %c0_245, %c0_246] : memref<25x8x64xf32, #tpu.memory_space<vmem>>, vector<1x8x64xf32>
    %437 = vector.shape_cast %436 : vector<1x8x64xf32> to vector<8x64xf32>
    %438 = vector.broadcast %9 : f32 to vector<8x64xf32>
    %439 = arith.mulf %438, %437 : vector<8x64xf32>
    %c1_247 = arith.constant 1 : index
    %c0_248 = arith.constant 0 : index
    %c0_249 = arith.constant 0 : index
    %440 = vector.load %arg1[%c1_247, %c0_248, %c0_249] : memref<25x8x64xf32, #tpu.memory_space<vmem>>, vector<1x8x64xf32>
    %441 = vector.shape_cast %440 : vector<1x8x64xf32> to vector<8x64xf32>
    %442 = vector.broadcast %10 : f32 to vector<8x64xf32>
    %443 = arith.mulf %442, %441 : vector<8x64xf32>
    %444 = arith.addf %439, %443 : vector<8x64xf32>
    %c2_250 = arith.constant 2 : index
    %c0_251 = arith.constant 0 : index
    %c0_252 = arith.constant 0 : index
    %445 = vector.load %arg1[%c2_250, %c0_251, %c0_252] : memref<25x8x64xf32, #tpu.memory_space<vmem>>, vector<1x8x64xf32>
    %446 = vector.shape_cast %445 : vector<1x8x64xf32> to vector<8x64xf32>
    %447 = vector.broadcast %11 : f32 to vector<8x64xf32>
    %448 = arith.mulf %447, %446 : vector<8x64xf32>
    %449 = arith.addf %444, %448 : vector<8x64xf32>
    %c5_253 = arith.constant 5 : index
    %c0_254 = arith.constant 0 : index
    %c0_255 = arith.constant 0 : index
    %450 = vector.load %arg1[%c5_253, %c0_254, %c0_255] : memref<25x8x64xf32, #tpu.memory_space<vmem>>, vector<1x8x64xf32>
    %451 = vector.shape_cast %450 : vector<1x8x64xf32> to vector<8x64xf32>
    %452 = vector.broadcast %12 : f32 to vector<8x64xf32>
    %453 = arith.mulf %452, %451 : vector<8x64xf32>
    %454 = arith.addf %449, %453 : vector<8x64xf32>
    %c6_256 = arith.constant 6 : index
    %c0_257 = arith.constant 0 : index
    %c0_258 = arith.constant 0 : index
    %455 = vector.load %arg1[%c6_256, %c0_257, %c0_258] : memref<25x8x64xf32, #tpu.memory_space<vmem>>, vector<1x8x64xf32>
    %456 = vector.shape_cast %455 : vector<1x8x64xf32> to vector<8x64xf32>
    %457 = vector.broadcast %13 : f32 to vector<8x64xf32>
    %458 = arith.mulf %457, %456 : vector<8x64xf32>
    %459 = arith.addf %454, %458 : vector<8x64xf32>
    %c7_259 = arith.constant 7 : index
    %c0_260 = arith.constant 0 : index
    %c0_261 = arith.constant 0 : index
    %460 = vector.load %arg1[%c7_259, %c0_260, %c0_261] : memref<25x8x64xf32, #tpu.memory_space<vmem>>, vector<1x8x64xf32>
    %461 = vector.shape_cast %460 : vector<1x8x64xf32> to vector<8x64xf32>
    %462 = vector.broadcast %14 : f32 to vector<8x64xf32>
    %463 = arith.mulf %462, %461 : vector<8x64xf32>
    %464 = arith.addf %459, %463 : vector<8x64xf32>
    %c10_262 = arith.constant 10 : index
    %c0_263 = arith.constant 0 : index
    %c0_264 = arith.constant 0 : index
    %465 = vector.load %arg1[%c10_262, %c0_263, %c0_264] : memref<25x8x64xf32, #tpu.memory_space<vmem>>, vector<1x8x64xf32>
    %466 = vector.shape_cast %465 : vector<1x8x64xf32> to vector<8x64xf32>
    %467 = vector.broadcast %15 : f32 to vector<8x64xf32>
    %468 = arith.mulf %467, %466 : vector<8x64xf32>
    %469 = arith.addf %464, %468 : vector<8x64xf32>
    %c11_265 = arith.constant 11 : index
    %c0_266 = arith.constant 0 : index
    %c0_267 = arith.constant 0 : index
    %470 = vector.load %arg1[%c11_265, %c0_266, %c0_267] : memref<25x8x64xf32, #tpu.memory_space<vmem>>, vector<1x8x64xf32>
    %471 = vector.shape_cast %470 : vector<1x8x64xf32> to vector<8x64xf32>
    %472 = vector.broadcast %16 : f32 to vector<8x64xf32>
    %473 = arith.mulf %472, %471 : vector<8x64xf32>
    %474 = arith.addf %469, %473 : vector<8x64xf32>
    %c12_268 = arith.constant 12 : index
    %c0_269 = arith.constant 0 : index
    %c0_270 = arith.constant 0 : index
    %475 = vector.load %arg1[%c12_268, %c0_269, %c0_270] : memref<25x8x64xf32, #tpu.memory_space<vmem>>, vector<1x8x64xf32>
    %476 = vector.shape_cast %475 : vector<1x8x64xf32> to vector<8x64xf32>
    %477 = vector.broadcast %17 : f32 to vector<8x64xf32>
    %478 = arith.mulf %477, %476 : vector<8x64xf32>
    %479 = arith.addf %474, %478 : vector<8x64xf32>
    %c1_271 = arith.constant 1 : index
    %c0_272 = arith.constant 0 : index
    %c0_273 = arith.constant 0 : index
    %480 = vector.load %arg1[%c1_271, %c0_272, %c0_273] : memref<25x8x64xf32, #tpu.memory_space<vmem>>, vector<1x8x64xf32>
    %481 = vector.shape_cast %480 : vector<1x8x64xf32> to vector<8x64xf32>
    %482 = vector.broadcast %9 : f32 to vector<8x64xf32>
    %483 = arith.mulf %482, %481 : vector<8x64xf32>
    %c2_274 = arith.constant 2 : index
    %c0_275 = arith.constant 0 : index
    %c0_276 = arith.constant 0 : index
    %484 = vector.load %arg1[%c2_274, %c0_275, %c0_276] : memref<25x8x64xf32, #tpu.memory_space<vmem>>, vector<1x8x64xf32>
    %485 = vector.shape_cast %484 : vector<1x8x64xf32> to vector<8x64xf32>
    %486 = vector.broadcast %10 : f32 to vector<8x64xf32>
    %487 = arith.mulf %486, %485 : vector<8x64xf32>
    %488 = arith.addf %483, %487 : vector<8x64xf32>
    %c3_277 = arith.constant 3 : index
    %c0_278 = arith.constant 0 : index
    %c0_279 = arith.constant 0 : index
    %489 = vector.load %arg1[%c3_277, %c0_278, %c0_279] : memref<25x8x64xf32, #tpu.memory_space<vmem>>, vector<1x8x64xf32>
    %490 = vector.shape_cast %489 : vector<1x8x64xf32> to vector<8x64xf32>
    %491 = vector.broadcast %11 : f32 to vector<8x64xf32>
    %492 = arith.mulf %491, %490 : vector<8x64xf32>
    %493 = arith.addf %488, %492 : vector<8x64xf32>
    %c6_280 = arith.constant 6 : index
    %c0_281 = arith.constant 0 : index
    %c0_282 = arith.constant 0 : index
    %494 = vector.load %arg1[%c6_280, %c0_281, %c0_282] : memref<25x8x64xf32, #tpu.memory_space<vmem>>, vector<1x8x64xf32>
    %495 = vector.shape_cast %494 : vector<1x8x64xf32> to vector<8x64xf32>
    %496 = vector.broadcast %12 : f32 to vector<8x64xf32>
    %497 = arith.mulf %496, %495 : vector<8x64xf32>
    %498 = arith.addf %493, %497 : vector<8x64xf32>
    %c7_283 = arith.constant 7 : index
    %c0_284 = arith.constant 0 : index
    %c0_285 = arith.constant 0 : index
    %499 = vector.load %arg1[%c7_283, %c0_284, %c0_285] : memref<25x8x64xf32, #tpu.memory_space<vmem>>, vector<1x8x64xf32>
    %500 = vector.shape_cast %499 : vector<1x8x64xf32> to vector<8x64xf32>
    %501 = vector.broadcast %13 : f32 to vector<8x64xf32>
    %502 = arith.mulf %501, %500 : vector<8x64xf32>
    %503 = arith.addf %498, %502 : vector<8x64xf32>
    %c8_286 = arith.constant 8 : index
    %c0_287 = arith.constant 0 : index
    %c0_288 = arith.constant 0 : index
    %504 = vector.load %arg1[%c8_286, %c0_287, %c0_288] : memref<25x8x64xf32, #tpu.memory_space<vmem>>, vector<1x8x64xf32>
    %505 = vector.shape_cast %504 : vector<1x8x64xf32> to vector<8x64xf32>
    %506 = vector.broadcast %14 : f32 to vector<8x64xf32>
    %507 = arith.mulf %506, %505 : vector<8x64xf32>
    %508 = arith.addf %503, %507 : vector<8x64xf32>
    %c11_289 = arith.constant 11 : index
    %c0_290 = arith.constant 0 : index
    %c0_291 = arith.constant 0 : index
    %509 = vector.load %arg1[%c11_289, %c0_290, %c0_291] : memref<25x8x64xf32, #tpu.memory_space<vmem>>, vector<1x8x64xf32>
    %510 = vector.shape_cast %509 : vector<1x8x64xf32> to vector<8x64xf32>
    %511 = vector.broadcast %15 : f32 to vector<8x64xf32>
    %512 = arith.mulf %511, %510 : vector<8x64xf32>
    %513 = arith.addf %508, %512 : vector<8x64xf32>
    %c12_292 = arith.constant 12 : index
    %c0_293 = arith.constant 0 : index
    %c0_294 = arith.constant 0 : index
    %514 = vector.load %arg1[%c12_292, %c0_293, %c0_294] : memref<25x8x64xf32, #tpu.memory_space<vmem>>, vector<1x8x64xf32>
    %515 = vector.shape_cast %514 : vector<1x8x64xf32> to vector<8x64xf32>
    %516 = vector.broadcast %16 : f32 to vector<8x64xf32>
    %517 = arith.mulf %516, %515 : vector<8x64xf32>
    %518 = arith.addf %513, %517 : vector<8x64xf32>
    %c13_295 = arith.constant 13 : index
    %c0_296 = arith.constant 0 : index
    %c0_297 = arith.constant 0 : index
    %519 = vector.load %arg1[%c13_295, %c0_296, %c0_297] : memref<25x8x64xf32, #tpu.memory_space<vmem>>, vector<1x8x64xf32>
    %520 = vector.shape_cast %519 : vector<1x8x64xf32> to vector<8x64xf32>
    %521 = vector.broadcast %17 : f32 to vector<8x64xf32>
    %522 = arith.mulf %521, %520 : vector<8x64xf32>
    %523 = arith.addf %518, %522 : vector<8x64xf32>
    %524 = arith.maximumf %479, %523 : vector<8x64xf32>
    %c2_298 = arith.constant 2 : index
    %c0_299 = arith.constant 0 : index
    %c0_300 = arith.constant 0 : index
    %525 = vector.load %arg1[%c2_298, %c0_299, %c0_300] : memref<25x8x64xf32, #tpu.memory_space<vmem>>, vector<1x8x64xf32>
    %526 = vector.shape_cast %525 : vector<1x8x64xf32> to vector<8x64xf32>
    %527 = vector.broadcast %9 : f32 to vector<8x64xf32>
    %528 = arith.mulf %527, %526 : vector<8x64xf32>
    %c3_301 = arith.constant 3 : index
    %c0_302 = arith.constant 0 : index
    %c0_303 = arith.constant 0 : index
    %529 = vector.load %arg1[%c3_301, %c0_302, %c0_303] : memref<25x8x64xf32, #tpu.memory_space<vmem>>, vector<1x8x64xf32>
    %530 = vector.shape_cast %529 : vector<1x8x64xf32> to vector<8x64xf32>
    %531 = vector.broadcast %10 : f32 to vector<8x64xf32>
    %532 = arith.mulf %531, %530 : vector<8x64xf32>
    %533 = arith.addf %528, %532 : vector<8x64xf32>
    %c4_304 = arith.constant 4 : index
    %c0_305 = arith.constant 0 : index
    %c0_306 = arith.constant 0 : index
    %534 = vector.load %arg1[%c4_304, %c0_305, %c0_306] : memref<25x8x64xf32, #tpu.memory_space<vmem>>, vector<1x8x64xf32>
    %535 = vector.shape_cast %534 : vector<1x8x64xf32> to vector<8x64xf32>
    %536 = vector.broadcast %11 : f32 to vector<8x64xf32>
    %537 = arith.mulf %536, %535 : vector<8x64xf32>
    %538 = arith.addf %533, %537 : vector<8x64xf32>
    %c7_307 = arith.constant 7 : index
    %c0_308 = arith.constant 0 : index
    %c0_309 = arith.constant 0 : index
    %539 = vector.load %arg1[%c7_307, %c0_308, %c0_309] : memref<25x8x64xf32, #tpu.memory_space<vmem>>, vector<1x8x64xf32>
    %540 = vector.shape_cast %539 : vector<1x8x64xf32> to vector<8x64xf32>
    %541 = vector.broadcast %12 : f32 to vector<8x64xf32>
    %542 = arith.mulf %541, %540 : vector<8x64xf32>
    %543 = arith.addf %538, %542 : vector<8x64xf32>
    %c8_310 = arith.constant 8 : index
    %c0_311 = arith.constant 0 : index
    %c0_312 = arith.constant 0 : index
    %544 = vector.load %arg1[%c8_310, %c0_311, %c0_312] : memref<25x8x64xf32, #tpu.memory_space<vmem>>, vector<1x8x64xf32>
    %545 = vector.shape_cast %544 : vector<1x8x64xf32> to vector<8x64xf32>
    %546 = vector.broadcast %13 : f32 to vector<8x64xf32>
    %547 = arith.mulf %546, %545 : vector<8x64xf32>
    %548 = arith.addf %543, %547 : vector<8x64xf32>
    %c9_313 = arith.constant 9 : index
    %c0_314 = arith.constant 0 : index
    %c0_315 = arith.constant 0 : index
    %549 = vector.load %arg1[%c9_313, %c0_314, %c0_315] : memref<25x8x64xf32, #tpu.memory_space<vmem>>, vector<1x8x64xf32>
    %550 = vector.shape_cast %549 : vector<1x8x64xf32> to vector<8x64xf32>
    %551 = vector.broadcast %14 : f32 to vector<8x64xf32>
    %552 = arith.mulf %551, %550 : vector<8x64xf32>
    %553 = arith.addf %548, %552 : vector<8x64xf32>
    %c12_316 = arith.constant 12 : index
    %c0_317 = arith.constant 0 : index
    %c0_318 = arith.constant 0 : index
    %554 = vector.load %arg1[%c12_316, %c0_317, %c0_318] : memref<25x8x64xf32, #tpu.memory_space<vmem>>, vector<1x8x64xf32>
    %555 = vector.shape_cast %554 : vector<1x8x64xf32> to vector<8x64xf32>
    %556 = vector.broadcast %15 : f32 to vector<8x64xf32>
    %557 = arith.mulf %556, %555 : vector<8x64xf32>
    %558 = arith.addf %553, %557 : vector<8x64xf32>
    %c13_319 = arith.constant 13 : index
    %c0_320 = arith.constant 0 : index
    %c0_321 = arith.constant 0 : index
    %559 = vector.load %arg1[%c13_319, %c0_320, %c0_321] : memref<25x8x64xf32, #tpu.memory_space<vmem>>, vector<1x8x64xf32>
    %560 = vector.shape_cast %559 : vector<1x8x64xf32> to vector<8x64xf32>
    %561 = vector.broadcast %16 : f32 to vector<8x64xf32>
    %562 = arith.mulf %561, %560 : vector<8x64xf32>
    %563 = arith.addf %558, %562 : vector<8x64xf32>
    %c14_322 = arith.constant 14 : index
    %c0_323 = arith.constant 0 : index
    %c0_324 = arith.constant 0 : index
    %564 = vector.load %arg1[%c14_322, %c0_323, %c0_324] : memref<25x8x64xf32, #tpu.memory_space<vmem>>, vector<1x8x64xf32>
    %565 = vector.shape_cast %564 : vector<1x8x64xf32> to vector<8x64xf32>
    %566 = vector.broadcast %17 : f32 to vector<8x64xf32>
    %567 = arith.mulf %566, %565 : vector<8x64xf32>
    %568 = arith.addf %563, %567 : vector<8x64xf32>
    %569 = arith.maximumf %524, %568 : vector<8x64xf32>
    %c5_325 = arith.constant 5 : index
    %c0_326 = arith.constant 0 : index
    %c0_327 = arith.constant 0 : index
    %570 = vector.load %arg1[%c5_325, %c0_326, %c0_327] : memref<25x8x64xf32, #tpu.memory_space<vmem>>, vector<1x8x64xf32>
    %571 = vector.shape_cast %570 : vector<1x8x64xf32> to vector<8x64xf32>
    %572 = vector.broadcast %9 : f32 to vector<8x64xf32>
    %573 = arith.mulf %572, %571 : vector<8x64xf32>
    %c6_328 = arith.constant 6 : index
    %c0_329 = arith.constant 0 : index
    %c0_330 = arith.constant 0 : index
    %574 = vector.load %arg1[%c6_328, %c0_329, %c0_330] : memref<25x8x64xf32, #tpu.memory_space<vmem>>, vector<1x8x64xf32>
    %575 = vector.shape_cast %574 : vector<1x8x64xf32> to vector<8x64xf32>
    %576 = vector.broadcast %10 : f32 to vector<8x64xf32>
    %577 = arith.mulf %576, %575 : vector<8x64xf32>
    %578 = arith.addf %573, %577 : vector<8x64xf32>
    %c7_331 = arith.constant 7 : index
    %c0_332 = arith.constant 0 : index
    %c0_333 = arith.constant 0 : index
    %579 = vector.load %arg1[%c7_331, %c0_332, %c0_333] : memref<25x8x64xf32, #tpu.memory_space<vmem>>, vector<1x8x64xf32>
    %580 = vector.shape_cast %579 : vector<1x8x64xf32> to vector<8x64xf32>
    %581 = vector.broadcast %11 : f32 to vector<8x64xf32>
    %582 = arith.mulf %581, %580 : vector<8x64xf32>
    %583 = arith.addf %578, %582 : vector<8x64xf32>
    %c10_334 = arith.constant 10 : index
    %c0_335 = arith.constant 0 : index
    %c0_336 = arith.constant 0 : index
    %584 = vector.load %arg1[%c10_334, %c0_335, %c0_336] : memref<25x8x64xf32, #tpu.memory_space<vmem>>, vector<1x8x64xf32>
    %585 = vector.shape_cast %584 : vector<1x8x64xf32> to vector<8x64xf32>
    %586 = vector.broadcast %12 : f32 to vector<8x64xf32>
    %587 = arith.mulf %586, %585 : vector<8x64xf32>
    %588 = arith.addf %583, %587 : vector<8x64xf32>
    %c11_337 = arith.constant 11 : index
    %c0_338 = arith.constant 0 : index
    %c0_339 = arith.constant 0 : index
    %589 = vector.load %arg1[%c11_337, %c0_338, %c0_339] : memref<25x8x64xf32, #tpu.memory_space<vmem>>, vector<1x8x64xf32>
    %590 = vector.shape_cast %589 : vector<1x8x64xf32> to vector<8x64xf32>
    %591 = vector.broadcast %13 : f32 to vector<8x64xf32>
    %592 = arith.mulf %591, %590 : vector<8x64xf32>
    %593 = arith.addf %588, %592 : vector<8x64xf32>
    %c12_340 = arith.constant 12 : index
    %c0_341 = arith.constant 0 : index
    %c0_342 = arith.constant 0 : index
    %594 = vector.load %arg1[%c12_340, %c0_341, %c0_342] : memref<25x8x64xf32, #tpu.memory_space<vmem>>, vector<1x8x64xf32>
    %595 = vector.shape_cast %594 : vector<1x8x64xf32> to vector<8x64xf32>
    %596 = vector.broadcast %14 : f32 to vector<8x64xf32>
    %597 = arith.mulf %596, %595 : vector<8x64xf32>
    %598 = arith.addf %593, %597 : vector<8x64xf32>
    %c15_343 = arith.constant 15 : index
    %c0_344 = arith.constant 0 : index
    %c0_345 = arith.constant 0 : index
    %599 = vector.load %arg1[%c15_343, %c0_344, %c0_345] : memref<25x8x64xf32, #tpu.memory_space<vmem>>, vector<1x8x64xf32>
    %600 = vector.shape_cast %599 : vector<1x8x64xf32> to vector<8x64xf32>
    %601 = vector.broadcast %15 : f32 to vector<8x64xf32>
    %602 = arith.mulf %601, %600 : vector<8x64xf32>
    %603 = arith.addf %598, %602 : vector<8x64xf32>
    %c16_346 = arith.constant 16 : index
    %c0_347 = arith.constant 0 : index
    %c0_348 = arith.constant 0 : index
    %604 = vector.load %arg1[%c16_346, %c0_347, %c0_348] : memref<25x8x64xf32, #tpu.memory_space<vmem>>, vector<1x8x64xf32>
    %605 = vector.shape_cast %604 : vector<1x8x64xf32> to vector<8x64xf32>
    %606 = vector.broadcast %16 : f32 to vector<8x64xf32>
    %607 = arith.mulf %606, %605 : vector<8x64xf32>
    %608 = arith.addf %603, %607 : vector<8x64xf32>
    %c17_349 = arith.constant 17 : index
    %c0_350 = arith.constant 0 : index
    %c0_351 = arith.constant 0 : index
    %609 = vector.load %arg1[%c17_349, %c0_350, %c0_351] : memref<25x8x64xf32, #tpu.memory_space<vmem>>, vector<1x8x64xf32>
    %610 = vector.shape_cast %609 : vector<1x8x64xf32> to vector<8x64xf32>
    %611 = vector.broadcast %17 : f32 to vector<8x64xf32>
    %612 = arith.mulf %611, %610 : vector<8x64xf32>
    %613 = arith.addf %608, %612 : vector<8x64xf32>
    %614 = arith.maximumf %569, %613 : vector<8x64xf32>
    %c6_352 = arith.constant 6 : index
    %c0_353 = arith.constant 0 : index
    %c0_354 = arith.constant 0 : index
    %615 = vector.load %arg1[%c6_352, %c0_353, %c0_354] : memref<25x8x64xf32, #tpu.memory_space<vmem>>, vector<1x8x64xf32>
    %616 = vector.shape_cast %615 : vector<1x8x64xf32> to vector<8x64xf32>
    %617 = vector.broadcast %9 : f32 to vector<8x64xf32>
    %618 = arith.mulf %617, %616 : vector<8x64xf32>
    %c7_355 = arith.constant 7 : index
    %c0_356 = arith.constant 0 : index
    %c0_357 = arith.constant 0 : index
    %619 = vector.load %arg1[%c7_355, %c0_356, %c0_357] : memref<25x8x64xf32, #tpu.memory_space<vmem>>, vector<1x8x64xf32>
    %620 = vector.shape_cast %619 : vector<1x8x64xf32> to vector<8x64xf32>
    %621 = vector.broadcast %10 : f32 to vector<8x64xf32>
    %622 = arith.mulf %621, %620 : vector<8x64xf32>
    %623 = arith.addf %618, %622 : vector<8x64xf32>
    %c8_358 = arith.constant 8 : index
    %c0_359 = arith.constant 0 : index
    %c0_360 = arith.constant 0 : index
    %624 = vector.load %arg1[%c8_358, %c0_359, %c0_360] : memref<25x8x64xf32, #tpu.memory_space<vmem>>, vector<1x8x64xf32>
    %625 = vector.shape_cast %624 : vector<1x8x64xf32> to vector<8x64xf32>
    %626 = vector.broadcast %11 : f32 to vector<8x64xf32>
    %627 = arith.mulf %626, %625 : vector<8x64xf32>
    %628 = arith.addf %623, %627 : vector<8x64xf32>
    %c11_361 = arith.constant 11 : index
    %c0_362 = arith.constant 0 : index
    %c0_363 = arith.constant 0 : index
    %629 = vector.load %arg1[%c11_361, %c0_362, %c0_363] : memref<25x8x64xf32, #tpu.memory_space<vmem>>, vector<1x8x64xf32>
    %630 = vector.shape_cast %629 : vector<1x8x64xf32> to vector<8x64xf32>
    %631 = vector.broadcast %12 : f32 to vector<8x64xf32>
    %632 = arith.mulf %631, %630 : vector<8x64xf32>
    %633 = arith.addf %628, %632 : vector<8x64xf32>
    %c12_364 = arith.constant 12 : index
    %c0_365 = arith.constant 0 : index
    %c0_366 = arith.constant 0 : index
    %634 = vector.load %arg1[%c12_364, %c0_365, %c0_366] : memref<25x8x64xf32, #tpu.memory_space<vmem>>, vector<1x8x64xf32>
    %635 = vector.shape_cast %634 : vector<1x8x64xf32> to vector<8x64xf32>
    %636 = vector.broadcast %13 : f32 to vector<8x64xf32>
    %637 = arith.mulf %636, %635 : vector<8x64xf32>
    %638 = arith.addf %633, %637 : vector<8x64xf32>
    %c13_367 = arith.constant 13 : index
    %c0_368 = arith.constant 0 : index
    %c0_369 = arith.constant 0 : index
    %639 = vector.load %arg1[%c13_367, %c0_368, %c0_369] : memref<25x8x64xf32, #tpu.memory_space<vmem>>, vector<1x8x64xf32>
    %640 = vector.shape_cast %639 : vector<1x8x64xf32> to vector<8x64xf32>
    %641 = vector.broadcast %14 : f32 to vector<8x64xf32>
    %642 = arith.mulf %641, %640 : vector<8x64xf32>
    %643 = arith.addf %638, %642 : vector<8x64xf32>
    %c16_370 = arith.constant 16 : index
    %c0_371 = arith.constant 0 : index
    %c0_372 = arith.constant 0 : index
    %644 = vector.load %arg1[%c16_370, %c0_371, %c0_372] : memref<25x8x64xf32, #tpu.memory_space<vmem>>, vector<1x8x64xf32>
    %645 = vector.shape_cast %644 : vector<1x8x64xf32> to vector<8x64xf32>
    %646 = vector.broadcast %15 : f32 to vector<8x64xf32>
    %647 = arith.mulf %646, %645 : vector<8x64xf32>
    %648 = arith.addf %643, %647 : vector<8x64xf32>
    %c17_373 = arith.constant 17 : index
    %c0_374 = arith.constant 0 : index
    %c0_375 = arith.constant 0 : index
    %649 = vector.load %arg1[%c17_373, %c0_374, %c0_375] : memref<25x8x64xf32, #tpu.memory_space<vmem>>, vector<1x8x64xf32>
    %650 = vector.shape_cast %649 : vector<1x8x64xf32> to vector<8x64xf32>
    %651 = vector.broadcast %16 : f32 to vector<8x64xf32>
    %652 = arith.mulf %651, %650 : vector<8x64xf32>
    %653 = arith.addf %648, %652 : vector<8x64xf32>
    %c18_376 = arith.constant 18 : index
    %c0_377 = arith.constant 0 : index
    %c0_378 = arith.constant 0 : index
    %654 = vector.load %arg1[%c18_376, %c0_377, %c0_378] : memref<25x8x64xf32, #tpu.memory_space<vmem>>, vector<1x8x64xf32>
    %655 = vector.shape_cast %654 : vector<1x8x64xf32> to vector<8x64xf32>
    %656 = vector.broadcast %17 : f32 to vector<8x64xf32>
    %657 = arith.mulf %656, %655 : vector<8x64xf32>
    %658 = arith.addf %653, %657 : vector<8x64xf32>
    %659 = arith.maximumf %614, %658 : vector<8x64xf32>
    %c7_379 = arith.constant 7 : index
    %c0_380 = arith.constant 0 : index
    %c0_381 = arith.constant 0 : index
    %660 = vector.load %arg1[%c7_379, %c0_380, %c0_381] : memref<25x8x64xf32, #tpu.memory_space<vmem>>, vector<1x8x64xf32>
    %661 = vector.shape_cast %660 : vector<1x8x64xf32> to vector<8x64xf32>
    %662 = vector.broadcast %9 : f32 to vector<8x64xf32>
    %663 = arith.mulf %662, %661 : vector<8x64xf32>
    %c8_382 = arith.constant 8 : index
    %c0_383 = arith.constant 0 : index
    %c0_384 = arith.constant 0 : index
    %664 = vector.load %arg1[%c8_382, %c0_383, %c0_384] : memref<25x8x64xf32, #tpu.memory_space<vmem>>, vector<1x8x64xf32>
    %665 = vector.shape_cast %664 : vector<1x8x64xf32> to vector<8x64xf32>
    %666 = vector.broadcast %10 : f32 to vector<8x64xf32>
    %667 = arith.mulf %666, %665 : vector<8x64xf32>
    %668 = arith.addf %663, %667 : vector<8x64xf32>
    %c9_385 = arith.constant 9 : index
    %c0_386 = arith.constant 0 : index
    %c0_387 = arith.constant 0 : index
    %669 = vector.load %arg1[%c9_385, %c0_386, %c0_387] : memref<25x8x64xf32, #tpu.memory_space<vmem>>, vector<1x8x64xf32>
    %670 = vector.shape_cast %669 : vector<1x8x64xf32> to vector<8x64xf32>
    %671 = vector.broadcast %11 : f32 to vector<8x64xf32>
    %672 = arith.mulf %671, %670 : vector<8x64xf32>
    %673 = arith.addf %668, %672 : vector<8x64xf32>
    %c12_388 = arith.constant 12 : index
    %c0_389 = arith.constant 0 : index
    %c0_390 = arith.constant 0 : index
    %674 = vector.load %arg1[%c12_388, %c0_389, %c0_390] : memref<25x8x64xf32, #tpu.memory_space<vmem>>, vector<1x8x64xf32>
    %675 = vector.shape_cast %674 : vector<1x8x64xf32> to vector<8x64xf32>
    %676 = vector.broadcast %12 : f32 to vector<8x64xf32>
    %677 = arith.mulf %676, %675 : vector<8x64xf32>
    %678 = arith.addf %673, %677 : vector<8x64xf32>
    %c13_391 = arith.constant 13 : index
    %c0_392 = arith.constant 0 : index
    %c0_393 = arith.constant 0 : index
    %679 = vector.load %arg1[%c13_391, %c0_392, %c0_393] : memref<25x8x64xf32, #tpu.memory_space<vmem>>, vector<1x8x64xf32>
    %680 = vector.shape_cast %679 : vector<1x8x64xf32> to vector<8x64xf32>
    %681 = vector.broadcast %13 : f32 to vector<8x64xf32>
    %682 = arith.mulf %681, %680 : vector<8x64xf32>
    %683 = arith.addf %678, %682 : vector<8x64xf32>
    %c14_394 = arith.constant 14 : index
    %c0_395 = arith.constant 0 : index
    %c0_396 = arith.constant 0 : index
    %684 = vector.load %arg1[%c14_394, %c0_395, %c0_396] : memref<25x8x64xf32, #tpu.memory_space<vmem>>, vector<1x8x64xf32>
    %685 = vector.shape_cast %684 : vector<1x8x64xf32> to vector<8x64xf32>
    %686 = vector.broadcast %14 : f32 to vector<8x64xf32>
    %687 = arith.mulf %686, %685 : vector<8x64xf32>
    %688 = arith.addf %683, %687 : vector<8x64xf32>
    %c17_397 = arith.constant 17 : index
    %c0_398 = arith.constant 0 : index
    %c0_399 = arith.constant 0 : index
    %689 = vector.load %arg1[%c17_397, %c0_398, %c0_399] : memref<25x8x64xf32, #tpu.memory_space<vmem>>, vector<1x8x64xf32>
    %690 = vector.shape_cast %689 : vector<1x8x64xf32> to vector<8x64xf32>
    %691 = vector.broadcast %15 : f32 to vector<8x64xf32>
    %692 = arith.mulf %691, %690 : vector<8x64xf32>
    %693 = arith.addf %688, %692 : vector<8x64xf32>
    %c18_400 = arith.constant 18 : index
    %c0_401 = arith.constant 0 : index
    %c0_402 = arith.constant 0 : index
    %694 = vector.load %arg1[%c18_400, %c0_401, %c0_402] : memref<25x8x64xf32, #tpu.memory_space<vmem>>, vector<1x8x64xf32>
    %695 = vector.shape_cast %694 : vector<1x8x64xf32> to vector<8x64xf32>
    %696 = vector.broadcast %16 : f32 to vector<8x64xf32>
    %697 = arith.mulf %696, %695 : vector<8x64xf32>
    %698 = arith.addf %693, %697 : vector<8x64xf32>
    %c19_403 = arith.constant 19 : index
    %c0_404 = arith.constant 0 : index
    %c0_405 = arith.constant 0 : index
    %699 = vector.load %arg1[%c19_403, %c0_404, %c0_405] : memref<25x8x64xf32, #tpu.memory_space<vmem>>, vector<1x8x64xf32>
    %700 = vector.shape_cast %699 : vector<1x8x64xf32> to vector<8x64xf32>
    %701 = vector.broadcast %17 : f32 to vector<8x64xf32>
    %702 = arith.mulf %701, %700 : vector<8x64xf32>
    %703 = arith.addf %698, %702 : vector<8x64xf32>
    %704 = arith.maximumf %659, %703 : vector<8x64xf32>
    %c10_406 = arith.constant 10 : index
    %c0_407 = arith.constant 0 : index
    %c0_408 = arith.constant 0 : index
    %705 = vector.load %arg1[%c10_406, %c0_407, %c0_408] : memref<25x8x64xf32, #tpu.memory_space<vmem>>, vector<1x8x64xf32>
    %706 = vector.shape_cast %705 : vector<1x8x64xf32> to vector<8x64xf32>
    %707 = vector.broadcast %9 : f32 to vector<8x64xf32>
    %708 = arith.mulf %707, %706 : vector<8x64xf32>
    %c11_409 = arith.constant 11 : index
    %c0_410 = arith.constant 0 : index
    %c0_411 = arith.constant 0 : index
    %709 = vector.load %arg1[%c11_409, %c0_410, %c0_411] : memref<25x8x64xf32, #tpu.memory_space<vmem>>, vector<1x8x64xf32>
    %710 = vector.shape_cast %709 : vector<1x8x64xf32> to vector<8x64xf32>
    %711 = vector.broadcast %10 : f32 to vector<8x64xf32>
    %712 = arith.mulf %711, %710 : vector<8x64xf32>
    %713 = arith.addf %708, %712 : vector<8x64xf32>
    %c12_412 = arith.constant 12 : index
    %c0_413 = arith.constant 0 : index
    %c0_414 = arith.constant 0 : index
    %714 = vector.load %arg1[%c12_412, %c0_413, %c0_414] : memref<25x8x64xf32, #tpu.memory_space<vmem>>, vector<1x8x64xf32>
    %715 = vector.shape_cast %714 : vector<1x8x64xf32> to vector<8x64xf32>
    %716 = vector.broadcast %11 : f32 to vector<8x64xf32>
    %717 = arith.mulf %716, %715 : vector<8x64xf32>
    %718 = arith.addf %713, %717 : vector<8x64xf32>
    %c15_415 = arith.constant 15 : index
    %c0_416 = arith.constant 0 : index
    %c0_417 = arith.constant 0 : index
    %719 = vector.load %arg1[%c15_415, %c0_416, %c0_417] : memref<25x8x64xf32, #tpu.memory_space<vmem>>, vector<1x8x64xf32>
    %720 = vector.shape_cast %719 : vector<1x8x64xf32> to vector<8x64xf32>
    %721 = vector.broadcast %12 : f32 to vector<8x64xf32>
    %722 = arith.mulf %721, %720 : vector<8x64xf32>
    %723 = arith.addf %718, %722 : vector<8x64xf32>
    %c16_418 = arith.constant 16 : index
    %c0_419 = arith.constant 0 : index
    %c0_420 = arith.constant 0 : index
    %724 = vector.load %arg1[%c16_418, %c0_419, %c0_420] : memref<25x8x64xf32, #tpu.memory_space<vmem>>, vector<1x8x64xf32>
    %725 = vector.shape_cast %724 : vector<1x8x64xf32> to vector<8x64xf32>
    %726 = vector.broadcast %13 : f32 to vector<8x64xf32>
    %727 = arith.mulf %726, %725 : vector<8x64xf32>
    %728 = arith.addf %723, %727 : vector<8x64xf32>
    %c17_421 = arith.constant 17 : index
    %c0_422 = arith.constant 0 : index
    %c0_423 = arith.constant 0 : index
    %729 = vector.load %arg1[%c17_421, %c0_422, %c0_423] : memref<25x8x64xf32, #tpu.memory_space<vmem>>, vector<1x8x64xf32>
    %730 = vector.shape_cast %729 : vector<1x8x64xf32> to vector<8x64xf32>
    %731 = vector.broadcast %14 : f32 to vector<8x64xf32>
    %732 = arith.mulf %731, %730 : vector<8x64xf32>
    %733 = arith.addf %728, %732 : vector<8x64xf32>
    %c20_424 = arith.constant 20 : index
    %c0_425 = arith.constant 0 : index
    %c0_426 = arith.constant 0 : index
    %734 = vector.load %arg1[%c20_424, %c0_425, %c0_426] : memref<25x8x64xf32, #tpu.memory_space<vmem>>, vector<1x8x64xf32>
    %735 = vector.shape_cast %734 : vector<1x8x64xf32> to vector<8x64xf32>
    %736 = vector.broadcast %15 : f32 to vector<8x64xf32>
    %737 = arith.mulf %736, %735 : vector<8x64xf32>
    %738 = arith.addf %733, %737 : vector<8x64xf32>
    %c21_427 = arith.constant 21 : index
    %c0_428 = arith.constant 0 : index
    %c0_429 = arith.constant 0 : index
    %739 = vector.load %arg1[%c21_427, %c0_428, %c0_429] : memref<25x8x64xf32, #tpu.memory_space<vmem>>, vector<1x8x64xf32>
    %740 = vector.shape_cast %739 : vector<1x8x64xf32> to vector<8x64xf32>
    %741 = vector.broadcast %16 : f32 to vector<8x64xf32>
    %742 = arith.mulf %741, %740 : vector<8x64xf32>
    %743 = arith.addf %738, %742 : vector<8x64xf32>
    %c22_430 = arith.constant 22 : index
    %c0_431 = arith.constant 0 : index
    %c0_432 = arith.constant 0 : index
    %744 = vector.load %arg1[%c22_430, %c0_431, %c0_432] : memref<25x8x64xf32, #tpu.memory_space<vmem>>, vector<1x8x64xf32>
    %745 = vector.shape_cast %744 : vector<1x8x64xf32> to vector<8x64xf32>
    %746 = vector.broadcast %17 : f32 to vector<8x64xf32>
    %747 = arith.mulf %746, %745 : vector<8x64xf32>
    %748 = arith.addf %743, %747 : vector<8x64xf32>
    %749 = arith.maximumf %704, %748 : vector<8x64xf32>
    %c11_433 = arith.constant 11 : index
    %c0_434 = arith.constant 0 : index
    %c0_435 = arith.constant 0 : index
    %750 = vector.load %arg1[%c11_433, %c0_434, %c0_435] : memref<25x8x64xf32, #tpu.memory_space<vmem>>, vector<1x8x64xf32>
    %751 = vector.shape_cast %750 : vector<1x8x64xf32> to vector<8x64xf32>
    %752 = vector.broadcast %9 : f32 to vector<8x64xf32>
    %753 = arith.mulf %752, %751 : vector<8x64xf32>
    %c12_436 = arith.constant 12 : index
    %c0_437 = arith.constant 0 : index
    %c0_438 = arith.constant 0 : index
    %754 = vector.load %arg1[%c12_436, %c0_437, %c0_438] : memref<25x8x64xf32, #tpu.memory_space<vmem>>, vector<1x8x64xf32>
    %755 = vector.shape_cast %754 : vector<1x8x64xf32> to vector<8x64xf32>
    %756 = vector.broadcast %10 : f32 to vector<8x64xf32>
    %757 = arith.mulf %756, %755 : vector<8x64xf32>
    %758 = arith.addf %753, %757 : vector<8x64xf32>
    %c13_439 = arith.constant 13 : index
    %c0_440 = arith.constant 0 : index
    %c0_441 = arith.constant 0 : index
    %759 = vector.load %arg1[%c13_439, %c0_440, %c0_441] : memref<25x8x64xf32, #tpu.memory_space<vmem>>, vector<1x8x64xf32>
    %760 = vector.shape_cast %759 : vector<1x8x64xf32> to vector<8x64xf32>
    %761 = vector.broadcast %11 : f32 to vector<8x64xf32>
    %762 = arith.mulf %761, %760 : vector<8x64xf32>
    %763 = arith.addf %758, %762 : vector<8x64xf32>
    %c16_442 = arith.constant 16 : index
    %c0_443 = arith.constant 0 : index
    %c0_444 = arith.constant 0 : index
    %764 = vector.load %arg1[%c16_442, %c0_443, %c0_444] : memref<25x8x64xf32, #tpu.memory_space<vmem>>, vector<1x8x64xf32>
    %765 = vector.shape_cast %764 : vector<1x8x64xf32> to vector<8x64xf32>
    %766 = vector.broadcast %12 : f32 to vector<8x64xf32>
    %767 = arith.mulf %766, %765 : vector<8x64xf32>
    %768 = arith.addf %763, %767 : vector<8x64xf32>
    %c17_445 = arith.constant 17 : index
    %c0_446 = arith.constant 0 : index
    %c0_447 = arith.constant 0 : index
    %769 = vector.load %arg1[%c17_445, %c0_446, %c0_447] : memref<25x8x64xf32, #tpu.memory_space<vmem>>, vector<1x8x64xf32>
    %770 = vector.shape_cast %769 : vector<1x8x64xf32> to vector<8x64xf32>
    %771 = vector.broadcast %13 : f32 to vector<8x64xf32>
    %772 = arith.mulf %771, %770 : vector<8x64xf32>
    %773 = arith.addf %768, %772 : vector<8x64xf32>
    %c18_448 = arith.constant 18 : index
    %c0_449 = arith.constant 0 : index
    %c0_450 = arith.constant 0 : index
    %774 = vector.load %arg1[%c18_448, %c0_449, %c0_450] : memref<25x8x64xf32, #tpu.memory_space<vmem>>, vector<1x8x64xf32>
    %775 = vector.shape_cast %774 : vector<1x8x64xf32> to vector<8x64xf32>
    %776 = vector.broadcast %14 : f32 to vector<8x64xf32>
    %777 = arith.mulf %776, %775 : vector<8x64xf32>
    %778 = arith.addf %773, %777 : vector<8x64xf32>
    %c21_451 = arith.constant 21 : index
    %c0_452 = arith.constant 0 : index
    %c0_453 = arith.constant 0 : index
    %779 = vector.load %arg1[%c21_451, %c0_452, %c0_453] : memref<25x8x64xf32, #tpu.memory_space<vmem>>, vector<1x8x64xf32>
    %780 = vector.shape_cast %779 : vector<1x8x64xf32> to vector<8x64xf32>
    %781 = vector.broadcast %15 : f32 to vector<8x64xf32>
    %782 = arith.mulf %781, %780 : vector<8x64xf32>
    %783 = arith.addf %778, %782 : vector<8x64xf32>
    %c22_454 = arith.constant 22 : index
    %c0_455 = arith.constant 0 : index
    %c0_456 = arith.constant 0 : index
    %784 = vector.load %arg1[%c22_454, %c0_455, %c0_456] : memref<25x8x64xf32, #tpu.memory_space<vmem>>, vector<1x8x64xf32>
    %785 = vector.shape_cast %784 : vector<1x8x64xf32> to vector<8x64xf32>
    %786 = vector.broadcast %16 : f32 to vector<8x64xf32>
    %787 = arith.mulf %786, %785 : vector<8x64xf32>
    %788 = arith.addf %783, %787 : vector<8x64xf32>
    %c23_457 = arith.constant 23 : index
    %c0_458 = arith.constant 0 : index
    %c0_459 = arith.constant 0 : index
    %789 = vector.load %arg1[%c23_457, %c0_458, %c0_459] : memref<25x8x64xf32, #tpu.memory_space<vmem>>, vector<1x8x64xf32>
    %790 = vector.shape_cast %789 : vector<1x8x64xf32> to vector<8x64xf32>
    %791 = vector.broadcast %17 : f32 to vector<8x64xf32>
    %792 = arith.mulf %791, %790 : vector<8x64xf32>
    %793 = arith.addf %788, %792 : vector<8x64xf32>
    %794 = arith.maximumf %749, %793 : vector<8x64xf32>
    %c12_460 = arith.constant 12 : index
    %c0_461 = arith.constant 0 : index
    %c0_462 = arith.constant 0 : index
    %795 = vector.load %arg1[%c12_460, %c0_461, %c0_462] : memref<25x8x64xf32, #tpu.memory_space<vmem>>, vector<1x8x64xf32>
    %796 = vector.shape_cast %795 : vector<1x8x64xf32> to vector<8x64xf32>
    %797 = vector.broadcast %9 : f32 to vector<8x64xf32>
    %798 = arith.mulf %797, %796 : vector<8x64xf32>
    %c13_463 = arith.constant 13 : index
    %c0_464 = arith.constant 0 : index
    %c0_465 = arith.constant 0 : index
    %799 = vector.load %arg1[%c13_463, %c0_464, %c0_465] : memref<25x8x64xf32, #tpu.memory_space<vmem>>, vector<1x8x64xf32>
    %800 = vector.shape_cast %799 : vector<1x8x64xf32> to vector<8x64xf32>
    %801 = vector.broadcast %10 : f32 to vector<8x64xf32>
    %802 = arith.mulf %801, %800 : vector<8x64xf32>
    %803 = arith.addf %798, %802 : vector<8x64xf32>
    %c14_466 = arith.constant 14 : index
    %c0_467 = arith.constant 0 : index
    %c0_468 = arith.constant 0 : index
    %804 = vector.load %arg1[%c14_466, %c0_467, %c0_468] : memref<25x8x64xf32, #tpu.memory_space<vmem>>, vector<1x8x64xf32>
    %805 = vector.shape_cast %804 : vector<1x8x64xf32> to vector<8x64xf32>
    %806 = vector.broadcast %11 : f32 to vector<8x64xf32>
    %807 = arith.mulf %806, %805 : vector<8x64xf32>
    %808 = arith.addf %803, %807 : vector<8x64xf32>
    %c17_469 = arith.constant 17 : index
    %c0_470 = arith.constant 0 : index
    %c0_471 = arith.constant 0 : index
    %809 = vector.load %arg1[%c17_469, %c0_470, %c0_471] : memref<25x8x64xf32, #tpu.memory_space<vmem>>, vector<1x8x64xf32>
    %810 = vector.shape_cast %809 : vector<1x8x64xf32> to vector<8x64xf32>
    %811 = vector.broadcast %12 : f32 to vector<8x64xf32>
    %812 = arith.mulf %811, %810 : vector<8x64xf32>
    %813 = arith.addf %808, %812 : vector<8x64xf32>
    %c18_472 = arith.constant 18 : index
    %c0_473 = arith.constant 0 : index
    %c0_474 = arith.constant 0 : index
    %814 = vector.load %arg1[%c18_472, %c0_473, %c0_474] : memref<25x8x64xf32, #tpu.memory_space<vmem>>, vector<1x8x64xf32>
    %815 = vector.shape_cast %814 : vector<1x8x64xf32> to vector<8x64xf32>
    %816 = vector.broadcast %13 : f32 to vector<8x64xf32>
    %817 = arith.mulf %816, %815 : vector<8x64xf32>
    %818 = arith.addf %813, %817 : vector<8x64xf32>
    %c19_475 = arith.constant 19 : index
    %c0_476 = arith.constant 0 : index
    %c0_477 = arith.constant 0 : index
    %819 = vector.load %arg1[%c19_475, %c0_476, %c0_477] : memref<25x8x64xf32, #tpu.memory_space<vmem>>, vector<1x8x64xf32>
    %820 = vector.shape_cast %819 : vector<1x8x64xf32> to vector<8x64xf32>
    %821 = vector.broadcast %14 : f32 to vector<8x64xf32>
    %822 = arith.mulf %821, %820 : vector<8x64xf32>
    %823 = arith.addf %818, %822 : vector<8x64xf32>
    %c22_478 = arith.constant 22 : index
    %c0_479 = arith.constant 0 : index
    %c0_480 = arith.constant 0 : index
    %824 = vector.load %arg1[%c22_478, %c0_479, %c0_480] : memref<25x8x64xf32, #tpu.memory_space<vmem>>, vector<1x8x64xf32>
    %825 = vector.shape_cast %824 : vector<1x8x64xf32> to vector<8x64xf32>
    %826 = vector.broadcast %15 : f32 to vector<8x64xf32>
    %827 = arith.mulf %826, %825 : vector<8x64xf32>
    %828 = arith.addf %823, %827 : vector<8x64xf32>
    %c23_481 = arith.constant 23 : index
    %c0_482 = arith.constant 0 : index
    %c0_483 = arith.constant 0 : index
    %829 = vector.load %arg1[%c23_481, %c0_482, %c0_483] : memref<25x8x64xf32, #tpu.memory_space<vmem>>, vector<1x8x64xf32>
    %830 = vector.shape_cast %829 : vector<1x8x64xf32> to vector<8x64xf32>
    %831 = vector.broadcast %16 : f32 to vector<8x64xf32>
    %832 = arith.mulf %831, %830 : vector<8x64xf32>
    %833 = arith.addf %828, %832 : vector<8x64xf32>
    %c24_484 = arith.constant 24 : index
    %c0_485 = arith.constant 0 : index
    %c0_486 = arith.constant 0 : index
    %834 = vector.load %arg1[%c24_484, %c0_485, %c0_486] : memref<25x8x64xf32, #tpu.memory_space<vmem>>, vector<1x8x64xf32>
    %835 = vector.shape_cast %834 : vector<1x8x64xf32> to vector<8x64xf32>
    %836 = vector.broadcast %17 : f32 to vector<8x64xf32>
    %837 = arith.mulf %836, %835 : vector<8x64xf32>
    %838 = arith.addf %833, %837 : vector<8x64xf32>
    %839 = arith.maximumf %794, %838 : vector<8x64xf32>
    %c1_487 = arith.constant 1 : index
    %840 = memref.load %arg3[%c1_487] : memref<3xf32, #tpu.memory_space<smem>>
    %841 = vector.broadcast %840 : f32 to vector<8x64xf32>
    %842 = arith.addf %839, %841 : vector<8x64xf32>
    %cst_488 = arith.constant 0.000000e+00 : f32
    %843 = vector.broadcast %cst_488 : f32 to vector<8x64xf32>
    %844 = arith.maximumf %842, %843 : vector<8x64xf32>
    %c0_489 = arith.constant 0 : index
    %c0_490 = arith.constant 0 : index
    %c0_491 = arith.constant 0 : index
    %845 = vector.load %arg1[%c0_489, %c0_490, %c0_491] : memref<25x8x64xf32, #tpu.memory_space<vmem>>, vector<1x8x64xf32>
    %846 = vector.shape_cast %845 : vector<1x8x64xf32> to vector<8x64xf32>
    %847 = vector.broadcast %18 : f32 to vector<8x64xf32>
    %848 = arith.mulf %847, %846 : vector<8x64xf32>
    %c1_492 = arith.constant 1 : index
    %c0_493 = arith.constant 0 : index
    %c0_494 = arith.constant 0 : index
    %849 = vector.load %arg1[%c1_492, %c0_493, %c0_494] : memref<25x8x64xf32, #tpu.memory_space<vmem>>, vector<1x8x64xf32>
    %850 = vector.shape_cast %849 : vector<1x8x64xf32> to vector<8x64xf32>
    %851 = vector.broadcast %19 : f32 to vector<8x64xf32>
    %852 = arith.mulf %851, %850 : vector<8x64xf32>
    %853 = arith.addf %848, %852 : vector<8x64xf32>
    %c2_495 = arith.constant 2 : index
    %c0_496 = arith.constant 0 : index
    %c0_497 = arith.constant 0 : index
    %854 = vector.load %arg1[%c2_495, %c0_496, %c0_497] : memref<25x8x64xf32, #tpu.memory_space<vmem>>, vector<1x8x64xf32>
    %855 = vector.shape_cast %854 : vector<1x8x64xf32> to vector<8x64xf32>
    %856 = vector.broadcast %20 : f32 to vector<8x64xf32>
    %857 = arith.mulf %856, %855 : vector<8x64xf32>
    %858 = arith.addf %853, %857 : vector<8x64xf32>
    %c5_498 = arith.constant 5 : index
    %c0_499 = arith.constant 0 : index
    %c0_500 = arith.constant 0 : index
    %859 = vector.load %arg1[%c5_498, %c0_499, %c0_500] : memref<25x8x64xf32, #tpu.memory_space<vmem>>, vector<1x8x64xf32>
    %860 = vector.shape_cast %859 : vector<1x8x64xf32> to vector<8x64xf32>
    %861 = vector.broadcast %21 : f32 to vector<8x64xf32>
    %862 = arith.mulf %861, %860 : vector<8x64xf32>
    %863 = arith.addf %858, %862 : vector<8x64xf32>
    %c6_501 = arith.constant 6 : index
    %c0_502 = arith.constant 0 : index
    %c0_503 = arith.constant 0 : index
    %864 = vector.load %arg1[%c6_501, %c0_502, %c0_503] : memref<25x8x64xf32, #tpu.memory_space<vmem>>, vector<1x8x64xf32>
    %865 = vector.shape_cast %864 : vector<1x8x64xf32> to vector<8x64xf32>
    %866 = vector.broadcast %22 : f32 to vector<8x64xf32>
    %867 = arith.mulf %866, %865 : vector<8x64xf32>
    %868 = arith.addf %863, %867 : vector<8x64xf32>
    %c7_504 = arith.constant 7 : index
    %c0_505 = arith.constant 0 : index
    %c0_506 = arith.constant 0 : index
    %869 = vector.load %arg1[%c7_504, %c0_505, %c0_506] : memref<25x8x64xf32, #tpu.memory_space<vmem>>, vector<1x8x64xf32>
    %870 = vector.shape_cast %869 : vector<1x8x64xf32> to vector<8x64xf32>
    %871 = vector.broadcast %23 : f32 to vector<8x64xf32>
    %872 = arith.mulf %871, %870 : vector<8x64xf32>
    %873 = arith.addf %868, %872 : vector<8x64xf32>
    %c10_507 = arith.constant 10 : index
    %c0_508 = arith.constant 0 : index
    %c0_509 = arith.constant 0 : index
    %874 = vector.load %arg1[%c10_507, %c0_508, %c0_509] : memref<25x8x64xf32, #tpu.memory_space<vmem>>, vector<1x8x64xf32>
    %875 = vector.shape_cast %874 : vector<1x8x64xf32> to vector<8x64xf32>
    %876 = vector.broadcast %24 : f32 to vector<8x64xf32>
    %877 = arith.mulf %876, %875 : vector<8x64xf32>
    %878 = arith.addf %873, %877 : vector<8x64xf32>
    %c11_510 = arith.constant 11 : index
    %c0_511 = arith.constant 0 : index
    %c0_512 = arith.constant 0 : index
    %879 = vector.load %arg1[%c11_510, %c0_511, %c0_512] : memref<25x8x64xf32, #tpu.memory_space<vmem>>, vector<1x8x64xf32>
    %880 = vector.shape_cast %879 : vector<1x8x64xf32> to vector<8x64xf32>
    %881 = vector.broadcast %25 : f32 to vector<8x64xf32>
    %882 = arith.mulf %881, %880 : vector<8x64xf32>
    %883 = arith.addf %878, %882 : vector<8x64xf32>
    %c12_513 = arith.constant 12 : index
    %c0_514 = arith.constant 0 : index
    %c0_515 = arith.constant 0 : index
    %884 = vector.load %arg1[%c12_513, %c0_514, %c0_515] : memref<25x8x64xf32, #tpu.memory_space<vmem>>, vector<1x8x64xf32>
    %885 = vector.shape_cast %884 : vector<1x8x64xf32> to vector<8x64xf32>
    %886 = vector.broadcast %26 : f32 to vector<8x64xf32>
    %887 = arith.mulf %886, %885 : vector<8x64xf32>
    %888 = arith.addf %883, %887 : vector<8x64xf32>
    %c1_516 = arith.constant 1 : index
    %c0_517 = arith.constant 0 : index
    %c0_518 = arith.constant 0 : index
    %889 = vector.load %arg1[%c1_516, %c0_517, %c0_518] : memref<25x8x64xf32, #tpu.memory_space<vmem>>, vector<1x8x64xf32>
    %890 = vector.shape_cast %889 : vector<1x8x64xf32> to vector<8x64xf32>
    %891 = vector.broadcast %18 : f32 to vector<8x64xf32>
    %892 = arith.mulf %891, %890 : vector<8x64xf32>
    %c2_519 = arith.constant 2 : index
    %c0_520 = arith.constant 0 : index
    %c0_521 = arith.constant 0 : index
    %893 = vector.load %arg1[%c2_519, %c0_520, %c0_521] : memref<25x8x64xf32, #tpu.memory_space<vmem>>, vector<1x8x64xf32>
    %894 = vector.shape_cast %893 : vector<1x8x64xf32> to vector<8x64xf32>
    %895 = vector.broadcast %19 : f32 to vector<8x64xf32>
    %896 = arith.mulf %895, %894 : vector<8x64xf32>
    %897 = arith.addf %892, %896 : vector<8x64xf32>
    %c3_522 = arith.constant 3 : index
    %c0_523 = arith.constant 0 : index
    %c0_524 = arith.constant 0 : index
    %898 = vector.load %arg1[%c3_522, %c0_523, %c0_524] : memref<25x8x64xf32, #tpu.memory_space<vmem>>, vector<1x8x64xf32>
    %899 = vector.shape_cast %898 : vector<1x8x64xf32> to vector<8x64xf32>
    %900 = vector.broadcast %20 : f32 to vector<8x64xf32>
    %901 = arith.mulf %900, %899 : vector<8x64xf32>
    %902 = arith.addf %897, %901 : vector<8x64xf32>
    %c6_525 = arith.constant 6 : index
    %c0_526 = arith.constant 0 : index
    %c0_527 = arith.constant 0 : index
    %903 = vector.load %arg1[%c6_525, %c0_526, %c0_527] : memref<25x8x64xf32, #tpu.memory_space<vmem>>, vector<1x8x64xf32>
    %904 = vector.shape_cast %903 : vector<1x8x64xf32> to vector<8x64xf32>
    %905 = vector.broadcast %21 : f32 to vector<8x64xf32>
    %906 = arith.mulf %905, %904 : vector<8x64xf32>
    %907 = arith.addf %902, %906 : vector<8x64xf32>
    %c7_528 = arith.constant 7 : index
    %c0_529 = arith.constant 0 : index
    %c0_530 = arith.constant 0 : index
    %908 = vector.load %arg1[%c7_528, %c0_529, %c0_530] : memref<25x8x64xf32, #tpu.memory_space<vmem>>, vector<1x8x64xf32>
    %909 = vector.shape_cast %908 : vector<1x8x64xf32> to vector<8x64xf32>
    %910 = vector.broadcast %22 : f32 to vector<8x64xf32>
    %911 = arith.mulf %910, %909 : vector<8x64xf32>
    %912 = arith.addf %907, %911 : vector<8x64xf32>
    %c8_531 = arith.constant 8 : index
    %c0_532 = arith.constant 0 : index
    %c0_533 = arith.constant 0 : index
    %913 = vector.load %arg1[%c8_531, %c0_532, %c0_533] : memref<25x8x64xf32, #tpu.memory_space<vmem>>, vector<1x8x64xf32>
    %914 = vector.shape_cast %913 : vector<1x8x64xf32> to vector<8x64xf32>
    %915 = vector.broadcast %23 : f32 to vector<8x64xf32>
    %916 = arith.mulf %915, %914 : vector<8x64xf32>
    %917 = arith.addf %912, %916 : vector<8x64xf32>
    %c11_534 = arith.constant 11 : index
    %c0_535 = arith.constant 0 : index
    %c0_536 = arith.constant 0 : index
    %918 = vector.load %arg1[%c11_534, %c0_535, %c0_536] : memref<25x8x64xf32, #tpu.memory_space<vmem>>, vector<1x8x64xf32>
    %919 = vector.shape_cast %918 : vector<1x8x64xf32> to vector<8x64xf32>
    %920 = vector.broadcast %24 : f32 to vector<8x64xf32>
    %921 = arith.mulf %920, %919 : vector<8x64xf32>
    %922 = arith.addf %917, %921 : vector<8x64xf32>
    %c12_537 = arith.constant 12 : index
    %c0_538 = arith.constant 0 : index
    %c0_539 = arith.constant 0 : index
    %923 = vector.load %arg1[%c12_537, %c0_538, %c0_539] : memref<25x8x64xf32, #tpu.memory_space<vmem>>, vector<1x8x64xf32>
    %924 = vector.shape_cast %923 : vector<1x8x64xf32> to vector<8x64xf32>
    %925 = vector.broadcast %25 : f32 to vector<8x64xf32>
    %926 = arith.mulf %925, %924 : vector<8x64xf32>
    %927 = arith.addf %922, %926 : vector<8x64xf32>
    %c13_540 = arith.constant 13 : index
    %c0_541 = arith.constant 0 : index
    %c0_542 = arith.constant 0 : index
    %928 = vector.load %arg1[%c13_540, %c0_541, %c0_542] : memref<25x8x64xf32, #tpu.memory_space<vmem>>, vector<1x8x64xf32>
    %929 = vector.shape_cast %928 : vector<1x8x64xf32> to vector<8x64xf32>
    %930 = vector.broadcast %26 : f32 to vector<8x64xf32>
    %931 = arith.mulf %930, %929 : vector<8x64xf32>
    %932 = arith.addf %927, %931 : vector<8x64xf32>
    %933 = arith.maximumf %888, %932 : vector<8x64xf32>
    %c2_543 = arith.constant 2 : index
    %c0_544 = arith.constant 0 : index
    %c0_545 = arith.constant 0 : index
    %934 = vector.load %arg1[%c2_543, %c0_544, %c0_545] : memref<25x8x64xf32, #tpu.memory_space<vmem>>, vector<1x8x64xf32>
    %935 = vector.shape_cast %934 : vector<1x8x64xf32> to vector<8x64xf32>
    %936 = vector.broadcast %18 : f32 to vector<8x64xf32>
    %937 = arith.mulf %936, %935 : vector<8x64xf32>
    %c3_546 = arith.constant 3 : index
    %c0_547 = arith.constant 0 : index
    %c0_548 = arith.constant 0 : index
    %938 = vector.load %arg1[%c3_546, %c0_547, %c0_548] : memref<25x8x64xf32, #tpu.memory_space<vmem>>, vector<1x8x64xf32>
    %939 = vector.shape_cast %938 : vector<1x8x64xf32> to vector<8x64xf32>
    %940 = vector.broadcast %19 : f32 to vector<8x64xf32>
    %941 = arith.mulf %940, %939 : vector<8x64xf32>
    %942 = arith.addf %937, %941 : vector<8x64xf32>
    %c4_549 = arith.constant 4 : index
    %c0_550 = arith.constant 0 : index
    %c0_551 = arith.constant 0 : index
    %943 = vector.load %arg1[%c4_549, %c0_550, %c0_551] : memref<25x8x64xf32, #tpu.memory_space<vmem>>, vector<1x8x64xf32>
    %944 = vector.shape_cast %943 : vector<1x8x64xf32> to vector<8x64xf32>
    %945 = vector.broadcast %20 : f32 to vector<8x64xf32>
    %946 = arith.mulf %945, %944 : vector<8x64xf32>
    %947 = arith.addf %942, %946 : vector<8x64xf32>
    %c7_552 = arith.constant 7 : index
    %c0_553 = arith.constant 0 : index
    %c0_554 = arith.constant 0 : index
    %948 = vector.load %arg1[%c7_552, %c0_553, %c0_554] : memref<25x8x64xf32, #tpu.memory_space<vmem>>, vector<1x8x64xf32>
    %949 = vector.shape_cast %948 : vector<1x8x64xf32> to vector<8x64xf32>
    %950 = vector.broadcast %21 : f32 to vector<8x64xf32>
    %951 = arith.mulf %950, %949 : vector<8x64xf32>
    %952 = arith.addf %947, %951 : vector<8x64xf32>
    %c8_555 = arith.constant 8 : index
    %c0_556 = arith.constant 0 : index
    %c0_557 = arith.constant 0 : index
    %953 = vector.load %arg1[%c8_555, %c0_556, %c0_557] : memref<25x8x64xf32, #tpu.memory_space<vmem>>, vector<1x8x64xf32>
    %954 = vector.shape_cast %953 : vector<1x8x64xf32> to vector<8x64xf32>
    %955 = vector.broadcast %22 : f32 to vector<8x64xf32>
    %956 = arith.mulf %955, %954 : vector<8x64xf32>
    %957 = arith.addf %952, %956 : vector<8x64xf32>
    %c9_558 = arith.constant 9 : index
    %c0_559 = arith.constant 0 : index
    %c0_560 = arith.constant 0 : index
    %958 = vector.load %arg1[%c9_558, %c0_559, %c0_560] : memref<25x8x64xf32, #tpu.memory_space<vmem>>, vector<1x8x64xf32>
    %959 = vector.shape_cast %958 : vector<1x8x64xf32> to vector<8x64xf32>
    %960 = vector.broadcast %23 : f32 to vector<8x64xf32>
    %961 = arith.mulf %960, %959 : vector<8x64xf32>
    %962 = arith.addf %957, %961 : vector<8x64xf32>
    %c12_561 = arith.constant 12 : index
    %c0_562 = arith.constant 0 : index
    %c0_563 = arith.constant 0 : index
    %963 = vector.load %arg1[%c12_561, %c0_562, %c0_563] : memref<25x8x64xf32, #tpu.memory_space<vmem>>, vector<1x8x64xf32>
    %964 = vector.shape_cast %963 : vector<1x8x64xf32> to vector<8x64xf32>
    %965 = vector.broadcast %24 : f32 to vector<8x64xf32>
    %966 = arith.mulf %965, %964 : vector<8x64xf32>
    %967 = arith.addf %962, %966 : vector<8x64xf32>
    %c13_564 = arith.constant 13 : index
    %c0_565 = arith.constant 0 : index
    %c0_566 = arith.constant 0 : index
    %968 = vector.load %arg1[%c13_564, %c0_565, %c0_566] : memref<25x8x64xf32, #tpu.memory_space<vmem>>, vector<1x8x64xf32>
    %969 = vector.shape_cast %968 : vector<1x8x64xf32> to vector<8x64xf32>
    %970 = vector.broadcast %25 : f32 to vector<8x64xf32>
    %971 = arith.mulf %970, %969 : vector<8x64xf32>
    %972 = arith.addf %967, %971 : vector<8x64xf32>
    %c14_567 = arith.constant 14 : index
    %c0_568 = arith.constant 0 : index
    %c0_569 = arith.constant 0 : index
    %973 = vector.load %arg1[%c14_567, %c0_568, %c0_569] : memref<25x8x64xf32, #tpu.memory_space<vmem>>, vector<1x8x64xf32>
    %974 = vector.shape_cast %973 : vector<1x8x64xf32> to vector<8x64xf32>
    %975 = vector.broadcast %26 : f32 to vector<8x64xf32>
    %976 = arith.mulf %975, %974 : vector<8x64xf32>
    %977 = arith.addf %972, %976 : vector<8x64xf32>
    %978 = arith.maximumf %933, %977 : vector<8x64xf32>
    %c5_570 = arith.constant 5 : index
    %c0_571 = arith.constant 0 : index
    %c0_572 = arith.constant 0 : index
    %979 = vector.load %arg1[%c5_570, %c0_571, %c0_572] : memref<25x8x64xf32, #tpu.memory_space<vmem>>, vector<1x8x64xf32>
    %980 = vector.shape_cast %979 : vector<1x8x64xf32> to vector<8x64xf32>
    %981 = vector.broadcast %18 : f32 to vector<8x64xf32>
    %982 = arith.mulf %981, %980 : vector<8x64xf32>
    %c6_573 = arith.constant 6 : index
    %c0_574 = arith.constant 0 : index
    %c0_575 = arith.constant 0 : index
    %983 = vector.load %arg1[%c6_573, %c0_574, %c0_575] : memref<25x8x64xf32, #tpu.memory_space<vmem>>, vector<1x8x64xf32>
    %984 = vector.shape_cast %983 : vector<1x8x64xf32> to vector<8x64xf32>
    %985 = vector.broadcast %19 : f32 to vector<8x64xf32>
    %986 = arith.mulf %985, %984 : vector<8x64xf32>
    %987 = arith.addf %982, %986 : vector<8x64xf32>
    %c7_576 = arith.constant 7 : index
    %c0_577 = arith.constant 0 : index
    %c0_578 = arith.constant 0 : index
    %988 = vector.load %arg1[%c7_576, %c0_577, %c0_578] : memref<25x8x64xf32, #tpu.memory_space<vmem>>, vector<1x8x64xf32>
    %989 = vector.shape_cast %988 : vector<1x8x64xf32> to vector<8x64xf32>
    %990 = vector.broadcast %20 : f32 to vector<8x64xf32>
    %991 = arith.mulf %990, %989 : vector<8x64xf32>
    %992 = arith.addf %987, %991 : vector<8x64xf32>
    %c10_579 = arith.constant 10 : index
    %c0_580 = arith.constant 0 : index
    %c0_581 = arith.constant 0 : index
    %993 = vector.load %arg1[%c10_579, %c0_580, %c0_581] : memref<25x8x64xf32, #tpu.memory_space<vmem>>, vector<1x8x64xf32>
    %994 = vector.shape_cast %993 : vector<1x8x64xf32> to vector<8x64xf32>
    %995 = vector.broadcast %21 : f32 to vector<8x64xf32>
    %996 = arith.mulf %995, %994 : vector<8x64xf32>
    %997 = arith.addf %992, %996 : vector<8x64xf32>
    %c11_582 = arith.constant 11 : index
    %c0_583 = arith.constant 0 : index
    %c0_584 = arith.constant 0 : index
    %998 = vector.load %arg1[%c11_582, %c0_583, %c0_584] : memref<25x8x64xf32, #tpu.memory_space<vmem>>, vector<1x8x64xf32>
    %999 = vector.shape_cast %998 : vector<1x8x64xf32> to vector<8x64xf32>
    %1000 = vector.broadcast %22 : f32 to vector<8x64xf32>
    %1001 = arith.mulf %1000, %999 : vector<8x64xf32>
    %1002 = arith.addf %997, %1001 : vector<8x64xf32>
    %c12_585 = arith.constant 12 : index
    %c0_586 = arith.constant 0 : index
    %c0_587 = arith.constant 0 : index
    %1003 = vector.load %arg1[%c12_585, %c0_586, %c0_587] : memref<25x8x64xf32, #tpu.memory_space<vmem>>, vector<1x8x64xf32>
    %1004 = vector.shape_cast %1003 : vector<1x8x64xf32> to vector<8x64xf32>
    %1005 = vector.broadcast %23 : f32 to vector<8x64xf32>
    %1006 = arith.mulf %1005, %1004 : vector<8x64xf32>
    %1007 = arith.addf %1002, %1006 : vector<8x64xf32>
    %c15_588 = arith.constant 15 : index
    %c0_589 = arith.constant 0 : index
    %c0_590 = arith.constant 0 : index
    %1008 = vector.load %arg1[%c15_588, %c0_589, %c0_590] : memref<25x8x64xf32, #tpu.memory_space<vmem>>, vector<1x8x64xf32>
    %1009 = vector.shape_cast %1008 : vector<1x8x64xf32> to vector<8x64xf32>
    %1010 = vector.broadcast %24 : f32 to vector<8x64xf32>
    %1011 = arith.mulf %1010, %1009 : vector<8x64xf32>
    %1012 = arith.addf %1007, %1011 : vector<8x64xf32>
    %c16_591 = arith.constant 16 : index
    %c0_592 = arith.constant 0 : index
    %c0_593 = arith.constant 0 : index
    %1013 = vector.load %arg1[%c16_591, %c0_592, %c0_593] : memref<25x8x64xf32, #tpu.memory_space<vmem>>, vector<1x8x64xf32>
    %1014 = vector.shape_cast %1013 : vector<1x8x64xf32> to vector<8x64xf32>
    %1015 = vector.broadcast %25 : f32 to vector<8x64xf32>
    %1016 = arith.mulf %1015, %1014 : vector<8x64xf32>
    %1017 = arith.addf %1012, %1016 : vector<8x64xf32>
    %c17_594 = arith.constant 17 : index
    %c0_595 = arith.constant 0 : index
    %c0_596 = arith.constant 0 : index
    %1018 = vector.load %arg1[%c17_594, %c0_595, %c0_596] : memref<25x8x64xf32, #tpu.memory_space<vmem>>, vector<1x8x64xf32>
    %1019 = vector.shape_cast %1018 : vector<1x8x64xf32> to vector<8x64xf32>
    %1020 = vector.broadcast %26 : f32 to vector<8x64xf32>
    %1021 = arith.mulf %1020, %1019 : vector<8x64xf32>
    %1022 = arith.addf %1017, %1021 : vector<8x64xf32>
    %1023 = arith.maximumf %978, %1022 : vector<8x64xf32>
    %c6_597 = arith.constant 6 : index
    %c0_598 = arith.constant 0 : index
    %c0_599 = arith.constant 0 : index
    %1024 = vector.load %arg1[%c6_597, %c0_598, %c0_599] : memref<25x8x64xf32, #tpu.memory_space<vmem>>, vector<1x8x64xf32>
    %1025 = vector.shape_cast %1024 : vector<1x8x64xf32> to vector<8x64xf32>
    %1026 = vector.broadcast %18 : f32 to vector<8x64xf32>
    %1027 = arith.mulf %1026, %1025 : vector<8x64xf32>
    %c7_600 = arith.constant 7 : index
    %c0_601 = arith.constant 0 : index
    %c0_602 = arith.constant 0 : index
    %1028 = vector.load %arg1[%c7_600, %c0_601, %c0_602] : memref<25x8x64xf32, #tpu.memory_space<vmem>>, vector<1x8x64xf32>
    %1029 = vector.shape_cast %1028 : vector<1x8x64xf32> to vector<8x64xf32>
    %1030 = vector.broadcast %19 : f32 to vector<8x64xf32>
    %1031 = arith.mulf %1030, %1029 : vector<8x64xf32>
    %1032 = arith.addf %1027, %1031 : vector<8x64xf32>
    %c8_603 = arith.constant 8 : index
    %c0_604 = arith.constant 0 : index
    %c0_605 = arith.constant 0 : index
    %1033 = vector.load %arg1[%c8_603, %c0_604, %c0_605] : memref<25x8x64xf32, #tpu.memory_space<vmem>>, vector<1x8x64xf32>
    %1034 = vector.shape_cast %1033 : vector<1x8x64xf32> to vector<8x64xf32>
    %1035 = vector.broadcast %20 : f32 to vector<8x64xf32>
    %1036 = arith.mulf %1035, %1034 : vector<8x64xf32>
    %1037 = arith.addf %1032, %1036 : vector<8x64xf32>
    %c11_606 = arith.constant 11 : index
    %c0_607 = arith.constant 0 : index
    %c0_608 = arith.constant 0 : index
    %1038 = vector.load %arg1[%c11_606, %c0_607, %c0_608] : memref<25x8x64xf32, #tpu.memory_space<vmem>>, vector<1x8x64xf32>
    %1039 = vector.shape_cast %1038 : vector<1x8x64xf32> to vector<8x64xf32>
    %1040 = vector.broadcast %21 : f32 to vector<8x64xf32>
    %1041 = arith.mulf %1040, %1039 : vector<8x64xf32>
    %1042 = arith.addf %1037, %1041 : vector<8x64xf32>
    %c12_609 = arith.constant 12 : index
    %c0_610 = arith.constant 0 : index
    %c0_611 = arith.constant 0 : index
    %1043 = vector.load %arg1[%c12_609, %c0_610, %c0_611] : memref<25x8x64xf32, #tpu.memory_space<vmem>>, vector<1x8x64xf32>
    %1044 = vector.shape_cast %1043 : vector<1x8x64xf32> to vector<8x64xf32>
    %1045 = vector.broadcast %22 : f32 to vector<8x64xf32>
    %1046 = arith.mulf %1045, %1044 : vector<8x64xf32>
    %1047 = arith.addf %1042, %1046 : vector<8x64xf32>
    %c13_612 = arith.constant 13 : index
    %c0_613 = arith.constant 0 : index
    %c0_614 = arith.constant 0 : index
    %1048 = vector.load %arg1[%c13_612, %c0_613, %c0_614] : memref<25x8x64xf32, #tpu.memory_space<vmem>>, vector<1x8x64xf32>
    %1049 = vector.shape_cast %1048 : vector<1x8x64xf32> to vector<8x64xf32>
    %1050 = vector.broadcast %23 : f32 to vector<8x64xf32>
    %1051 = arith.mulf %1050, %1049 : vector<8x64xf32>
    %1052 = arith.addf %1047, %1051 : vector<8x64xf32>
    %c16_615 = arith.constant 16 : index
    %c0_616 = arith.constant 0 : index
    %c0_617 = arith.constant 0 : index
    %1053 = vector.load %arg1[%c16_615, %c0_616, %c0_617] : memref<25x8x64xf32, #tpu.memory_space<vmem>>, vector<1x8x64xf32>
    %1054 = vector.shape_cast %1053 : vector<1x8x64xf32> to vector<8x64xf32>
    %1055 = vector.broadcast %24 : f32 to vector<8x64xf32>
    %1056 = arith.mulf %1055, %1054 : vector<8x64xf32>
    %1057 = arith.addf %1052, %1056 : vector<8x64xf32>
    %c17_618 = arith.constant 17 : index
    %c0_619 = arith.constant 0 : index
    %c0_620 = arith.constant 0 : index
    %1058 = vector.load %arg1[%c17_618, %c0_619, %c0_620] : memref<25x8x64xf32, #tpu.memory_space<vmem>>, vector<1x8x64xf32>
    %1059 = vector.shape_cast %1058 : vector<1x8x64xf32> to vector<8x64xf32>
    %1060 = vector.broadcast %25 : f32 to vector<8x64xf32>
    %1061 = arith.mulf %1060, %1059 : vector<8x64xf32>
    %1062 = arith.addf %1057, %1061 : vector<8x64xf32>
    %c18_621 = arith.constant 18 : index
    %c0_622 = arith.constant 0 : index
    %c0_623 = arith.constant 0 : index
    %1063 = vector.load %arg1[%c18_621, %c0_622, %c0_623] : memref<25x8x64xf32, #tpu.memory_space<vmem>>, vector<1x8x64xf32>
    %1064 = vector.shape_cast %1063 : vector<1x8x64xf32> to vector<8x64xf32>
    %1065 = vector.broadcast %26 : f32 to vector<8x64xf32>
    %1066 = arith.mulf %1065, %1064 : vector<8x64xf32>
    %1067 = arith.addf %1062, %1066 : vector<8x64xf32>
    %1068 = arith.maximumf %1023, %1067 : vector<8x64xf32>
    %c7_624 = arith.constant 7 : index
    %c0_625 = arith.constant 0 : index
    %c0_626 = arith.constant 0 : index
    %1069 = vector.load %arg1[%c7_624, %c0_625, %c0_626] : memref<25x8x64xf32, #tpu.memory_space<vmem>>, vector<1x8x64xf32>
    %1070 = vector.shape_cast %1069 : vector<1x8x64xf32> to vector<8x64xf32>
    %1071 = vector.broadcast %18 : f32 to vector<8x64xf32>
    %1072 = arith.mulf %1071, %1070 : vector<8x64xf32>
    %c8_627 = arith.constant 8 : index
    %c0_628 = arith.constant 0 : index
    %c0_629 = arith.constant 0 : index
    %1073 = vector.load %arg1[%c8_627, %c0_628, %c0_629] : memref<25x8x64xf32, #tpu.memory_space<vmem>>, vector<1x8x64xf32>
    %1074 = vector.shape_cast %1073 : vector<1x8x64xf32> to vector<8x64xf32>
    %1075 = vector.broadcast %19 : f32 to vector<8x64xf32>
    %1076 = arith.mulf %1075, %1074 : vector<8x64xf32>
    %1077 = arith.addf %1072, %1076 : vector<8x64xf32>
    %c9_630 = arith.constant 9 : index
    %c0_631 = arith.constant 0 : index
    %c0_632 = arith.constant 0 : index
    %1078 = vector.load %arg1[%c9_630, %c0_631, %c0_632] : memref<25x8x64xf32, #tpu.memory_space<vmem>>, vector<1x8x64xf32>
    %1079 = vector.shape_cast %1078 : vector<1x8x64xf32> to vector<8x64xf32>
    %1080 = vector.broadcast %20 : f32 to vector<8x64xf32>
    %1081 = arith.mulf %1080, %1079 : vector<8x64xf32>
    %1082 = arith.addf %1077, %1081 : vector<8x64xf32>
    %c12_633 = arith.constant 12 : index
    %c0_634 = arith.constant 0 : index
    %c0_635 = arith.constant 0 : index
    %1083 = vector.load %arg1[%c12_633, %c0_634, %c0_635] : memref<25x8x64xf32, #tpu.memory_space<vmem>>, vector<1x8x64xf32>
    %1084 = vector.shape_cast %1083 : vector<1x8x64xf32> to vector<8x64xf32>
    %1085 = vector.broadcast %21 : f32 to vector<8x64xf32>
    %1086 = arith.mulf %1085, %1084 : vector<8x64xf32>
    %1087 = arith.addf %1082, %1086 : vector<8x64xf32>
    %c13_636 = arith.constant 13 : index
    %c0_637 = arith.constant 0 : index
    %c0_638 = arith.constant 0 : index
    %1088 = vector.load %arg1[%c13_636, %c0_637, %c0_638] : memref<25x8x64xf32, #tpu.memory_space<vmem>>, vector<1x8x64xf32>
    %1089 = vector.shape_cast %1088 : vector<1x8x64xf32> to vector<8x64xf32>
    %1090 = vector.broadcast %22 : f32 to vector<8x64xf32>
    %1091 = arith.mulf %1090, %1089 : vector<8x64xf32>
    %1092 = arith.addf %1087, %1091 : vector<8x64xf32>
    %c14_639 = arith.constant 14 : index
    %c0_640 = arith.constant 0 : index
    %c0_641 = arith.constant 0 : index
    %1093 = vector.load %arg1[%c14_639, %c0_640, %c0_641] : memref<25x8x64xf32, #tpu.memory_space<vmem>>, vector<1x8x64xf32>
    %1094 = vector.shape_cast %1093 : vector<1x8x64xf32> to vector<8x64xf32>
    %1095 = vector.broadcast %23 : f32 to vector<8x64xf32>
    %1096 = arith.mulf %1095, %1094 : vector<8x64xf32>
    %1097 = arith.addf %1092, %1096 : vector<8x64xf32>
    %c17_642 = arith.constant 17 : index
    %c0_643 = arith.constant 0 : index
    %c0_644 = arith.constant 0 : index
    %1098 = vector.load %arg1[%c17_642, %c0_643, %c0_644] : memref<25x8x64xf32, #tpu.memory_space<vmem>>, vector<1x8x64xf32>
    %1099 = vector.shape_cast %1098 : vector<1x8x64xf32> to vector<8x64xf32>
    %1100 = vector.broadcast %24 : f32 to vector<8x64xf32>
    %1101 = arith.mulf %1100, %1099 : vector<8x64xf32>
    %1102 = arith.addf %1097, %1101 : vector<8x64xf32>
    %c18_645 = arith.constant 18 : index
    %c0_646 = arith.constant 0 : index
    %c0_647 = arith.constant 0 : index
    %1103 = vector.load %arg1[%c18_645, %c0_646, %c0_647] : memref<25x8x64xf32, #tpu.memory_space<vmem>>, vector<1x8x64xf32>
    %1104 = vector.shape_cast %1103 : vector<1x8x64xf32> to vector<8x64xf32>
    %1105 = vector.broadcast %25 : f32 to vector<8x64xf32>
    %1106 = arith.mulf %1105, %1104 : vector<8x64xf32>
    %1107 = arith.addf %1102, %1106 : vector<8x64xf32>
    %c19_648 = arith.constant 19 : index
    %c0_649 = arith.constant 0 : index
    %c0_650 = arith.constant 0 : index
    %1108 = vector.load %arg1[%c19_648, %c0_649, %c0_650] : memref<25x8x64xf32, #tpu.memory_space<vmem>>, vector<1x8x64xf32>
    %1109 = vector.shape_cast %1108 : vector<1x8x64xf32> to vector<8x64xf32>
    %1110 = vector.broadcast %26 : f32 to vector<8x64xf32>
    %1111 = arith.mulf %1110, %1109 : vector<8x64xf32>
    %1112 = arith.addf %1107, %1111 : vector<8x64xf32>
    %1113 = arith.maximumf %1068, %1112 : vector<8x64xf32>
    %c10_651 = arith.constant 10 : index
    %c0_652 = arith.constant 0 : index
    %c0_653 = arith.constant 0 : index
    %1114 = vector.load %arg1[%c10_651, %c0_652, %c0_653] : memref<25x8x64xf32, #tpu.memory_space<vmem>>, vector<1x8x64xf32>
    %1115 = vector.shape_cast %1114 : vector<1x8x64xf32> to vector<8x64xf32>
    %1116 = vector.broadcast %18 : f32 to vector<8x64xf32>
    %1117 = arith.mulf %1116, %1115 : vector<8x64xf32>
    %c11_654 = arith.constant 11 : index
    %c0_655 = arith.constant 0 : index
    %c0_656 = arith.constant 0 : index
    %1118 = vector.load %arg1[%c11_654, %c0_655, %c0_656] : memref<25x8x64xf32, #tpu.memory_space<vmem>>, vector<1x8x64xf32>
    %1119 = vector.shape_cast %1118 : vector<1x8x64xf32> to vector<8x64xf32>
    %1120 = vector.broadcast %19 : f32 to vector<8x64xf32>
    %1121 = arith.mulf %1120, %1119 : vector<8x64xf32>
    %1122 = arith.addf %1117, %1121 : vector<8x64xf32>
    %c12_657 = arith.constant 12 : index
    %c0_658 = arith.constant 0 : index
    %c0_659 = arith.constant 0 : index
    %1123 = vector.load %arg1[%c12_657, %c0_658, %c0_659] : memref<25x8x64xf32, #tpu.memory_space<vmem>>, vector<1x8x64xf32>
    %1124 = vector.shape_cast %1123 : vector<1x8x64xf32> to vector<8x64xf32>
    %1125 = vector.broadcast %20 : f32 to vector<8x64xf32>
    %1126 = arith.mulf %1125, %1124 : vector<8x64xf32>
    %1127 = arith.addf %1122, %1126 : vector<8x64xf32>
    %c15_660 = arith.constant 15 : index
    %c0_661 = arith.constant 0 : index
    %c0_662 = arith.constant 0 : index
    %1128 = vector.load %arg1[%c15_660, %c0_661, %c0_662] : memref<25x8x64xf32, #tpu.memory_space<vmem>>, vector<1x8x64xf32>
    %1129 = vector.shape_cast %1128 : vector<1x8x64xf32> to vector<8x64xf32>
    %1130 = vector.broadcast %21 : f32 to vector<8x64xf32>
    %1131 = arith.mulf %1130, %1129 : vector<8x64xf32>
    %1132 = arith.addf %1127, %1131 : vector<8x64xf32>
    %c16_663 = arith.constant 16 : index
    %c0_664 = arith.constant 0 : index
    %c0_665 = arith.constant 0 : index
    %1133 = vector.load %arg1[%c16_663, %c0_664, %c0_665] : memref<25x8x64xf32, #tpu.memory_space<vmem>>, vector<1x8x64xf32>
    %1134 = vector.shape_cast %1133 : vector<1x8x64xf32> to vector<8x64xf32>
    %1135 = vector.broadcast %22 : f32 to vector<8x64xf32>
    %1136 = arith.mulf %1135, %1134 : vector<8x64xf32>
    %1137 = arith.addf %1132, %1136 : vector<8x64xf32>
    %c17_666 = arith.constant 17 : index
    %c0_667 = arith.constant 0 : index
    %c0_668 = arith.constant 0 : index
    %1138 = vector.load %arg1[%c17_666, %c0_667, %c0_668] : memref<25x8x64xf32, #tpu.memory_space<vmem>>, vector<1x8x64xf32>
    %1139 = vector.shape_cast %1138 : vector<1x8x64xf32> to vector<8x64xf32>
    %1140 = vector.broadcast %23 : f32 to vector<8x64xf32>
    %1141 = arith.mulf %1140, %1139 : vector<8x64xf32>
    %1142 = arith.addf %1137, %1141 : vector<8x64xf32>
    %c20_669 = arith.constant 20 : index
    %c0_670 = arith.constant 0 : index
    %c0_671 = arith.constant 0 : index
    %1143 = vector.load %arg1[%c20_669, %c0_670, %c0_671] : memref<25x8x64xf32, #tpu.memory_space<vmem>>, vector<1x8x64xf32>
    %1144 = vector.shape_cast %1143 : vector<1x8x64xf32> to vector<8x64xf32>
    %1145 = vector.broadcast %24 : f32 to vector<8x64xf32>
    %1146 = arith.mulf %1145, %1144 : vector<8x64xf32>
    %1147 = arith.addf %1142, %1146 : vector<8x64xf32>
    %c21_672 = arith.constant 21 : index
    %c0_673 = arith.constant 0 : index
    %c0_674 = arith.constant 0 : index
    %1148 = vector.load %arg1[%c21_672, %c0_673, %c0_674] : memref<25x8x64xf32, #tpu.memory_space<vmem>>, vector<1x8x64xf32>
    %1149 = vector.shape_cast %1148 : vector<1x8x64xf32> to vector<8x64xf32>
    %1150 = vector.broadcast %25 : f32 to vector<8x64xf32>
    %1151 = arith.mulf %1150, %1149 : vector<8x64xf32>
    %1152 = arith.addf %1147, %1151 : vector<8x64xf32>
    %c22_675 = arith.constant 22 : index
    %c0_676 = arith.constant 0 : index
    %c0_677 = arith.constant 0 : index
    %1153 = vector.load %arg1[%c22_675, %c0_676, %c0_677] : memref<25x8x64xf32, #tpu.memory_space<vmem>>, vector<1x8x64xf32>
    %1154 = vector.shape_cast %1153 : vector<1x8x64xf32> to vector<8x64xf32>
    %1155 = vector.broadcast %26 : f32 to vector<8x64xf32>
    %1156 = arith.mulf %1155, %1154 : vector<8x64xf32>
    %1157 = arith.addf %1152, %1156 : vector<8x64xf32>
    %1158 = arith.maximumf %1113, %1157 : vector<8x64xf32>
    %c11_678 = arith.constant 11 : index
    %c0_679 = arith.constant 0 : index
    %c0_680 = arith.constant 0 : index
    %1159 = vector.load %arg1[%c11_678, %c0_679, %c0_680] : memref<25x8x64xf32, #tpu.memory_space<vmem>>, vector<1x8x64xf32>
    %1160 = vector.shape_cast %1159 : vector<1x8x64xf32> to vector<8x64xf32>
    %1161 = vector.broadcast %18 : f32 to vector<8x64xf32>
    %1162 = arith.mulf %1161, %1160 : vector<8x64xf32>
    %c12_681 = arith.constant 12 : index
    %c0_682 = arith.constant 0 : index
    %c0_683 = arith.constant 0 : index
    %1163 = vector.load %arg1[%c12_681, %c0_682, %c0_683] : memref<25x8x64xf32, #tpu.memory_space<vmem>>, vector<1x8x64xf32>
    %1164 = vector.shape_cast %1163 : vector<1x8x64xf32> to vector<8x64xf32>
    %1165 = vector.broadcast %19 : f32 to vector<8x64xf32>
    %1166 = arith.mulf %1165, %1164 : vector<8x64xf32>
    %1167 = arith.addf %1162, %1166 : vector<8x64xf32>
    %c13_684 = arith.constant 13 : index
    %c0_685 = arith.constant 0 : index
    %c0_686 = arith.constant 0 : index
    %1168 = vector.load %arg1[%c13_684, %c0_685, %c0_686] : memref<25x8x64xf32, #tpu.memory_space<vmem>>, vector<1x8x64xf32>
    %1169 = vector.shape_cast %1168 : vector<1x8x64xf32> to vector<8x64xf32>
    %1170 = vector.broadcast %20 : f32 to vector<8x64xf32>
    %1171 = arith.mulf %1170, %1169 : vector<8x64xf32>
    %1172 = arith.addf %1167, %1171 : vector<8x64xf32>
    %c16_687 = arith.constant 16 : index
    %c0_688 = arith.constant 0 : index
    %c0_689 = arith.constant 0 : index
    %1173 = vector.load %arg1[%c16_687, %c0_688, %c0_689] : memref<25x8x64xf32, #tpu.memory_space<vmem>>, vector<1x8x64xf32>
    %1174 = vector.shape_cast %1173 : vector<1x8x64xf32> to vector<8x64xf32>
    %1175 = vector.broadcast %21 : f32 to vector<8x64xf32>
    %1176 = arith.mulf %1175, %1174 : vector<8x64xf32>
    %1177 = arith.addf %1172, %1176 : vector<8x64xf32>
    %c17_690 = arith.constant 17 : index
    %c0_691 = arith.constant 0 : index
    %c0_692 = arith.constant 0 : index
    %1178 = vector.load %arg1[%c17_690, %c0_691, %c0_692] : memref<25x8x64xf32, #tpu.memory_space<vmem>>, vector<1x8x64xf32>
    %1179 = vector.shape_cast %1178 : vector<1x8x64xf32> to vector<8x64xf32>
    %1180 = vector.broadcast %22 : f32 to vector<8x64xf32>
    %1181 = arith.mulf %1180, %1179 : vector<8x64xf32>
    %1182 = arith.addf %1177, %1181 : vector<8x64xf32>
    %c18_693 = arith.constant 18 : index
    %c0_694 = arith.constant 0 : index
    %c0_695 = arith.constant 0 : index
    %1183 = vector.load %arg1[%c18_693, %c0_694, %c0_695] : memref<25x8x64xf32, #tpu.memory_space<vmem>>, vector<1x8x64xf32>
    %1184 = vector.shape_cast %1183 : vector<1x8x64xf32> to vector<8x64xf32>
    %1185 = vector.broadcast %23 : f32 to vector<8x64xf32>
    %1186 = arith.mulf %1185, %1184 : vector<8x64xf32>
    %1187 = arith.addf %1182, %1186 : vector<8x64xf32>
    %c21_696 = arith.constant 21 : index
    %c0_697 = arith.constant 0 : index
    %c0_698 = arith.constant 0 : index
    %1188 = vector.load %arg1[%c21_696, %c0_697, %c0_698] : memref<25x8x64xf32, #tpu.memory_space<vmem>>, vector<1x8x64xf32>
    %1189 = vector.shape_cast %1188 : vector<1x8x64xf32> to vector<8x64xf32>
    %1190 = vector.broadcast %24 : f32 to vector<8x64xf32>
    %1191 = arith.mulf %1190, %1189 : vector<8x64xf32>
    %1192 = arith.addf %1187, %1191 : vector<8x64xf32>
    %c22_699 = arith.constant 22 : index
    %c0_700 = arith.constant 0 : index
    %c0_701 = arith.constant 0 : index
    %1193 = vector.load %arg1[%c22_699, %c0_700, %c0_701] : memref<25x8x64xf32, #tpu.memory_space<vmem>>, vector<1x8x64xf32>
    %1194 = vector.shape_cast %1193 : vector<1x8x64xf32> to vector<8x64xf32>
    %1195 = vector.broadcast %25 : f32 to vector<8x64xf32>
    %1196 = arith.mulf %1195, %1194 : vector<8x64xf32>
    %1197 = arith.addf %1192, %1196 : vector<8x64xf32>
    %c23_702 = arith.constant 23 : index
    %c0_703 = arith.constant 0 : index
    %c0_704 = arith.constant 0 : index
    %1198 = vector.load %arg1[%c23_702, %c0_703, %c0_704] : memref<25x8x64xf32, #tpu.memory_space<vmem>>, vector<1x8x64xf32>
    %1199 = vector.shape_cast %1198 : vector<1x8x64xf32> to vector<8x64xf32>
    %1200 = vector.broadcast %26 : f32 to vector<8x64xf32>
    %1201 = arith.mulf %1200, %1199 : vector<8x64xf32>
    %1202 = arith.addf %1197, %1201 : vector<8x64xf32>
    %1203 = arith.maximumf %1158, %1202 : vector<8x64xf32>
    %c12_705 = arith.constant 12 : index
    %c0_706 = arith.constant 0 : index
    %c0_707 = arith.constant 0 : index
    %1204 = vector.load %arg1[%c12_705, %c0_706, %c0_707] : memref<25x8x64xf32, #tpu.memory_space<vmem>>, vector<1x8x64xf32>
    %1205 = vector.shape_cast %1204 : vector<1x8x64xf32> to vector<8x64xf32>
    %1206 = vector.broadcast %18 : f32 to vector<8x64xf32>
    %1207 = arith.mulf %1206, %1205 : vector<8x64xf32>
    %c13_708 = arith.constant 13 : index
    %c0_709 = arith.constant 0 : index
    %c0_710 = arith.constant 0 : index
    %1208 = vector.load %arg1[%c13_708, %c0_709, %c0_710] : memref<25x8x64xf32, #tpu.memory_space<vmem>>, vector<1x8x64xf32>
    %1209 = vector.shape_cast %1208 : vector<1x8x64xf32> to vector<8x64xf32>
    %1210 = vector.broadcast %19 : f32 to vector<8x64xf32>
    %1211 = arith.mulf %1210, %1209 : vector<8x64xf32>
    %1212 = arith.addf %1207, %1211 : vector<8x64xf32>
    %c14_711 = arith.constant 14 : index
    %c0_712 = arith.constant 0 : index
    %c0_713 = arith.constant 0 : index
    %1213 = vector.load %arg1[%c14_711, %c0_712, %c0_713] : memref<25x8x64xf32, #tpu.memory_space<vmem>>, vector<1x8x64xf32>
    %1214 = vector.shape_cast %1213 : vector<1x8x64xf32> to vector<8x64xf32>
    %1215 = vector.broadcast %20 : f32 to vector<8x64xf32>
    %1216 = arith.mulf %1215, %1214 : vector<8x64xf32>
    %1217 = arith.addf %1212, %1216 : vector<8x64xf32>
    %c17_714 = arith.constant 17 : index
    %c0_715 = arith.constant 0 : index
    %c0_716 = arith.constant 0 : index
    %1218 = vector.load %arg1[%c17_714, %c0_715, %c0_716] : memref<25x8x64xf32, #tpu.memory_space<vmem>>, vector<1x8x64xf32>
    %1219 = vector.shape_cast %1218 : vector<1x8x64xf32> to vector<8x64xf32>
    %1220 = vector.broadcast %21 : f32 to vector<8x64xf32>
    %1221 = arith.mulf %1220, %1219 : vector<8x64xf32>
    %1222 = arith.addf %1217, %1221 : vector<8x64xf32>
    %c18_717 = arith.constant 18 : index
    %c0_718 = arith.constant 0 : index
    %c0_719 = arith.constant 0 : index
    %1223 = vector.load %arg1[%c18_717, %c0_718, %c0_719] : memref<25x8x64xf32, #tpu.memory_space<vmem>>, vector<1x8x64xf32>
    %1224 = vector.shape_cast %1223 : vector<1x8x64xf32> to vector<8x64xf32>
    %1225 = vector.broadcast %22 : f32 to vector<8x64xf32>
    %1226 = arith.mulf %1225, %1224 : vector<8x64xf32>
    %1227 = arith.addf %1222, %1226 : vector<8x64xf32>
    %c19_720 = arith.constant 19 : index
    %c0_721 = arith.constant 0 : index
    %c0_722 = arith.constant 0 : index
    %1228 = vector.load %arg1[%c19_720, %c0_721, %c0_722] : memref<25x8x64xf32, #tpu.memory_space<vmem>>, vector<1x8x64xf32>
    %1229 = vector.shape_cast %1228 : vector<1x8x64xf32> to vector<8x64xf32>
    %1230 = vector.broadcast %23 : f32 to vector<8x64xf32>
    %1231 = arith.mulf %1230, %1229 : vector<8x64xf32>
    %1232 = arith.addf %1227, %1231 : vector<8x64xf32>
    %c22_723 = arith.constant 22 : index
    %c0_724 = arith.constant 0 : index
    %c0_725 = arith.constant 0 : index
    %1233 = vector.load %arg1[%c22_723, %c0_724, %c0_725] : memref<25x8x64xf32, #tpu.memory_space<vmem>>, vector<1x8x64xf32>
    %1234 = vector.shape_cast %1233 : vector<1x8x64xf32> to vector<8x64xf32>
    %1235 = vector.broadcast %24 : f32 to vector<8x64xf32>
    %1236 = arith.mulf %1235, %1234 : vector<8x64xf32>
    %1237 = arith.addf %1232, %1236 : vector<8x64xf32>
    %c23_726 = arith.constant 23 : index
    %c0_727 = arith.constant 0 : index
    %c0_728 = arith.constant 0 : index
    %1238 = vector.load %arg1[%c23_726, %c0_727, %c0_728] : memref<25x8x64xf32, #tpu.memory_space<vmem>>, vector<1x8x64xf32>
    %1239 = vector.shape_cast %1238 : vector<1x8x64xf32> to vector<8x64xf32>
    %1240 = vector.broadcast %25 : f32 to vector<8x64xf32>
    %1241 = arith.mulf %1240, %1239 : vector<8x64xf32>
    %1242 = arith.addf %1237, %1241 : vector<8x64xf32>
    %c24_729 = arith.constant 24 : index
    %c0_730 = arith.constant 0 : index
    %c0_731 = arith.constant 0 : index
    %1243 = vector.load %arg1[%c24_729, %c0_730, %c0_731] : memref<25x8x64xf32, #tpu.memory_space<vmem>>, vector<1x8x64xf32>
    %1244 = vector.shape_cast %1243 : vector<1x8x64xf32> to vector<8x64xf32>
    %1245 = vector.broadcast %26 : f32 to vector<8x64xf32>
    %1246 = arith.mulf %1245, %1244 : vector<8x64xf32>
    %1247 = arith.addf %1242, %1246 : vector<8x64xf32>
    %1248 = arith.maximumf %1203, %1247 : vector<8x64xf32>
    %c2_732 = arith.constant 2 : index
    %1249 = memref.load %arg3[%c2_732] : memref<3xf32, #tpu.memory_space<smem>>
    %1250 = vector.broadcast %1249 : f32 to vector<8x64xf32>
    %1251 = arith.addf %1248, %1250 : vector<8x64xf32>
    %cst_733 = arith.constant 0.000000e+00 : f32
    %1252 = vector.broadcast %cst_733 : f32 to vector<8x64xf32>
    %1253 = arith.maximumf %1251, %1252 : vector<8x64xf32>
    %1254 = tpu.concatenate %435, %844, %1253 in 1 : vector<8x64xf32>, vector<8x64xf32>, vector<8x64xf32> -> vector<8x192xf32>
    %c0_734 = arith.constant 0 : index
    %c0_735 = arith.constant 0 : index
    %1255 = vector.load %arg4[%c0_734, %c0_735] : memref<192x10xf32, #tpu.memory_space<vmem>>, vector<192x10xf32>
    %cst_736 = arith.constant dense<0.000000e+00> : vector<8x10xf32>
    %1256 = tpu.matmul %1254, %1255, %cst_736 {dimension_numbers = #tpu.dot_dimension_numbers<[1], [0], [0], [1], [0, 0, 1, 1], [], []>} : vector<8x192xf32>, vector<192x10xf32>, vector<8x10xf32> -> vector<8x10xf32>
    %c0_737 = arith.constant 0 : index
    %c0_738 = arith.constant 0 : index
    %1257 = vector.load %arg5[%c0_737, %c0_738] : memref<1x10xf32, #tpu.memory_space<vmem>>, vector<1x10xf32>
    %1258 = vector.broadcast %1257 : vector<1x10xf32> to vector<8x10xf32>
    %1259 = arith.addf %1256, %1258 : vector<8x10xf32>
    %cst_739 = arith.constant dense<0xFF800000> : vector<8xf32>
    %1260 = vector.multi_reduction <maximumf>, %1259, %cst_739 [1] : vector<8x10xf32> to vector<8xf32>
    %1261 = vector.shape_cast %1260 : vector<8xf32> to vector<8x1xf32>
    %1262 = vector.broadcast %1261 : vector<8x1xf32> to vector<8x10xf32>
    %1263 = arith.subf %1259, %1262 : vector<8x10xf32>
    %1264 = math.exp %1263 : vector<8x10xf32>
    %cst_740 = arith.constant dense<0.000000e+00> : vector<8xf32>
    %1265 = vector.multi_reduction <add>, %1264, %cst_740 [1] : vector<8x10xf32> to vector<8xf32>
    %1266 = vector.shape_cast %1265 : vector<8xf32> to vector<8x1xf32>
    %1267 = math.log %1266 : vector<8x1xf32>
    %1268 = vector.broadcast %1267 : vector<8x1xf32> to vector<8x10xf32>
    %1269 = arith.subf %1263, %1268 : vector<8x10xf32>
    %c0_741 = arith.constant 0 : index
    %c0_742 = arith.constant 0 : index
    %1270 = vector.load %arg6[%c0_741, %c0_742] : memref<8x10xf32, #tpu.memory_space<vmem>>, vector<8x10xf32>
    tpu.vector_store %arg6[%c0_741, %c0_742], %1269 {strides = array<i32>} : memref<8x10xf32, #tpu.memory_space<vmem>>, vector<8x10xf32>,
    return
  }
  func.func @transform_0(%arg0: i32) -> (i32, i32, i32) {
    %c0_i32 = arith.constant 0 : i32
    %c0_i32_0 = arith.constant 0 : i32
    %c0_i32_1 = arith.constant 0 : i32
    return %c0_i32, %arg0, %c0_i32_0 : i32, i32, i32
  }
  func.func @transform_1(%arg0: i32) -> i32 {
    %c0_i32 = arith.constant 0 : i32
    %c0_i32_0 = arith.constant 0 : i32
    return %c0_i32 : i32
  }
  func.func @transform_2(%arg0: i32) -> i32 {
    %c0_i32 = arith.constant 0 : i32
    %c0_i32_0 = arith.constant 0 : i32
    return %c0_i32 : i32
  }
  func.func @transform_3(%arg0: i32) -> (i32, i32) {
    %c0_i32 = arith.constant 0 : i32
    %c0_i32_0 = arith.constant 0 : i32
    %c0_i32_1 = arith.constant 0 : i32
    return %c0_i32, %c0_i32_0 : i32, i32
  }
  func.func @transform_4(%arg0: i32) -> (i32, i32) {
    %c0_i32 = arith.constant 0 : i32
    %c0_i32_0 = arith.constant 0 : i32
    %c0_i32_1 = arith.constant 0 : i32
    return %c0_i32, %c0_i32_0 : i32, i32
  }
  func.func @transform_5(%arg0: i32) -> (i32, i32) {
    %c0_i32 = arith.constant 0 : i32
    %c0_i32_0 = arith.constant 0 : i32
    return %arg0, %c0_i32 : i32, i32
  }
}

</mosaic_0001>

<llo_original>
// kernel: convnet_forward.1
$region0: #{convnet_forward.1}
  #allocation0 [shape = 'u32[]', space=smem, size = 0x4, offset = 0x4, fixed_abs, tag = 'smem constant byte address 0x4 - core index']
  #allocation1 [shape = 'u32[144,128]{1,0:T(1,128)}', space=vmem, size = 0x12000, scoped, tag = 'internal scratch']
  %s0 = inlined_call_operand.vmem [shape: f32[25,8,64], index: 0, kind: input, shape index: {}]
  %s1 = inlined_call_operand.vmem [shape: f32[27], index: 1, kind: input, shape index: {}]
  %s2 = inlined_call_operand.vmem [shape: f32[3], index: 2, kind: input, shape index: {}]
  %s3 = inlined_call_operand.vmem [shape: f32[192,10], index: 3, kind: input, shape index: {}]
  %s4 = inlined_call_operand.vmem [shape: f32[1,10], index: 4, kind: input, shape index: {}]
  %s5 = inlined_call_operand.vmem [shape: f32[8,10], index: 5, kind: output, shape index: {}]
  %s6 = sld [smem:[#allocation0]]
  $region38: #{convnet_forward.1} parent=0
    _
  %s8 = ssub.s32 1, %s6
  %s9 = scalar_select 0, %s8, %s6
  $region1: #{convnet_forward.1} parent=0
    #allocation2 [shape = 'u8[512]{0}', space=smem, size = 0x200, scoped, tag = 'input window, operand 1, single buffered']
    #allocation3 [shape = 's32[1]{0}', space=sflag, size = 0x4, scoped, tag = 'scoped memory for convnet_forward.1']
    #allocation4 [shape = 'u8[512]{0}', space=smem, size = 0x200, scoped, tag = 'input window, operand 2, single buffered']
    #allocation5 [shape = 's32[1]{0}', space=sflag, size = 0x4, scoped, tag = 'scoped memory for convnet_forward.1']
    %10 = vsyncpa [#allocation3], 0
    %11 = vsyncpa [#allocation5], 0
    // Predicated region
    $region2: #{convnet_forward.1} parent=1 // pred_check
      _
    $region3: #{convnet_forward.1} parent=1 // pred_check_branch
      %13 = sbr.rel (0) target = $region5
    $region4: #{convnet_forward.1} parent=1 // pred_region
      _
    $region5: #{convnet_forward.1} parent=1 // pred_fallthru
      _
    // Predicated region
    $region6: #{convnet_forward.1} parent=1 // pred_check
      _
    $region7: #{convnet_forward.1} parent=1 // pred_check_branch
      %15 = sbr.rel (0) target = $region9
    $region8: #{convnet_forward.1} parent=1 // pred_region
      %s17 = ssub.s32 16, 16
      %18 = vsyncadd [#allocation3], %s17
      %s20 = sshll.u32 %s1, 4
      %s21 = int_to_ptr.vmem [resolvable:$true] %s20
      %23 = dma.vmem_to_smem %s21, 16, [#allocation2], [#allocation3]
    $region9: #{convnet_forward.1} parent=1 // pred_fallthru
      _
    // Predicated region
    $region10: #{convnet_forward.1} parent=1 // pred_check
      _
    $region11: #{convnet_forward.1} parent=1 // pred_check_branch
      %25 = sbr.rel (0) target = $region13
    $region12: #{convnet_forward.1} parent=1 // pred_region
      %s27 = ssub.s32 16, 16
      %28 = vsyncadd [#allocation5], %s27
      %s30 = sshll.u32 %s2, 4
      %s31 = int_to_ptr.vmem [resolvable:$true] %s30
      %33 = dma.vmem_to_smem %s31, 16, [#allocation4], [#allocation5]
    $region13: #{convnet_forward.1} parent=1 // pred_fallthru
      _
    // Predicated region
    $region14: #{convnet_forward.1} parent=1 // pred_check
      _
    $region15: #{convnet_forward.1} parent=1 // pred_check_branch
      %35 = sbr.rel (0) target = $region17
    $region16: #{convnet_forward.1} parent=1 // pred_region
      _
    $region17: #{convnet_forward.1} parent=1 // pred_fallthru
      _
    // Predicated region
    $region18: #{convnet_forward.1} parent=1 // pred_check
      _
    $region19: #{convnet_forward.1} parent=1 // pred_check_branch
      %37 = sbr.rel (0) target = $region21
    $region20: #{convnet_forward.1} parent=1 // pred_region
      _
    $region21: #{convnet_forward.1} parent=1 // pred_fallthru
      _
    // Predicated region
    $region22: #{convnet_forward.1} parent=1 // pred_check
      _
    $region23: #{convnet_forward.1} parent=1 // pred_check_branch
      %39 = sbr.rel (0) target = $region25
    $region24: #{convnet_forward.1} parent=1 // pred_region
      %40 = dma.done [#allocation3], 16
    $region25: #{convnet_forward.1} parent=1 // pred_fallthru
      _
    // Predicated region
    $region26: #{convnet_forward.1} parent=1 // pred_check
      _
    $region27: #{convnet_forward.1} parent=1 // pred_check_branch
      %42 = sbr.rel (0) target = $region29
    $region28: #{convnet_forward.1} parent=1 // pred_region
      %43 = dma.done [#allocation5], 16
    $region29: #{convnet_forward.1} parent=1 // pred_fallthru
      _
    %44 = sfence
    %s45 = sld [smem:[#allocation2]]
    %s46 = sld [smem:[#allocation2 + $0x1]]
    %s47 = sld [smem:[#allocation2 + $0x2]]
    %s48 = sld [smem:[#allocation2 + $0x3]]
    %s49 = sld [smem:[#allocation2 + $0x4]]
    %s50 = sld [smem:[#allocation2 + $0x5]]
    %s51 = sld [smem:[#allocation2 + $0x6]]
    %s52 = sld [smem:[#allocation2 + $0x7]]
    %s53 = sld [smem:[#allocation2 + $0x8]]
    %s54 = sld [smem:[#allocation2 + $0x9]]
    %s55 = sld [smem:[#allocation2 + $0xa]]
    %s56 = sld [smem:[#allocation2 + $0xb]]
    %s57 = sld [smem:[#allocation2 + $0xc]]
    %s58 = sld [smem:[#allocation2 + $0xd]]
    %s59 = sld [smem:[#allocation2 + $0xe]]
    %s60 = sld [smem:[#allocation2 + $0xf]]
    %s61 = sld [smem:[#allocation2 + $0x10]]
    %s62 = sld [smem:[#allocation2 + $0x11]]
    %s63 = sld [smem:[#allocation2 + $0x12]]
    %s64 = sld [smem:[#allocation2 + $0x13]]
    %s65 = sld [smem:[#allocation2 + $0x14]]
    %s66 = sld [smem:[#allocation2 + $0x15]]
    %s67 = sld [smem:[#allocation2 + $0x16]]
    %s68 = sld [smem:[#allocation2 + $0x17]]
    %s69 = sld [smem:[#allocation2 + $0x18]]
    %s70 = sld [smem:[#allocation2 + $0x19]]
    %s71 = sld [smem:[#allocation2 + $0x1a]]
    %v72 = vld [vmem:[%s0] sm:$0xff]
    %v73 = vstv %s45
    %v74 = vmul.f32 %v73, %v72
    %s75 = scalar_lea.vmem %s0, 8
    %v76 = vld [vmem:[%s75] sm:$0xff]
    %v77 = vstv %s46
    %v78 = vmul.f32 %v77, %v76
    %v79 = vadd.f32 %v74, %v78
    %s80 = scalar_lea.vmem %s0, 16
    %v81 = vld [vmem:[%s80] sm:$0xff]
    %v82 = vstv %s47
    %v83 = vmul.f32 %v82, %v81
    %v84 = vadd.f32 %v79, %v83
    %s85 = scalar_lea.vmem %s0, 40
    %v86 = vld [vmem:[%s85] sm:$0xff]
    %v87 = vstv %s48
    %v88 = vmul.f32 %v87, %v86
    %v89 = vadd.f32 %v84, %v88
    %s90 = scalar_lea.vmem %s0, 48
    %v91 = vld [vmem:[%s90] sm:$0xff]
    %v92 = vstv %s49
    %v93 = vmul.f32 %v92, %v91
    %v94 = vadd.f32 %v89, %v93
    %s95 = scalar_lea.vmem %s0, 56
    %v96 = vld [vmem:[%s95] sm:$0xff]
    %v97 = vstv %s50
    %v98 = vmul.f32 %v97, %v96
    %v99 = vadd.f32 %v94, %v98
    %s100 = scalar_lea.vmem %s0, 80
    %v101 = vld [vmem:[%s100] sm:$0xff]
    %v102 = vstv %s51
    %v103 = vmul.f32 %v102, %v101
    %v104 = vadd.f32 %v99, %v103
    %s105 = scalar_lea.vmem %s0, 88
    %v106 = vld [vmem:[%s105] sm:$0xff]
    %v107 = vstv %s52
    %v108 = vmul.f32 %v107, %v106
    %v109 = vadd.f32 %v104, %v108
    %s110 = scalar_lea.vmem %s0, 96
    %v111 = vld [vmem:[%s110] sm:$0xff]
    %v112 = vstv %s53
    %v113 = vmul.f32 %v112, %v111
    %v114 = vadd.f32 %v109, %v113
    %v115 = vmul.f32 %v73, %v76
    %v116 = vmul.f32 %v77, %v81
    %v117 = vadd.f32 %v115, %v116
    %s118 = scalar_lea.vmem %s0, 24
    %v119 = vld [vmem:[%s118] sm:$0xff]
    %v120 = vmul.f32 %v82, %v119
    %v121 = vadd.f32 %v117, %v120
    %v122 = vmul.f32 %v87, %v91
    %v123 = vadd.f32 %v121, %v122
    %v124 = vmul.f32 %v92, %v96
    %v125 = vadd.f32 %v123, %v124
    %s126 = scalar_lea.vmem %s0, 64
    %v127 = vld [vmem:[%s126] sm:$0xff]
    %v128 = vmul.f32 %v97, %v127
    %v129 = vadd.f32 %v125, %v128
    %v130 = vmul.f32 %v102, %v106
    %v131 = vadd.f32 %v129, %v130
    %v132 = vmul.f32 %v107, %v111
    %v133 = vadd.f32 %v131, %v132
    %s134 = scalar_lea.vmem %s0, 104
    %v135 = vld [vmem:[%s134] sm:$0xff]
    %v136 = vmul.f32 %v112, %v135
    %v137 = vadd.f32 %v133, %v136
    %v138 = vmax.f32 %v114, %v137
    %v139 = vmul.f32 %v73, %v81
    %v140 = vmul.f32 %v77, %v119
    %v141 = vadd.f32 %v139, %v140
    %s142 = scalar_lea.vmem %s0, 32
    %v143 = vld [vmem:[%s142] sm:$0xff]
    %v144 = vmul.f32 %v82, %v143
    %v145 = vadd.f32 %v141, %v144
    %v146 = vmul.f32 %v87, %v96
    %v147 = vadd.f32 %v145, %v146
    %v148 = vmul.f32 %v92, %v127
    %v149 = vadd.f32 %v147, %v148
    %s150 = scalar_lea.vmem %s0, 72
    %v151 = vld [vmem:[%s150] sm:$0xff]
    %v152 = vmul.f32 %v97, %v151
    %v153 = vadd.f32 %v149, %v152
    %v154 = vmul.f32 %v102, %v111
    %v155 = vadd.f32 %v153, %v154
    %v156 = vmul.f32 %v107, %v135
    %v157 = vadd.f32 %v155, %v156
    %s158 = scalar_lea.vmem %s0, 112
    %v159 = vld [vmem:[%s158] sm:$0xff]
    %v160 = vmul.f32 %v112, %v159
    %v161 = vadd.f32 %v157, %v160
    %v162 = vmax.f32 %v138, %v161
    %v163 = vmul.f32 %v73, %v86
    %v164 = vmul.f32 %v77, %v91
    %v165 = vadd.f32 %v163, %v164
    %v166 = vmul.f32 %v82, %v96
    %v167 = vadd.f32 %v165, %v166
    %v168 = vmul.f32 %v87, %v101
    %v169 = vadd.f32 %v167, %v168
    %v170 = vmul.f32 %v92, %v106
    %v171 = vadd.f32 %v169, %v170
    %v172 = vmul.f32 %v97, %v111
    %v173 = vadd.f32 %v171, %v172
    %s174 = scalar_lea.vmem %s0, 120
    %v175 = vld [vmem:[%s174] sm:$0xff]
    %v176 = vmul.f32 %v102, %v175
    %v177 = vadd.f32 %v173, %v176
    %s178 = scalar_lea.vmem %s0, 128
    %v179 = vld [vmem:[%s178] sm:$0xff]
    %v180 = vmul.f32 %v107, %v179
    %v181 = vadd.f32 %v177, %v180
    %s182 = scalar_lea.vmem %s0, 136
    %v183 = vld [vmem:[%s182] sm:$0xff]
    %v184 = vmul.f32 %v112, %v183
    %v185 = vadd.f32 %v181, %v184
    %v186 = vmax.f32 %v162, %v185
    %v187 = vmul.f32 %v73, %v91
    %v188 = vmul.f32 %v77, %v96
    %v189 = vadd.f32 %v187, %v188
    %v190 = vmul.f32 %v82, %v127
    %v191 = vadd.f32 %v189, %v190
    %v192 = vmul.f32 %v87, %v106
    %v193 = vadd.f32 %v191, %v192
    %v194 = vmul.f32 %v92, %v111
    %v195 = vadd.f32 %v193, %v194
    %v196 = vmul.f32 %v97, %v135
    %v197 = vadd.f32 %v195, %v196
    %v198 = vmul.f32 %v102, %v179
    %v199 = vadd.f32 %v197, %v198
    %v200 = vmul.f32 %v107, %v183
    %v201 = vadd.f32 %v199, %v200
    %s202 = scalar_lea.vmem %s0, 144
    %v203 = vld [vmem:[%s202] sm:$0xff]
    %v204 = vmul.f32 %v112, %v203
    %v205 = vadd.f32 %v201, %v204
    %v206 = vmax.f32 %v186, %v205
    %v207 = vmul.f32 %v73, %v96
    %v208 = vmul.f32 %v77, %v127
    %v209 = vadd.f32 %v207, %v208
    %v210 = vmul.f32 %v82, %v151
    %v211 = vadd.f32 %v209, %v210
    %v212 = vmul.f32 %v87, %v111
    %v213 = vadd.f32 %v211, %v212
    %v214 = vmul.f32 %v92, %v135
    %v215 = vadd.f32 %v213, %v214
    %v216 = vmul.f32 %v97, %v159
    %v217 = vadd.f32 %v215, %v216
    %v218 = vmul.f32 %v102, %v183
    %v219 = vadd.f32 %v217, %v218
    %v220 = vmul.f32 %v107, %v203
    %v221 = vadd.f32 %v219, %v220
    %s222 = scalar_lea.vmem %s0, 152
    %v223 = vld [vmem:[%s222] sm:$0xff]
    %v224 = vmul.f32 %v112, %v223
    %v225 = vadd.f32 %v221, %v224
    %v226 = vmax.f32 %v206, %v225
    %v227 = vmul.f32 %v73, %v101
    %v228 = vmul.f32 %v77, %v106
    %v229 = vadd.f32 %v227, %v228
    %v230 = vmul.f32 %v82, %v111
    %v231 = vadd.f32 %v229, %v230
    %v232 = vmul.f32 %v87, %v175
    %v233 = vadd.f32 %v231, %v232
    %v234 = vmul.f32 %v92, %v179
    %v235 = vadd.f32 %v233, %v234
    %v236 = vmul.f32 %v97, %v183
    %v237 = vadd.f32 %v235, %v236
    %s238 = scalar_lea.vmem %s0, 160
    %v239 = vld [vmem:[%s238] sm:$0xff]
    %v240 = vmul.f32 %v102, %v239
    %v241 = vadd.f32 %v237, %v240
    %s242 = scalar_lea.vmem %s0, 168
    %v243 = vld [vmem:[%s242] sm:$0xff]
    %v244 = vmul.f32 %v107, %v243
    %v245 = vadd.f32 %v241, %v244
    %s246 = scalar_lea.vmem %s0, 176
    %v247 = vld [vmem:[%s246] sm:$0xff]
    %v248 = vmul.f32 %v112, %v247
    %v249 = vadd.f32 %v245, %v248
    %v250 = vmax.f32 %v226, %v249
    %v251 = vmul.f32 %v73, %v106
    %v252 = vmul.f32 %v77, %v111
    %v253 = vadd.f32 %v251, %v252
    %v254 = vmul.f32 %v82, %v135
    %v255 = vadd.f32 %v253, %v254
    %v256 = vmul.f32 %v87, %v179
    %v257 = vadd.f32 %v255, %v256
    %v258 = vmul.f32 %v92, %v183
    %v259 = vadd.f32 %v257, %v258
    %v260 = vmul.f32 %v97, %v203
    %v261 = vadd.f32 %v259, %v260
    %v262 = vmul.f32 %v102, %v243
    %v263 = vadd.f32 %v261, %v262
    %v264 = vmul.f32 %v107, %v247
    %v265 = vadd.f32 %v263, %v264
    %s266 = scalar_lea.vmem %s0, 184
    %v267 = vld [vmem:[%s266] sm:$0xff]
    %v268 = vmul.f32 %v112, %v267
    %v269 = vadd.f32 %v265, %v268
    %v270 = vmax.f32 %v250, %v269
    %v271 = vmul.f32 %v73, %v111
    %v272 = vmul.f32 %v77, %v135
    %v273 = vadd.f32 %v271, %v272
    %v274 = vmul.f32 %v82, %v159
    %v275 = vadd.f32 %v273, %v274
    %v276 = vmul.f32 %v87, %v183
    %v277 = vadd.f32 %v275, %v276
    %v278 = vmul.f32 %v92, %v203
    %v279 = vadd.f32 %v277, %v278
    %v280 = vmul.f32 %v97, %v223
    %v281 = vadd.f32 %v279, %v280
    %v282 = vmul.f32 %v102, %v247
    %v283 = vadd.f32 %v281, %v282
    %v284 = vmul.f32 %v107, %v267
    %v285 = vadd.f32 %v283, %v284
    %s286 = scalar_lea.vmem %s0, 192
    %v287 = vld [vmem:[%s286] sm:$0xff]
    %v288 = vmul.f32 %v112, %v287
    %v289 = vadd.f32 %v285, %v288
    %v290 = vmax.f32 %v270, %v289
    %s291 = sld [smem:[#allocation4]]
    %v292 = vstv %s291
    %v293 = vadd.f32 %v290, %v292
    %v294 = vmax.f32 %v293, 0.0
    %v295 = vstv %s54
    %v296 = vmul.f32 %v295, %v72
    %v297 = vstv %s55
    %v298 = vmul.f32 %v297, %v76
    %v299 = vadd.f32 %v296, %v298
    %v300 = vstv %s56
    %v301 = vmul.f32 %v300, %v81
    %v302 = vadd.f32 %v299, %v301
    %v303 = vstv %s57
    %v304 = vmul.f32 %v303, %v86
    %v305 = vadd.f32 %v302, %v304
    %v306 = vstv %s58
    %v307 = vmul.f32 %v306, %v91
    %v308 = vadd.f32 %v305, %v307
    %v309 = vstv %s59
    %v310 = vmul.f32 %v309, %v96
    %v311 = vadd.f32 %v308, %v310
    %v312 = vstv %s60
    %v313 = vmul.f32 %v312, %v101
    %v314 = vadd.f32 %v311, %v313
    %v315 = vstv %s61
    %v316 = vmul.f32 %v315, %v106
    %v317 = vadd.f32 %v314, %v316
    %v318 = vstv %s62
    %v319 = vmul.f32 %v318, %v111
    %v320 = vadd.f32 %v317, %v319
    %v321 = vmul.f32 %v295, %v76
    %v322 = vmul.f32 %v297, %v81
    %v323 = vadd.f32 %v321, %v322
    %v324 = vmul.f32 %v300, %v119
    %v325 = vadd.f32 %v323, %v324
    %v326 = vmul.f32 %v303, %v91
    %v327 = vadd.f32 %v325, %v326
    %v328 = vmul.f32 %v306, %v96
    %v329 = vadd.f32 %v327, %v328
    %v330 = vmul.f32 %v309, %v127
    %v331 = vadd.f32 %v329, %v330
    %v332 = vmul.f32 %v312, %v106
    %v333 = vadd.f32 %v331, %v332
    %v334 = vmul.f32 %v315, %v111
    %v335 = vadd.f32 %v333, %v334
    %v336 = vmul.f32 %v318, %v135
    %v337 = vadd.f32 %v335, %v336
    %v338 = vmax.f32 %v320, %v337
    %v339 = vmul.f32 %v295, %v81
    %v340 = vmul.f32 %v297, %v119
    %v341 = vadd.f32 %v339, %v340
    %v342 = vmul.f32 %v300, %v143
    %v343 = vadd.f32 %v341, %v342
    %v344 = vmul.f32 %v303, %v96
    %v345 = vadd.f32 %v343, %v344
    %v346 = vmul.f32 %v306, %v127
    %v347 = vadd.f32 %v345, %v346
    %v348 = vmul.f32 %v309, %v151
    %v349 = vadd.f32 %v347, %v348
    %v350 = vmul.f32 %v312, %v111
    %v351 = vadd.f32 %v349, %v350
    %v352 = vmul.f32 %v315, %v135
    %v353 = vadd.f32 %v351, %v352
    %v354 = vmul.f32 %v318, %v159
    %v355 = vadd.f32 %v353, %v354
    %v356 = vmax.f32 %v338, %v355
    %v357 = vmul.f32 %v295, %v86
    %v358 = vmul.f32 %v297, %v91
    %v359 = vadd.f32 %v357, %v358
    %v360 = vmul.f32 %v300, %v96
    %v361 = vadd.f32 %v359, %v360
    %v362 = vmul.f32 %v303, %v101
    %v363 = vadd.f32 %v361, %v362
    %v364 = vmul.f32 %v306, %v106
    %v365 = vadd.f32 %v363, %v364
    %v366 = vmul.f32 %v309, %v111
    %v367 = vadd.f32 %v365, %v366
    %v368 = vmul.f32 %v312, %v175
    %v369 = vadd.f32 %v367, %v368
    %v370 = vmul.f32 %v315, %v179
    %v371 = vadd.f32 %v369, %v370
    %v372 = vmul.f32 %v318, %v183
    %v373 = vadd.f32 %v371, %v372
    %v374 = vmax.f32 %v356, %v373
    %v375 = vmul.f32 %v295, %v91
    %v376 = vmul.f32 %v297, %v96
    %v377 = vadd.f32 %v375, %v376
    %v378 = vmul.f32 %v300, %v127
    %v379 = vadd.f32 %v377, %v378
    %v380 = vmul.f32 %v303, %v106
    %v381 = vadd.f32 %v379, %v380
    %v382 = vmul.f32 %v306, %v111
    %v383 = vadd.f32 %v381, %v382
    %v384 = vmul.f32 %v309, %v135
    %v385 = vadd.f32 %v383, %v384
    %v386 = vmul.f32 %v312, %v179
    %v387 = vadd.f32 %v385, %v386
    %v388 = vmul.f32 %v315, %v183
    %v389 = vadd.f32 %v387, %v388
    %v390 = vmul.f32 %v318, %v203
    %v391 = vadd.f32 %v389, %v390
    %v392 = vmax.f32 %v374, %v391
    %v393 = vmul.f32 %v295, %v96
    %v394 = vmul.f32 %v297, %v127
    %v395 = vadd.f32 %v393, %v394
    %v396 = vmul.f32 %v300, %v151
    %v397 = vadd.f32 %v395, %v396
    %v398 = vmul.f32 %v303, %v111
    %v399 = vadd.f32 %v397, %v398
    %v400 = vmul.f32 %v306, %v135
    %v401 = vadd.f32 %v399, %v400
    %v402 = vmul.f32 %v309, %v159
    %v403 = vadd.f32 %v401, %v402
    %v404 = vmul.f32 %v312, %v183
    %v405 = vadd.f32 %v403, %v404
    %v406 = vmul.f32 %v315, %v203
    %v407 = vadd.f32 %v405, %v406
    %v408 = vmul.f32 %v318, %v223
    %v409 = vadd.f32 %v407, %v408
    %v410 = vmax.f32 %v392, %v409
    %v411 = vmul.f32 %v295, %v101
    %v412 = vmul.f32 %v297, %v106
    %v413 = vadd.f32 %v411, %v412
    %v414 = vmul.f32 %v300, %v111
    %v415 = vadd.f32 %v413, %v414
    %v416 = vmul.f32 %v303, %v175
    %v417 = vadd.f32 %v415, %v416
    %v418 = vmul.f32 %v306, %v179
    %v419 = vadd.f32 %v417, %v418
    %v420 = vmul.f32 %v309, %v183
    %v421 = vadd.f32 %v419, %v420
    %v422 = vmul.f32 %v312, %v239
    %v423 = vadd.f32 %v421, %v422
    %v424 = vmul.f32 %v315, %v243
    %v425 = vadd.f32 %v423, %v424
    %v426 = vmul.f32 %v318, %v247
    %v427 = vadd.f32 %v425, %v426
    %v428 = vmax.f32 %v410, %v427
    %v429 = vmul.f32 %v295, %v106
    %v430 = vmul.f32 %v297, %v111
    %v431 = vadd.f32 %v429, %v430
    %v432 = vmul.f32 %v300, %v135
    %v433 = vadd.f32 %v431, %v432
    %v434 = vmul.f32 %v303, %v179
    %v435 = vadd.f32 %v433, %v434
    %v436 = vmul.f32 %v306, %v183
    %v437 = vadd.f32 %v435, %v436
    %v438 = vmul.f32 %v309, %v203
    %v439 = vadd.f32 %v437, %v438
    %v440 = vmul.f32 %v312, %v243
    %v441 = vadd.f32 %v439, %v440
    %v442 = vmul.f32 %v315, %v247
    %v443 = vadd.f32 %v441, %v442
    %v444 = vmul.f32 %v318, %v267
    %v445 = vadd.f32 %v443, %v444
    %v446 = vmax.f32 %v428, %v445
    %v447 = vmul.f32 %v295, %v111
    %v448 = vmul.f32 %v297, %v135
    %v449 = vadd.f32 %v447, %v448
    %v450 = vmul.f32 %v300, %v159
    %v451 = vadd.f32 %v449, %v450
    %v452 = vmul.f32 %v303, %v183
    %v453 = vadd.f32 %v451, %v452
    %v454 = vmul.f32 %v306, %v203
    %v455 = vadd.f32 %v453, %v454
    %v456 = vmul.f32 %v309, %v223
    %v457 = vadd.f32 %v455, %v456
    %v458 = vmul.f32 %v312, %v247
    %v459 = vadd.f32 %v457, %v458
    %v460 = vmul.f32 %v315, %v267
    %v461 = vadd.f32 %v459, %v460
    %v462 = vmul.f32 %v318, %v287
    %v463 = vadd.f32 %v461, %v462
    %v464 = vmax.f32 %v446, %v463
    %s465 = sld [smem:[#allocation4 + $0x1]]
    %v466 = vstv %s465
    %v467 = vadd.f32 %v464, %v466
    %v468 = vmax.f32 %v467, 0.0
    %v469 = vstv %s63
    %v470 = vmul.f32 %v469, %v72
    %v471 = vstv %s64
    %v472 = vmul.f32 %v471, %v76
    %v473 = vadd.f32 %v470, %v472
    %v474 = vstv %s65
    %v475 = vmul.f32 %v474, %v81
    %v476 = vadd.f32 %v473, %v475
    %v477 = vstv %s66
    %v478 = vmul.f32 %v477, %v86
    %v479 = vadd.f32 %v476, %v478
    %v480 = vstv %s67
    %v481 = vmul.f32 %v480, %v91
    %v482 = vadd.f32 %v479, %v481
    %v483 = vstv %s68
    %v484 = vmul.f32 %v483, %v96
    %v485 = vadd.f32 %v482, %v484
    %v486 = vstv %s69
    %v487 = vmul.f32 %v486, %v101
    %v488 = vadd.f32 %v485, %v487
    %v489 = vstv %s70
    %v490 = vmul.f32 %v489, %v106
    %v491 = vadd.f32 %v488, %v490
    %v492 = vstv %s71
    %v493 = vmul.f32 %v492, %v111
    %v494 = vadd.f32 %v491, %v493
    %v495 = vmul.f32 %v469, %v76
    %v496 = vmul.f32 %v471, %v81
    %v497 = vadd.f32 %v495, %v496
    %v498 = vmul.f32 %v474, %v119
    %v499 = vadd.f32 %v497, %v498
    %v500 = vmul.f32 %v477, %v91
    %v501 = vadd.f32 %v499, %v500
    %v502 = vmul.f32 %v480, %v96
    %v503 = vadd.f32 %v501, %v502
    %v504 = vmul.f32 %v483, %v127
    %v505 = vadd.f32 %v503, %v504
    %v506 = vmul.f32 %v486, %v106
    %v507 = vadd.f32 %v505, %v506
    %v508 = vmul.f32 %v489, %v111
    %v509 = vadd.f32 %v507, %v508
    %v510 = vmul.f32 %v492, %v135
    %v511 = vadd.f32 %v509, %v510
    %v512 = vmax.f32 %v494, %v511
    %v513 = vmul.f32 %v469, %v81
    %v514 = vmul.f32 %v471, %v119
    %v515 = vadd.f32 %v513, %v514
    %v516 = vmul.f32 %v474, %v143
    %v517 = vadd.f32 %v515, %v516
    %v518 = vmul.f32 %v477, %v96
    %v519 = vadd.f32 %v517, %v518
    %v520 = vmul.f32 %v480, %v127
    %v521 = vadd.f32 %v519, %v520
    %v522 = vmul.f32 %v483, %v151
    %v523 = vadd.f32 %v521, %v522
    %v524 = vmul.f32 %v486, %v111
    %v525 = vadd.f32 %v523, %v524
    %v526 = vmul.f32 %v489, %v135
    %v527 = vadd.f32 %v525, %v526
    %v528 = vmul.f32 %v492, %v159
    %v529 = vadd.f32 %v527, %v528
    %v530 = vmax.f32 %v512, %v529
    %v531 = vmul.f32 %v469, %v86
    %v532 = vmul.f32 %v471, %v91
    %v533 = vadd.f32 %v531, %v532
    %v534 = vmul.f32 %v474, %v96
    %v535 = vadd.f32 %v533, %v534
    %v536 = vmul.f32 %v477, %v101
    %v537 = vadd.f32 %v535, %v536
    %v538 = vmul.f32 %v480, %v106
    %v539 = vadd.f32 %v537, %v538
    %v540 = vmul.f32 %v483, %v111
    %v541 = vadd.f32 %v539, %v540
    %v542 = vmul.f32 %v486, %v175
    %v543 = vadd.f32 %v541, %v542
    %v544 = vmul.f32 %v489, %v179
    %v545 = vadd.f32 %v543, %v544
    %v546 = vmul.f32 %v492, %v183
    %v547 = vadd.f32 %v545, %v546
    %v548 = vmax.f32 %v530, %v547
    %v549 = vmul.f32 %v469, %v91
    %v550 = vmul.f32 %v471, %v96
    %v551 = vadd.f32 %v549, %v550
    %v552 = vmul.f32 %v474, %v127
    %v553 = vadd.f32 %v551, %v552
    %v554 = vmul.f32 %v477, %v106
    %v555 = vadd.f32 %v553, %v554
    %v556 = vmul.f32 %v480, %v111
    %v557 = vadd.f32 %v555, %v556
    %v558 = vmul.f32 %v483, %v135
    %v559 = vadd.f32 %v557, %v558
    %v560 = vmul.f32 %v486, %v179
    %v561 = vadd.f32 %v559, %v560
    %v562 = vmul.f32 %v489, %v183
    %v563 = vadd.f32 %v561, %v562
    %v564 = vmul.f32 %v492, %v203
    %v565 = vadd.f32 %v563, %v564
    %v566 = vmax.f32 %v548, %v565
    %v567 = vmul.f32 %v469, %v96
    %v568 = vmul.f32 %v471, %v127
    %v569 = vadd.f32 %v567, %v568
    %v570 = vmul.f32 %v474, %v151
    %v571 = vadd.f32 %v569, %v570
    %v572 = vmul.f32 %v477, %v111
    %v573 = vadd.f32 %v571, %v572
    %v574 = vmul.f32 %v480, %v135
    %v575 = vadd.f32 %v573, %v574
    %v576 = vmul.f32 %v483, %v159
    %v577 = vadd.f32 %v575, %v576
    %v578 = vmul.f32 %v486, %v183
    %v579 = vadd.f32 %v577, %v578
    %v580 = vmul.f32 %v489, %v203
    %v581 = vadd.f32 %v579, %v580
    %v582 = vmul.f32 %v492, %v223
    %v583 = vadd.f32 %v581, %v582
    %v584 = vmax.f32 %v566, %v583
    %v585 = vmul.f32 %v469, %v101
    %v586 = vmul.f32 %v471, %v106
    %v587 = vadd.f32 %v585, %v586
    %v588 = vmul.f32 %v474, %v111
    %v589 = vadd.f32 %v587, %v588
    %v590 = vmul.f32 %v477, %v175
    %v591 = vadd.f32 %v589, %v590
    %v592 = vmul.f32 %v480, %v179
    %v593 = vadd.f32 %v591, %v592
    %v594 = vmul.f32 %v483, %v183
    %v595 = vadd.f32 %v593, %v594
    %v596 = vmul.f32 %v486, %v239
    %v597 = vadd.f32 %v595, %v596
    %v598 = vmul.f32 %v489, %v243
    %v599 = vadd.f32 %v597, %v598
    %v600 = vmul.f32 %v492, %v247
    %v601 = vadd.f32 %v599, %v600
    %v602 = vmax.f32 %v584, %v601
    %v603 = vmul.f32 %v469, %v106
    %v604 = vmul.f32 %v471, %v111
    %v605 = vadd.f32 %v603, %v604
    %v606 = vmul.f32 %v474, %v135
    %v607 = vadd.f32 %v605, %v606
    %v608 = vmul.f32 %v477, %v179
    %v609 = vadd.f32 %v607, %v608
    %v610 = vmul.f32 %v480, %v183
    %v611 = vadd.f32 %v609, %v610
    %v612 = vmul.f32 %v483, %v203
    %v613 = vadd.f32 %v611, %v612
    %v614 = vmul.f32 %v486, %v243
    %v615 = vadd.f32 %v613, %v614
    %v616 = vmul.f32 %v489, %v247
    %v617 = vadd.f32 %v615, %v616
    %v618 = vmul.f32 %v492, %v267
    %v619 = vadd.f32 %v617, %v618
    %v620 = vmax.f32 %v602, %v619
    %v621 = vmul.f32 %v469, %v111
    %v622 = vmul.f32 %v471, %v135
    %v623 = vadd.f32 %v621, %v622
    %v624 = vmul.f32 %v474, %v159
    %v625 = vadd.f32 %v623, %v624
    %v626 = vmul.f32 %v477, %v183
    %v627 = vadd.f32 %v625, %v626
    %v628 = vmul.f32 %v480, %v203
    %v629 = vadd.f32 %v627, %v628
    %v630 = vmul.f32 %v483, %v223
    %v631 = vadd.f32 %v629, %v630
    %v632 = vmul.f32 %v486, %v247
    %v633 = vadd.f32 %v631, %v632
    %v634 = vmul.f32 %v489, %v267
    %v635 = vadd.f32 %v633, %v634
    %v636 = vmul.f32 %v492, %v287
    %v637 = vadd.f32 %v635, %v636
    %v638 = vmax.f32 %v620, %v637
    %s639 = sld [smem:[#allocation4 + $0x2]]
    %v640 = vstv %s639
    %v641 = vadd.f32 %v638, %v640
    %v642 = vmax.f32 %v641, 0.0
    %644 = vrot.lane.b32.xlu0 %v468, 64
    %v645 = vpop.permute.xlu0 %644
    %vm647 = vcmask 523264
    %v648 = vsel %vm647, %v294, %v645
    %v649 = vld [vmem:[%s3] sm:$0xff]
    %v650 = vld [vmem:[%s3 + $0x8] sm:$0xff]
    %v651 = vld [vmem:[%s3 + $0x10] sm:$0xff]
    %v652 = vld [vmem:[%s3 + $0x18] sm:$0xff]
    %v653 = vld [vmem:[%s3 + $0x20] sm:$0xff]
    %v654 = vld [vmem:[%s3 + $0x28] sm:$0xff]
    %v655 = vld [vmem:[%s3 + $0x30] sm:$0xff]
    %v656 = vld [vmem:[%s3 + $0x38] sm:$0xff]
    %v657 = vld [vmem:[%s3 + $0x40] sm:$0xff]
    %v658 = vld [vmem:[%s3 + $0x48] sm:$0xff]
    %v659 = vld [vmem:[%s3 + $0x50] sm:$0xff]
    %v660 = vld [vmem:[%s3 + $0x58] sm:$0xff]
    %v661 = vld [vmem:[%s3 + $0x60] sm:$0xff]
    %v662 = vld [vmem:[%s3 + $0x68] sm:$0xff]
    %v663 = vld [vmem:[%s3 + $0x70] sm:$0xff]
    %v664 = vld [vmem:[%s3 + $0x78] sm:$0xff]
    %v665 = vld [vmem:[%s3 + $0x80] sm:$0xff]
    %v666 = vld [vmem:[%s3 + $0x88] sm:$0xff]
    %v667 = vld [vmem:[%s3 + $0x90] sm:$0xff]
    %v668 = vld [vmem:[%s3 + $0x98] sm:$0xff]
    %v669 = vld [vmem:[%s3 + $0xa0] sm:$0xff]
    %v670 = vld [vmem:[%s3 + $0xa8] sm:$0xff]
    %v671 = vld [vmem:[%s3 + $0xb0] sm:$0xff]
    %v672 = vld [vmem:[%s3 + $0xb8] sm:$0xff]
    %v673 = vld [vmem:[%s4] sm:$0x1]
    %v675 = vlaneseq
    %v676 = vshrl.u32 %v675, 7
    %v677 = vsub.s32 0, %v676
    %v678 = vrot.slane %v673, %v677
    %v681 = vsel %vm647, %v642, 0
    %683 = vmatprep.subr.mxu0 0.0
    %684 = vmatpush1.msra.mxu0 %v649
    %685 = vmatprep.subr.mxu0 0.0
    %686 = vmatpush1.msra.mxu0 %v650
    %687 = vmatprep.subr.mxu0 0.0
    %688 = vmatpush1.msra.mxu0 %v651
    %689 = vmatprep.subr.mxu0 0.0
    %690 = vmatpush1.msra.mxu0 %v652
    %691 = vmatprep.subr.mxu0 0.0
    %692 = vmatpush1.msra.mxu0 %v653
    %693 = vmatprep.subr.mxu0 0.0
    %694 = vmatpush1.msra.mxu0 %v654
    %695 = vmatprep.subr.mxu0 0.0
    %696 = vmatpush1.msra.mxu0 %v655
    %697 = vmatprep.subr.mxu0 0.0
    %698 = vmatpush1.msra.mxu0 %v656
    %699 = vmatprep.subr.mxu0 0.0
    %700 = vmatpush1.msra.mxu0 %v657
    %701 = vmatprep.subr.mxu0 0.0
    %702 = vmatpush1.msra.mxu0 %v658
    %703 = vmatprep.subr.mxu0 0.0
    %704 = vmatpush1.msra.mxu0 %v659
    %705 = vmatprep.subr.mxu0 0.0
    %706 = vmatpush1.msra.mxu0 %v660
    %707 = vmatprep.subr.mxu0 0.0
    %708 = vmatpush1.msra.mxu0 %v661
    %709 = vmatprep.subr.mxu0 0.0
    %710 = vmatpush1.msra.mxu0 %v662
    %711 = vmatprep.subr.mxu0 0.0
    %712 = vmatpush1.msra.mxu0 %v663
    %713 = vmatprep.subr.mxu0 0.0
    %714 = vmatpush1.msra.mxu0 %v664
    %715 = vmatprep.subr.mxu0 0.0
    %716 = vmatpush1.msra.mxu0 %v665
    %717 = vmatprep.subr.mxu0 0.0
    %718 = vmatpush1.msra.mxu0 %v666
    %719 = vmatprep.subr.mxu0 0.0
    %720 = vmatpush1.msra.mxu0 %v667
    %721 = vmatprep.subr.mxu0 0.0
    %722 = vmatpush1.msra.mxu0 %v668
    %723 = vmatprep.subr.mxu0 0.0
    %724 = vmatpush1.msra.mxu0 %v669
    %725 = vmatprep.subr.mxu0 0.0
    %726 = vmatpush1.msra.mxu0 %v670
    %727 = vmatprep.subr.mxu0 0.0
    %728 = vmatpush1.msra.mxu0 %v671
    %729 = vmatprep.subr.mxu0 0.0
    %730 = vmatpush1.msra.mxu0 %v672
    %731 = vmatprep.subr.mxu0 0.0
    %732 = vmatpush1.msra.mxu0 0.0
    %733 = vmatprep.subr.mxu0 0.0
    %734 = vmatpush1.msra.mxu0 0.0
    %735 = vmatprep.subr.mxu0 0.0
    %736 = vmatpush1.msra.mxu0 0.0
    %737 = vmatprep.subr.mxu0 0.0
    %738 = vmatpush1.msra.mxu0 0.0
    %739 = vmatprep.subr.mxu0 0.0
    %740 = vmatpush1.msra.mxu0 0.0
    %741 = vmatprep.subr.mxu0 0.0
    %742 = vmatpush1.msra.mxu0 0.0
    %743 = vmatprep.subr.mxu0 0.0
    %744 = vmatpush1.msra.mxu0 0.0
    %745 = vmatprep.subr.mxu0 0.0
    %746 = vmatpush1.msra.mxu0 0.0
    %747 = vmatprep.mubr.f32.mxu0 %v681
    %748 = vmatmul.mubr.f32.gmra.mrb[0].mxu0 %v648
    %v749 = vpop.f32.mrb[0].mxu0
    %v750 = vadd.f32 %v678, %v749
    %v751 = vpop.f32.mrb[0].mxu0
    %752 = vdwg.mxu0
    %vm753 = vcmask 80896
    %v754 = vsel %vm753, %v750, -inf
    %755 = vmax.xlane.f32.xlu0 %v754
    %v756 = vpop.xlane.xlu0 %755
    %v757 = vsub.f32 %v750, %v756
    %v758 = vmul.f32 %v757, 1.442695
    %v759 = vpow.pop %v758
    %v760 = vsel %vm753, %v759, 0.0
    %761 = vadd.xlane.f32.xlu0 %v760
    %v762 = vpop.xlane.xlu0 %761
    %v763 = vlog2.pop %v762
    %v764 = vmul.f32 %v763, 0.6931472
    %v765 = vsub.f32 %v757, %v764
    %766 = vst.msk [vmem:[%s5] sm:$0xff] %vm753, %v765
    // Predicated region
    $region30: #{convnet_forward.1} parent=1 // pred_check
      _
    $region31: #{convnet_forward.1} parent=1 // pred_check_branch
      %768 = sbr.rel (0) target = $region33
    $region32: #{convnet_forward.1} parent=1 // pred_region
      _
    $region33: #{convnet_forward.1} parent=1 // pred_fallthru
      _
    // Predicated region
    $region34: #{convnet_forward.1} parent=1 // pred_check
      _
    $region35: #{convnet_forward.1} parent=1 // pred_check_branch
      %770 = sbr.rel (0) target = $region37
    $region36: #{convnet_forward.1} parent=1 // pred_region
      _
    $region37: #{convnet_forward.1} parent=1 // pred_fallthru
      _
    %771 = vsyncpa [#allocation3], 1
    %772 = vsyncpa [#allocation5], 1

</llo_original>
